<compile_context>
chip_gen: v7x
topology: tpu7x:2x2x1
jax: 0.10.0
libtpu: 0.0.40
codegen_flags: <defaults>
</compile_context>

<pallas_src>
import jax
import jax.numpy as jnp
from jax.experimental import pallas as pl
from jax.experimental.pallas import tpu as pltpu

NEG_SLOPE = 0.1
TRUE_DIMS = [28 * 28, 1024, 128, 64, 32, 10]     # PyTorch layer widths
PAD_DIMS = [28 * 28, 1024, 128, 128, 128, 128]   # lane-padded widths (tail -> 128)
NUM_LAYERS = 5


def _cdiv(a, b):
    return (a + b - 1) // b


def _round_up(n, m):
    return ((n + m - 1) // m) * m


def _is_multi_tensorcore_chip():
    """True on chips with 2 TensorCores per device (v7x, v4 megacore)."""
    try:
        kind = jax.devices()[0].device_kind.lower()
    except Exception:
        return False
    return ("v7" in kind) or ("v4" in kind)


def _pick_batch_tiling(b):
    """Choose (batch_tile, padded_batch) adaptively.

    * tile is a multiple of 16 (bf16 sublane tile) and ~ceil(b / n_tiles), so
      padding waste is at most one 16-row group.
    * 2-TC chips: force >= 2 grid steps (when splittable) so the "parallel"
      batch axis shards across both TensorCores; cap tile at 256 to keep the
      per-core VMEM footprint small (v7x has 64 MiB/TC).
    * 1-TC chips (v5e/v6e): large tile (up to 1024) to amortize per-step
      overhead; 128 MiB VMEM makes this safe.
    """
    if _is_multi_tensorcore_chip():
        max_tile = 256
        min_tiles = 2 if b > 16 else 1
    else:
        max_tile = 1024
        min_tiles = 1
    n_tiles = max(min_tiles, _cdiv(b, max_tile))
    tb = _round_up(_cdiv(b, n_tiles), 16)
    n_tiles = _cdiv(b, tb)
    return tb, n_tiles * tb


def mlp_kernel(x_ref,
               w1_ref, b1_ref,
               w2_ref, b2_ref,
               w3_ref, b3_ref,
               w4_ref, b4_ref,
               w5_ref, b5_ref,
               o_ref):
    def layer(h, w_ref, b_ref, relu):
        # bf16 operands, f32 accumulation on the MXU; bias/activation in f32.
        y = jnp.dot(h.astype(jnp.bfloat16), w_ref[...],
                    preferred_element_type=jnp.float32) + b_ref[...]
        if relu:
            # LeakyReLU(0.1): max(y, 0.1*y) is exact for slope in [0, 1].
            y = jnp.maximum(y, NEG_SLOPE * y)
        return y

    h = x_ref[...]                       # (TB, 784) bf16
    h = layer(h, w1_ref, b1_ref, True)   # (TB, 1024)
    h = layer(h, w2_ref, b2_ref, True)   # (TB, 128)
    h = layer(h, w3_ref, b3_ref, True)   # (TB, 128) (true 64, zero-padded)
    h = layer(h, w4_ref, b4_ref, True)   # (TB, 128) (true 32, zero-padded)
    h = layer(h, w5_ref, b5_ref, False)  # (TB, 128) (true 10, zero-padded)
    o_ref[...] = h.astype(jnp.bfloat16)  # lane-dense bf16 store


def init_params(key):
    """kaiming_normal_ (fan_in, leaky_relu gain sqrt(2)) weights, zero biases.

    Weights stored transposed as (in, out), zero-padded to PAD_DIMS and cast
    to bf16.  Zero padding keeps semantics exact: padded activation lanes are
    LeakyReLU(0 + 0) = 0 and padded weight rows multiply those zeros.
    """
    params = []
    for i in range(NUM_LAYERS):
        fan_in, fan_out = TRUE_DIMS[i], TRUE_DIMS[i + 1]
        in_pad, out_pad = PAD_DIMS[i], PAD_DIMS[i + 1]
        key, sub = jax.random.split(key)
        std = (2.0 ** 0.5) / (fan_in ** 0.5)
        w = std * jax.random.normal(sub, (fan_in, fan_out), dtype=jnp.float32)
        w = jnp.pad(w, ((0, in_pad - fan_in), (0, out_pad - fan_out)))
        b = jnp.zeros((1, out_pad), dtype=jnp.float32)
        params.append((w.astype(jnp.bfloat16), b))
    return params


@jax.jit
def mlp_forward(x_nchw, params):
    b = x_nchw.shape[0]
    x_flat = x_nchw.reshape(b, 28 * 28).astype(jnp.bfloat16)  # glue: view(-1, 784)

    tb, b_pad = _pick_batch_tiling(b)
    if b_pad != b:
        x_flat = jnp.pad(x_flat, ((0, b_pad - b), (0, 0)))

    flat_args = [x_flat]
    in_specs = [pl.BlockSpec((tb, PAD_DIMS[0]), lambda i: (i, 0))]
    for w, bias in params:
        flat_args += [w, bias]
        # Constant index_map -> weights/biases stay VMEM-resident across steps
        # (re-used, not re-DMA'd, per grid step).
        in_specs += [pl.BlockSpec(w.shape, lambda i: (0, 0)),
                     pl.BlockSpec(bias.shape, lambda i: (0, 0))]

    flops = 2 * b_pad * sum(PAD_DIMS[i] * PAD_DIMS[i + 1]
                            for i in range(NUM_LAYERS))
    bytes_accessed = (
        sum(w.size * 2 + bias.size * 4 for w, bias in params)
        + b_pad * PAD_DIMS[0] * 2            # bf16 input
        + b_pad * PAD_DIMS[-1] * 2)          # bf16 output

    # Raise the scoped-VMEM limit only on single-TC chips (128 MiB physical);
    # on v7x stick with the default so each core's footprint stays small.
    vmem_limit = None if _is_multi_tensorcore_chip() else 64 * 1024 * 1024

    out = pl.pallas_call(
        mlp_kernel,
        out_shape=jax.ShapeDtypeStruct((b_pad, PAD_DIMS[-1]), jnp.bfloat16),
        grid=(b_pad // tb,),
        in_specs=in_specs,
        out_specs=pl.BlockSpec((tb, PAD_DIMS[-1]), lambda i: (i, 0)),
        compiler_params=pltpu.CompilerParams(
            dimension_semantics=("parallel",),
            vmem_limit_bytes=vmem_limit),
        cost_estimate=pl.CostEstimate(
            flops=flops, transcendentals=0, bytes_accessed=bytes_accessed),
    )(*flat_args)

    # Slice off padding, return f32 logits (values bf16-rounded by the store).
    return out[:b, :TRUE_DIMS[-1]].astype(jnp.float32)


def mlp_reference(x_nchw, params):
    """Plain-JAX reference using the same bf16 weights / f32 accumulation."""
    b = x_nchw.shape[0]
    h = x_nchw.reshape(b, 28 * 28).astype(jnp.bfloat16)
    for i, (w, bias) in enumerate(params):
        h = jnp.dot(h.astype(jnp.bfloat16), w,
                    preferred_element_type=jnp.float32) + bias
        if i < NUM_LAYERS - 1:
            h = jnp.maximum(h, NEG_SLOPE * h)
    # Match the kernel's bf16 output store.
    return h.astype(jnp.bfloat16).astype(jnp.float32)[:, :TRUE_DIMS[-1]]


if __name__ == "__main__":
    key = jax.random.PRNGKey(0)
    key, xkey = jax.random.split(key)

    # Small deterministic MNIST-like input: NCHW (batch=2, 1 channel, 28x28).
    x = jax.random.normal(xkey, (2, 1, 28, 28), dtype=jnp.float32)

    params = init_params(key)

    out = mlp_forward(x, params)
    jax.block_until_ready(out)

    ref = mlp_reference(x, params)
    assert out.shape == (2, 10), out.shape
    assert jnp.allclose(out, ref, atol=1e-2, rtol=1e-2), "mismatch vs reference"

    print("KERNEL_OK")
</pallas_src>

<mosaic_0001>
module attributes {stable_mosaic.version = 11 : i64} {
  func.func @mlp_kernel(%arg0: i32, %arg1: memref<16x784xbf16, #tpu.memory_space<vmem>>, %arg2: memref<784x1024xbf16, #tpu.memory_space<vmem>>, %arg3: memref<1x1024xf32, #tpu.memory_space<vmem>>, %arg4: memref<1024x128xbf16, #tpu.memory_space<vmem>>, %arg5: memref<1x128xf32, #tpu.memory_space<vmem>>, %arg6: memref<128x128xbf16, #tpu.memory_space<vmem>>, %arg7: memref<1x128xf32, #tpu.memory_space<vmem>>, %arg8: memref<128x128xbf16, #tpu.memory_space<vmem>>, %arg9: memref<1x128xf32, #tpu.memory_space<vmem>>, %arg10: memref<128x128xbf16, #tpu.memory_space<vmem>>, %arg11: memref<1x128xf32, #tpu.memory_space<vmem>>, %arg12: memref<16x128xbf16, #tpu.memory_space<vmem>>) attributes {dimension_semantics = [#tpu.dimension_semantics<parallel>], iteration_bounds = array<i64: 1>, scalar_prefetch = 0 : i64, scratch_operands = 0 : i64, tpu.core_type = #tpu.core_type<tc>, window_params = [{transform_indices = @transform_0, window_bounds = array<i64: 16, 784>}, {pipeline_mode = #tpu.pipeline_mode<synchronous>, transform_indices = @transform_1, window_bounds = array<i64: 784, 1024>}, {pipeline_mode = #tpu.pipeline_mode<synchronous>, transform_indices = @transform_2, window_bounds = array<i64: 1, 1024>}, {pipeline_mode = #tpu.pipeline_mode<synchronous>, transform_indices = @transform_3, window_bounds = array<i64: 1024, 128>}, {pipeline_mode = #tpu.pipeline_mode<synchronous>, transform_indices = @transform_4, window_bounds = array<i64: 1, 128>}, {pipeline_mode = #tpu.pipeline_mode<synchronous>, transform_indices = @transform_5, window_bounds = array<i64: 128, 128>}, {pipeline_mode = #tpu.pipeline_mode<synchronous>, transform_indices = @transform_6, window_bounds = array<i64: 1, 128>}, {pipeline_mode = #tpu.pipeline_mode<synchronous>, transform_indices = @transform_7, window_bounds = array<i64: 128, 128>}, {pipeline_mode = #tpu.pipeline_mode<synchronous>, transform_indices = @transform_8, window_bounds = array<i64: 1, 128>}, {pipeline_mode = #tpu.pipeline_mode<synchronous>, transform_indices = @transform_9, window_bounds = array<i64: 128, 128>}, {pipeline_mode = #tpu.pipeline_mode<synchronous>, transform_indices = @transform_10, window_bounds = array<i64: 1, 128>}, {transform_indices = @transform_11, window_bounds = array<i64: 16, 128>}]} {
    %c0 = arith.constant 0 : index
    %c0_0 = arith.constant 0 : index
    %0 = vector.load %arg1[%c0, %c0_0] : memref<16x784xbf16, #tpu.memory_space<vmem>>, vector<16x784xbf16>
    %c0_1 = arith.constant 0 : index
    %c0_2 = arith.constant 0 : index
    %1 = vector.load %arg2[%c0_1, %c0_2] : memref<784x1024xbf16, #tpu.memory_space<vmem>>, vector<784x1024xbf16>
    %cst = arith.constant dense<0.000000e+00> : vector<16x1024xf32>
    %2 = tpu.matmul %0, %1, %cst {dimension_numbers = #tpu.dot_dimension_numbers<[1], [0], [0], [1], [0, 0, 1, 1], [], []>} : vector<16x784xbf16>, vector<784x1024xbf16>, vector<16x1024xf32> -> vector<16x1024xf32>
    %c0_3 = arith.constant 0 : index
    %c0_4 = arith.constant 0 : index
    %3 = vector.load %arg3[%c0_3, %c0_4] : memref<1x1024xf32, #tpu.memory_space<vmem>>, vector<1x1024xf32>
    %4 = vector.broadcast %3 : vector<1x1024xf32> to vector<16x1024xf32>
    %5 = arith.addf %2, %4 : vector<16x1024xf32>
    %cst_5 = arith.constant 1.000000e-01 : f32
    %6 = vector.broadcast %cst_5 : f32 to vector<16x1024xf32>
    %7 = arith.mulf %6, %5 : vector<16x1024xf32>
    %8 = arith.maximumf %5, %7 : vector<16x1024xf32>
    %9 = arith.truncf %8 : vector<16x1024xf32> to vector<16x1024xbf16>
    %c0_6 = arith.constant 0 : index
    %c0_7 = arith.constant 0 : index
    %10 = vector.load %arg4[%c0_6, %c0_7] : memref<1024x128xbf16, #tpu.memory_space<vmem>>, vector<1024x128xbf16>
    %cst_8 = arith.constant dense<0.000000e+00> : vector<16x128xf32>
    %11 = tpu.matmul %9, %10, %cst_8 {dimension_numbers = #tpu.dot_dimension_numbers<[1], [0], [0], [1], [0, 0, 1, 1], [], []>} : vector<16x1024xbf16>, vector<1024x128xbf16>, vector<16x128xf32> -> vector<16x128xf32>
    %c0_9 = arith.constant 0 : index
    %c0_10 = arith.constant 0 : index
    %12 = vector.load %arg5[%c0_9, %c0_10] : memref<1x128xf32, #tpu.memory_space<vmem>>, vector<1x128xf32>
    %13 = vector.broadcast %12 : vector<1x128xf32> to vector<16x128xf32>
    %14 = arith.addf %11, %13 : vector<16x128xf32>
    %cst_11 = arith.constant 1.000000e-01 : f32
    %15 = vector.broadcast %cst_11 : f32 to vector<16x128xf32>
    %16 = arith.mulf %15, %14 : vector<16x128xf32>
    %17 = arith.maximumf %14, %16 : vector<16x128xf32>
    %18 = arith.truncf %17 : vector<16x128xf32> to vector<16x128xbf16>
    %c0_12 = arith.constant 0 : index
    %c0_13 = arith.constant 0 : index
    %19 = vector.load %arg6[%c0_12, %c0_13] : memref<128x128xbf16, #tpu.memory_space<vmem>>, vector<128x128xbf16>
    %cst_14 = arith.constant dense<0.000000e+00> : vector<16x128xf32>
    %20 = tpu.matmul %18, %19, %cst_14 {dimension_numbers = #tpu.dot_dimension_numbers<[1], [0], [0], [1], [0, 0, 1, 1], [], []>} : vector<16x128xbf16>, vector<128x128xbf16>, vector<16x128xf32> -> vector<16x128xf32>
    %c0_15 = arith.constant 0 : index
    %c0_16 = arith.constant 0 : index
    %21 = vector.load %arg7[%c0_15, %c0_16] : memref<1x128xf32, #tpu.memory_space<vmem>>, vector<1x128xf32>
    %22 = vector.broadcast %21 : vector<1x128xf32> to vector<16x128xf32>
    %23 = arith.addf %20, %22 : vector<16x128xf32>
    %cst_17 = arith.constant 1.000000e-01 : f32
    %24 = vector.broadcast %cst_17 : f32 to vector<16x128xf32>
    %25 = arith.mulf %24, %23 : vector<16x128xf32>
    %26 = arith.maximumf %23, %25 : vector<16x128xf32>
    %27 = arith.truncf %26 : vector<16x128xf32> to vector<16x128xbf16>
    %c0_18 = arith.constant 0 : index
    %c0_19 = arith.constant 0 : index
    %28 = vector.load %arg8[%c0_18, %c0_19] : memref<128x128xbf16, #tpu.memory_space<vmem>>, vector<128x128xbf16>
    %cst_20 = arith.constant dense<0.000000e+00> : vector<16x128xf32>
    %29 = tpu.matmul %27, %28, %cst_20 {dimension_numbers = #tpu.dot_dimension_numbers<[1], [0], [0], [1], [0, 0, 1, 1], [], []>} : vector<16x128xbf16>, vector<128x128xbf16>, vector<16x128xf32> -> vector<16x128xf32>
    %c0_21 = arith.constant 0 : index
    %c0_22 = arith.constant 0 : index
    %30 = vector.load %arg9[%c0_21, %c0_22] : memref<1x128xf32, #tpu.memory_space<vmem>>, vector<1x128xf32>
    %31 = vector.broadcast %30 : vector<1x128xf32> to vector<16x128xf32>
    %32 = arith.addf %29, %31 : vector<16x128xf32>
    %cst_23 = arith.constant 1.000000e-01 : f32
    %33 = vector.broadcast %cst_23 : f32 to vector<16x128xf32>
    %34 = arith.mulf %33, %32 : vector<16x128xf32>
    %35 = arith.maximumf %32, %34 : vector<16x128xf32>
    %36 = arith.truncf %35 : vector<16x128xf32> to vector<16x128xbf16>
    %c0_24 = arith.constant 0 : index
    %c0_25 = arith.constant 0 : index
    %37 = vector.load %arg10[%c0_24, %c0_25] : memref<128x128xbf16, #tpu.memory_space<vmem>>, vector<128x128xbf16>
    %cst_26 = arith.constant dense<0.000000e+00> : vector<16x128xf32>
    %38 = tpu.matmul %36, %37, %cst_26 {dimension_numbers = #tpu.dot_dimension_numbers<[1], [0], [0], [1], [0, 0, 1, 1], [], []>} : vector<16x128xbf16>, vector<128x128xbf16>, vector<16x128xf32> -> vector<16x128xf32>
    %c0_27 = arith.constant 0 : index
    %c0_28 = arith.constant 0 : index
    %39 = vector.load %arg11[%c0_27, %c0_28] : memref<1x128xf32, #tpu.memory_space<vmem>>, vector<1x128xf32>
    %40 = vector.broadcast %39 : vector<1x128xf32> to vector<16x128xf32>
    %41 = arith.addf %38, %40 : vector<16x128xf32>
    %42 = arith.truncf %41 : vector<16x128xf32> to vector<16x128xbf16>
    %c0_29 = arith.constant 0 : index
    %c0_30 = arith.constant 0 : index
    %43 = vector.load %arg12[%c0_29, %c0_30] : memref<16x128xbf16, #tpu.memory_space<vmem>>, vector<16x128xbf16>
    tpu.vector_store %arg12[%c0_29, %c0_30], %42 {strides = array<i32>} : memref<16x128xbf16, #tpu.memory_space<vmem>>, vector<16x128xbf16>,
    return
  }
  func.func @transform_0(%arg0: i32) -> (i32, i32) {
    %c0_i32 = arith.constant 0 : i32
    %c0_i32_0 = arith.constant 0 : i32
    return %arg0, %c0_i32 : i32, i32
  }
  func.func @transform_1(%arg0: i32) -> (i32, i32) {
    %c0_i32 = arith.constant 0 : i32
    %c0_i32_0 = arith.constant 0 : i32
    %c0_i32_1 = arith.constant 0 : i32
    return %c0_i32, %c0_i32_0 : i32, i32
  }
  func.func @transform_2(%arg0: i32) -> (i32, i32) {
    %c0_i32 = arith.constant 0 : i32
    %c0_i32_0 = arith.constant 0 : i32
    %c0_i32_1 = arith.constant 0 : i32
    return %c0_i32, %c0_i32_0 : i32, i32
  }
  func.func @transform_3(%arg0: i32) -> (i32, i32) {
    %c0_i32 = arith.constant 0 : i32
    %c0_i32_0 = arith.constant 0 : i32
    %c0_i32_1 = arith.constant 0 : i32
    return %c0_i32, %c0_i32_0 : i32, i32
  }
  func.func @transform_4(%arg0: i32) -> (i32, i32) {
    %c0_i32 = arith.constant 0 : i32
    %c0_i32_0 = arith.constant 0 : i32
    %c0_i32_1 = arith.constant 0 : i32
    return %c0_i32, %c0_i32_0 : i32, i32
  }
  func.func @transform_5(%arg0: i32) -> (i32, i32) {
    %c0_i32 = arith.constant 0 : i32
    %c0_i32_0 = arith.constant 0 : i32
    %c0_i32_1 = arith.constant 0 : i32
    return %c0_i32, %c0_i32_0 : i32, i32
  }
  func.func @transform_6(%arg0: i32) -> (i32, i32) {
    %c0_i32 = arith.constant 0 : i32
    %c0_i32_0 = arith.constant 0 : i32
    %c0_i32_1 = arith.constant 0 : i32
    return %c0_i32, %c0_i32_0 : i32, i32
  }
  func.func @transform_7(%arg0: i32) -> (i32, i32) {
    %c0_i32 = arith.constant 0 : i32
    %c0_i32_0 = arith.constant 0 : i32
    %c0_i32_1 = arith.constant 0 : i32
    return %c0_i32, %c0_i32_0 : i32, i32
  }
  func.func @transform_8(%arg0: i32) -> (i32, i32) {
    %c0_i32 = arith.constant 0 : i32
    %c0_i32_0 = arith.constant 0 : i32
    %c0_i32_1 = arith.constant 0 : i32
    return %c0_i32, %c0_i32_0 : i32, i32
  }
  func.func @transform_9(%arg0: i32) -> (i32, i32) {
    %c0_i32 = arith.constant 0 : i32
    %c0_i32_0 = arith.constant 0 : i32
    %c0_i32_1 = arith.constant 0 : i32
    return %c0_i32, %c0_i32_0 : i32, i32
  }
  func.func @transform_10(%arg0: i32) -> (i32, i32) {
    %c0_i32 = arith.constant 0 : i32
    %c0_i32_0 = arith.constant 0 : i32
    %c0_i32_1 = arith.constant 0 : i32
    return %c0_i32, %c0_i32_0 : i32, i32
  }
  func.func @transform_11(%arg0: i32) -> (i32, i32) {
    %c0_i32 = arith.constant 0 : i32
    %c0_i32_0 = arith.constant 0 : i32
    return %arg0, %c0_i32 : i32, i32
  }
}

</mosaic_0001>

<llo_original>
// kernel: mlp_forward.1
$region0: #{mlp_forward.1}
  #allocation0 [shape = 'u32[]', space=smem, size = 0x4, offset = 0x4, fixed_abs, tag = 'smem constant byte address 0x4 - core index']
  #allocation1 [shape = 'u32[144,128]{1,0:T(1,128)}', space=vmem, size = 0x12000, scoped, tag = 'internal scratch']
  %s0 = inlined_call_operand.hbm [shape: bf16[16,784], index: 0, kind: input, shape index: {}]
  %s1 = inlined_call_operand.hbm [shape: bf16[784,1024], index: 1, kind: input, shape index: {}]
  %s2 = inlined_call_operand.hbm [shape: f32[1,1024], index: 2, kind: input, shape index: {}]
  %s3 = inlined_call_operand.hbm [shape: bf16[1024,128], index: 3, kind: input, shape index: {}]
  %s4 = inlined_call_operand.hbm [shape: f32[1,128], index: 4, kind: input, shape index: {}]
  %s5 = inlined_call_operand.hbm [shape: bf16[128,128], index: 5, kind: input, shape index: {}]
  %s6 = inlined_call_operand.hbm [shape: f32[1,128], index: 6, kind: input, shape index: {}]
  %s7 = inlined_call_operand.hbm [shape: bf16[128,128], index: 7, kind: input, shape index: {}]
  %s8 = inlined_call_operand.hbm [shape: f32[1,128], index: 8, kind: input, shape index: {}]
  %s9 = inlined_call_operand.hbm [shape: bf16[128,128], index: 9, kind: input, shape index: {}]
  %s10 = inlined_call_operand.hbm [shape: f32[1,128], index: 10, kind: input, shape index: {}]
  %s11 = inlined_call_operand.hbm [shape: bf16[16,128], index: 11, kind: output, shape index: {}]
  %s12 = sld [smem:[#allocation0]]
  $region98: #{mlp_forward.1} parent=0
    _
  %s14 = ssub.s32 1, %s12
  %s15 = scalar_select 0, %s14, %s12
  $region1: #{mlp_forward.1} parent=0
    #allocation2 [shape = 'u8[28672]{0}', space=vmem, size = 0x7000, scoped, tag = 'input window, operand 0, single buffered']
    #allocation3 [shape = 's32[1]{0}', space=sflag, size = 0x4, scoped, tag = 'scoped memory for mlp_forward.1']
    #allocation4 [shape = 's32[1]{0}', space=sflag, size = 0x4, scoped, tag = 'scoped memory for mlp_forward.1']
    #allocation5 [shape = 'u8[1605632]{0}', space=vmem, size = 0x188000, scoped, tag = 'input window, operand 1, single buffered']
    #allocation6 [shape = 's32[1]{0}', space=sflag, size = 0x4, scoped, tag = 'scoped memory for mlp_forward.1']
    #allocation7 [shape = 'u8[4096]{0}', space=vmem, size = 0x1000, scoped, tag = 'input window, operand 2, single buffered']
    #allocation8 [shape = 'u8[262144]{0}', space=vmem, size = 0x40000, scoped, tag = 'input window, operand 3, single buffered']
    #allocation9 [shape = 's32[1]{0}', space=sflag, size = 0x4, scoped, tag = 'scoped memory for mlp_forward.1']
    #allocation10 [shape = 'u8[512]{0}', space=vmem, size = 0x400, scoped, tag = 'input window, operand 4, single buffered']
    #allocation11 [shape = 'u8[32768]{0}', space=vmem, size = 0x8000, scoped, tag = 'input window, operand 5, single buffered']
    #allocation12 [shape = 's32[1]{0}', space=sflag, size = 0x4, scoped, tag = 'scoped memory for mlp_forward.1']
    #allocation13 [shape = 'u8[512]{0}', space=vmem, size = 0x400, scoped, tag = 'input window, operand 6, single buffered']
    #allocation14 [shape = 'u8[32768]{0}', space=vmem, size = 0x8000, scoped, tag = 'input window, operand 7, single buffered']
    #allocation15 [shape = 's32[1]{0}', space=sflag, size = 0x4, scoped, tag = 'scoped memory for mlp_forward.1']
    #allocation16 [shape = 'u8[512]{0}', space=vmem, size = 0x400, scoped, tag = 'input window, operand 8, single buffered']
    #allocation17 [shape = 'u8[32768]{0}', space=vmem, size = 0x8000, scoped, tag = 'input window, operand 9, single buffered']
    #allocation18 [shape = 's32[1]{0}', space=sflag, size = 0x4, scoped, tag = 'scoped memory for mlp_forward.1']
    #allocation19 [shape = 'u8[512]{0}', space=vmem, size = 0x400, scoped, tag = 'input window, operand 10, single buffered']
    #allocation20 [shape = 'u8[4096]{0}', space=vmem, size = 0x1000, scoped, tag = 'output window, operand 0, single buffered']
    %16 = vsyncpa [#allocation3], 0
    %17 = vsyncpa [#allocation6], 0
    %18 = vsyncpa [#allocation9], 0
    %19 = vsyncpa [#allocation12], 0
    %20 = vsyncpa [#allocation15], 0
    %21 = vsyncpa [#allocation18], 0
    %22 = vsyncpa [#allocation4], 0
    // Predicated region
    $region2: #{mlp_forward.1} parent=1 // pred_check
      _
    $region3: #{mlp_forward.1} parent=1 // pred_check_branch
      %24 = sbr.rel (0) target = $region5
    $region4: #{mlp_forward.1} parent=1 // pred_region
      %s26 = ssub.s32 896, 896
      %27 = vsyncadd [#allocation3], %s26
      %s28 = sshll.u32 [#allocation2], 4
      %s29 = int_to_ptr.vmem [resolvable:$true] %s28
      %34 = dma.hbm_to_vmem [thread:$0]  %s0, 896, %s29, [#allocation3], 448, 448, 28
    $region5: #{mlp_forward.1} parent=1 // pred_fallthru
      _
    // Predicated region
    $region6: #{mlp_forward.1} parent=1 // pred_check
      _
    $region7: #{mlp_forward.1} parent=1 // pred_check_branch
      %36 = sbr.rel (0) target = $region9
    $region8: #{mlp_forward.1} parent=1 // pred_region
      %s38 = ssub.s32 50176, 50176
      %39 = vsyncadd [#allocation6], %s38
      %s40 = sshll.u32 [#allocation5], 4
      %s41 = int_to_ptr.vmem [resolvable:$true] %s40
      %46 = dma.hbm_to_vmem [thread:$0]  %s1, 50176, %s41, [#allocation6], 512, 512, 32
    $region9: #{mlp_forward.1} parent=1 // pred_fallthru
      _
    // Predicated region
    $region10: #{mlp_forward.1} parent=1 // pred_check
      _
    $region11: #{mlp_forward.1} parent=1 // pred_check_branch
      %48 = sbr.rel (0) target = $region13
    $region12: #{mlp_forward.1} parent=1 // pred_region
      %s50 = ssub.s32 128, 128
      %51 = vsyncadd [#allocation6], %s50
      %s53 = sshll.u32 [#allocation7], 4
      %s54 = int_to_ptr.vmem [resolvable:$true] %s53
      %56 = dma.hbm_to_vmem [thread:$0]  %s2, 128, %s54, [#allocation6]
    $region13: #{mlp_forward.1} parent=1 // pred_fallthru
      _
    // Predicated region
    $region14: #{mlp_forward.1} parent=1 // pred_check
      _
    $region15: #{mlp_forward.1} parent=1 // pred_check_branch
      %58 = sbr.rel (0) target = $region17
    $region16: #{mlp_forward.1} parent=1 // pred_region
      %s60 = ssub.s32 8192, 8192
      %61 = vsyncadd [#allocation9], %s60
      %s62 = sshll.u32 [#allocation8], 4
      %s63 = int_to_ptr.vmem [resolvable:$true] %s62
      %68 = dma.hbm_to_vmem [thread:$0]  %s3, 8192, %s63, [#allocation9], 64, 64, 4
    $region17: #{mlp_forward.1} parent=1 // pred_fallthru
      _
    // Predicated region
    $region18: #{mlp_forward.1} parent=1 // pred_check
      _
    $region19: #{mlp_forward.1} parent=1 // pred_check_branch
      %70 = sbr.rel (0) target = $region21
    $region20: #{mlp_forward.1} parent=1 // pred_region
      %s72 = ssub.s32 16, 16
      %73 = vsyncadd [#allocation9], %s72
      %s75 = sshll.u32 [#allocation10], 4
      %s76 = int_to_ptr.vmem [resolvable:$true] %s75
      %78 = dma.hbm_to_vmem [thread:$0]  %s4, 16, %s76, [#allocation9]
    $region21: #{mlp_forward.1} parent=1 // pred_fallthru
      _
    // Predicated region
    $region22: #{mlp_forward.1} parent=1 // pred_check
      _
    $region23: #{mlp_forward.1} parent=1 // pred_check_branch
      %80 = sbr.rel (0) target = $region25
    $region24: #{mlp_forward.1} parent=1 // pred_region
      %s82 = ssub.s32 1024, 1024
      %83 = vsyncadd [#allocation12], %s82
      %s84 = sshll.u32 [#allocation11], 4
      %s85 = int_to_ptr.vmem [resolvable:$true] %s84
      %90 = dma.hbm_to_vmem [thread:$0]  %s5, 1024, %s85, [#allocation12], 64, 64, 4
    $region25: #{mlp_forward.1} parent=1 // pred_fallthru
      _
    // Predicated region
    $region26: #{mlp_forward.1} parent=1 // pred_check
      _
    $region27: #{mlp_forward.1} parent=1 // pred_check_branch
      %92 = sbr.rel (0) target = $region29
    $region28: #{mlp_forward.1} parent=1 // pred_region
      %s94 = ssub.s32 16, 16
      %95 = vsyncadd [#allocation12], %s94
      %s97 = sshll.u32 [#allocation13], 4
      %s98 = int_to_ptr.vmem [resolvable:$true] %s97
      %100 = dma.hbm_to_vmem [thread:$0]  %s6, 16, %s98, [#allocation12]
    $region29: #{mlp_forward.1} parent=1 // pred_fallthru
      _
    // Predicated region
    $region30: #{mlp_forward.1} parent=1 // pred_check
      _
    $region31: #{mlp_forward.1} parent=1 // pred_check_branch
      %102 = sbr.rel (0) target = $region33
    $region32: #{mlp_forward.1} parent=1 // pred_region
      %s104 = ssub.s32 1024, 1024
      %105 = vsyncadd [#allocation15], %s104
      %s106 = sshll.u32 [#allocation14], 4
      %s107 = int_to_ptr.vmem [resolvable:$true] %s106
      %112 = dma.hbm_to_vmem [thread:$0]  %s7, 1024, %s107, [#allocation15], 64, 64, 4
    $region33: #{mlp_forward.1} parent=1 // pred_fallthru
      _
    // Predicated region
    $region34: #{mlp_forward.1} parent=1 // pred_check
      _
    $region35: #{mlp_forward.1} parent=1 // pred_check_branch
      %114 = sbr.rel (0) target = $region37
    $region36: #{mlp_forward.1} parent=1 // pred_region
      %s116 = ssub.s32 16, 16
      %117 = vsyncadd [#allocation15], %s116
      %s119 = sshll.u32 [#allocation16], 4
      %s120 = int_to_ptr.vmem [resolvable:$true] %s119
      %122 = dma.hbm_to_vmem [thread:$0]  %s8, 16, %s120, [#allocation15]
    $region37: #{mlp_forward.1} parent=1 // pred_fallthru
      _
    // Predicated region
    $region38: #{mlp_forward.1} parent=1 // pred_check
      _
    $region39: #{mlp_forward.1} parent=1 // pred_check_branch
      %124 = sbr.rel (0) target = $region41
    $region40: #{mlp_forward.1} parent=1 // pred_region
      %s126 = ssub.s32 1024, 1024
      %127 = vsyncadd [#allocation18], %s126
      %s128 = sshll.u32 [#allocation17], 4
      %s129 = int_to_ptr.vmem [resolvable:$true] %s128
      %134 = dma.hbm_to_vmem [thread:$0]  %s9, 1024, %s129, [#allocation18], 64, 64, 4
    $region41: #{mlp_forward.1} parent=1 // pred_fallthru
      _
    // Predicated region
    $region42: #{mlp_forward.1} parent=1 // pred_check
      _
    $region43: #{mlp_forward.1} parent=1 // pred_check_branch
      %136 = sbr.rel (0) target = $region45
    $region44: #{mlp_forward.1} parent=1 // pred_region
      %s138 = ssub.s32 16, 16
      %139 = vsyncadd [#allocation18], %s138
      %s141 = sshll.u32 [#allocation19], 4
      %s142 = int_to_ptr.vmem [resolvable:$true] %s141
      %144 = dma.hbm_to_vmem [thread:$0]  %s10, 16, %s142, [#allocation18]
    $region45: #{mlp_forward.1} parent=1 // pred_fallthru
      _
    // Predicated region
    $region46: #{mlp_forward.1} parent=1 // pred_check
      _
    $region47: #{mlp_forward.1} parent=1 // pred_check_branch
      %146 = sbr.rel (0) target = $region49
    $region48: #{mlp_forward.1} parent=1 // pred_region
      %147 = dma.done [#allocation3], 896
    $region49: #{mlp_forward.1} parent=1 // pred_fallthru
      _
    // Predicated region
    $region50: #{mlp_forward.1} parent=1 // pred_check
      _
    $region51: #{mlp_forward.1} parent=1 // pred_check_branch
      %149 = sbr.rel (0) target = $region53
    $region52: #{mlp_forward.1} parent=1 // pred_region
      %150 = dma.done [#allocation6], 50176
    $region53: #{mlp_forward.1} parent=1 // pred_fallthru
      _
    // Predicated region
    $region54: #{mlp_forward.1} parent=1 // pred_check
      _
    $region55: #{mlp_forward.1} parent=1 // pred_check_branch
      %152 = sbr.rel (0) target = $region57
    $region56: #{mlp_forward.1} parent=1 // pred_region
      %153 = dma.done [#allocation6], 128
    $region57: #{mlp_forward.1} parent=1 // pred_fallthru
      _
    // Predicated region
    $region58: #{mlp_forward.1} parent=1 // pred_check
      _
    $region59: #{mlp_forward.1} parent=1 // pred_check_branch
      %155 = sbr.rel (0) target = $region61
    $region60: #{mlp_forward.1} parent=1 // pred_region
      %156 = dma.done [#allocation9], 8192
    $region61: #{mlp_forward.1} parent=1 // pred_fallthru
      _
    // Predicated region
    $region62: #{mlp_forward.1} parent=1 // pred_check
      _
    $region63: #{mlp_forward.1} parent=1 // pred_check_branch
      %158 = sbr.rel (0) target = $region65
    $region64: #{mlp_forward.1} parent=1 // pred_region
      %159 = dma.done [#allocation9], 16
    $region65: #{mlp_forward.1} parent=1 // pred_fallthru
      _
    // Predicated region
    $region66: #{mlp_forward.1} parent=1 // pred_check
      _
    $region67: #{mlp_forward.1} parent=1 // pred_check_branch
      %161 = sbr.rel (0) target = $region69
    $region68: #{mlp_forward.1} parent=1 // pred_region
      %162 = dma.done [#allocation12], 1024
    $region69: #{mlp_forward.1} parent=1 // pred_fallthru
      _
    // Predicated region
    $region70: #{mlp_forward.1} parent=1 // pred_check
      _
    $region71: #{mlp_forward.1} parent=1 // pred_check_branch
      %164 = sbr.rel (0) target = $region73
    $region72: #{mlp_forward.1} parent=1 // pred_region
      %165 = dma.done [#allocation12], 16
    $region73: #{mlp_forward.1} parent=1 // pred_fallthru
      _
    // Predicated region
    $region74: #{mlp_forward.1} parent=1 // pred_check
      _
    $region75: #{mlp_forward.1} parent=1 // pred_check_branch
      %167 = sbr.rel (0) target = $region77
    $region76: #{mlp_forward.1} parent=1 // pred_region
      %168 = dma.done [#allocation15], 1024
    $region77: #{mlp_forward.1} parent=1 // pred_fallthru
      _
    // Predicated region
    $region78: #{mlp_forward.1} parent=1 // pred_check
      _
    $region79: #{mlp_forward.1} parent=1 // pred_check_branch
      %170 = sbr.rel (0) target = $region81
    $region80: #{mlp_forward.1} parent=1 // pred_region
      %171 = dma.done [#allocation15], 16
    $region81: #{mlp_forward.1} parent=1 // pred_fallthru
      _
    // Predicated region
    $region82: #{mlp_forward.1} parent=1 // pred_check
      _
    $region83: #{mlp_forward.1} parent=1 // pred_check_branch
      %173 = sbr.rel (0) target = $region85
    $region84: #{mlp_forward.1} parent=1 // pred_region
      %174 = dma.done [#allocation18], 1024
    $region85: #{mlp_forward.1} parent=1 // pred_fallthru
      _
    // Predicated region
    $region86: #{mlp_forward.1} parent=1 // pred_check
      _
    $region87: #{mlp_forward.1} parent=1 // pred_check_branch
      %176 = sbr.rel (0) target = $region89
    $region88: #{mlp_forward.1} parent=1 // pred_region
      %177 = dma.done [#allocation18], 16
    $region89: #{mlp_forward.1} parent=1 // pred_fallthru
      _
    %v179 = vld [vmem:[#allocation2] sm:$0xff]
    %v180 = vld [vmem:[#allocation2 + $0x8] sm:$0xff]
    %v181 = vld [vmem:[#allocation2 + $0x10] sm:$0xff]
    %v182 = vld [vmem:[#allocation2 + $0x18] sm:$0xf]
    %v183 = vld [vmem:[#allocation2 + $0x1c] sm:$0xff]
    %v184 = vld [vmem:[#allocation2 + $0x24] sm:$0xff]
    %v185 = vld [vmem:[#allocation2 + $0x2c] sm:$0xff]
    %v186 = vld [vmem:[#allocation2 + $0x34] sm:$0xf]
    %v187 = vld [vmem:[#allocation5] sm:$0xff]
    %v188 = vld [vmem:[#allocation5 + $0x8] sm:$0xff]
    %v189 = vld [vmem:[#allocation5 + $0x10] sm:$0xff]
    %v190 = vld [vmem:[#allocation5 + $0x18] sm:$0xff]
    %v191 = vld [vmem:[#allocation5 + $0x20] sm:$0xff]
    %v192 = vld [vmem:[#allocation5 + $0x28] sm:$0xff]
    %v193 = vld [vmem:[#allocation5 + $0x30] sm:$0xff]
    %v194 = vld [vmem:[#allocation5 + $0x38] sm:$0xff]
    %v195 = vld [vmem:[#allocation5 + $0x40] sm:$0xff]
    %v196 = vld [vmem:[#allocation5 + $0x48] sm:$0xff]
    %v197 = vld [vmem:[#allocation5 + $0x50] sm:$0xff]
    %v198 = vld [vmem:[#allocation5 + $0x58] sm:$0xff]
    %v199 = vld [vmem:[#allocation5 + $0x60] sm:$0xff]
    %v200 = vld [vmem:[#allocation5 + $0x68] sm:$0xff]
    %v201 = vld [vmem:[#allocation5 + $0x70] sm:$0xff]
    %v202 = vld [vmem:[#allocation5 + $0x78] sm:$0xff]
    %v203 = vld [vmem:[#allocation5 + $0x80] sm:$0xff]
    %v204 = vld [vmem:[#allocation5 + $0x88] sm:$0xff]
    %v205 = vld [vmem:[#allocation5 + $0x90] sm:$0xff]
    %v206 = vld [vmem:[#allocation5 + $0x98] sm:$0xff]
    %v207 = vld [vmem:[#allocation5 + $0xa0] sm:$0xff]
    %v208 = vld [vmem:[#allocation5 + $0xa8] sm:$0xff]
    %v209 = vld [vmem:[#allocation5 + $0xb0] sm:$0xff]
    %v210 = vld [vmem:[#allocation5 + $0xb8] sm:$0xff]
    %v211 = vld [vmem:[#allocation5 + $0xc0] sm:$0xff]
    %v212 = vld [vmem:[#allocation5 + $0xc8] sm:$0xff]
    %v213 = vld [vmem:[#allocation5 + $0xd0] sm:$0xff]
    %v214 = vld [vmem:[#allocation5 + $0xd8] sm:$0xff]
    %v215 = vld [vmem:[#allocation5 + $0xe0] sm:$0xff]
    %v216 = vld [vmem:[#allocation5 + $0xe8] sm:$0xff]
    %v217 = vld [vmem:[#allocation5 + $0xf0] sm:$0xff]
    %v218 = vld [vmem:[#allocation5 + $0xf8] sm:$0xff]
    %v219 = vld [vmem:[#allocation5 + $0x100] sm:$0xff]
    %v220 = vld [vmem:[#allocation5 + $0x108] sm:$0xff]
    %v221 = vld [vmem:[#allocation5 + $0x110] sm:$0xff]
    %v222 = vld [vmem:[#allocation5 + $0x118] sm:$0xff]
    %v223 = vld [vmem:[#allocation5 + $0x120] sm:$0xff]
    %v224 = vld [vmem:[#allocation5 + $0x128] sm:$0xff]
    %v225 = vld [vmem:[#allocation5 + $0x130] sm:$0xff]
    %v226 = vld [vmem:[#allocation5 + $0x138] sm:$0xff]
    %v227 = vld [vmem:[#allocation5 + $0x140] sm:$0xff]
    %v228 = vld [vmem:[#allocation5 + $0x148] sm:$0xff]
    %v229 = vld [vmem:[#allocation5 + $0x150] sm:$0xff]
    %v230 = vld [vmem:[#allocation5 + $0x158] sm:$0xff]
    %v231 = vld [vmem:[#allocation5 + $0x160] sm:$0xff]
    %v232 = vld [vmem:[#allocation5 + $0x168] sm:$0xff]
    %v233 = vld [vmem:[#allocation5 + $0x170] sm:$0xff]
    %v234 = vld [vmem:[#allocation5 + $0x178] sm:$0xff]
    %v235 = vld [vmem:[#allocation5 + $0x180] sm:$0xff]
    %v236 = vld [vmem:[#allocation5 + $0x188] sm:$0xff]
    %v237 = vld [vmem:[#allocation5 + $0x190] sm:$0xff]
    %v238 = vld [vmem:[#allocation5 + $0x198] sm:$0xff]
    %v239 = vld [vmem:[#allocation5 + $0x1a0] sm:$0xff]
    %v240 = vld [vmem:[#allocation5 + $0x1a8] sm:$0xff]
    %v241 = vld [vmem:[#allocation5 + $0x1b0] sm:$0xff]
    %v242 = vld [vmem:[#allocation5 + $0x1b8] sm:$0xff]
    %v243 = vld [vmem:[#allocation5 + $0x1c0] sm:$0xff]
    %v244 = vld [vmem:[#allocation5 + $0x1c8] sm:$0xff]
    %v245 = vld [vmem:[#allocation5 + $0x1d0] sm:$0xff]
    %v246 = vld [vmem:[#allocation5 + $0x1d8] sm:$0xff]
    %v247 = vld [vmem:[#allocation5 + $0x1e0] sm:$0xff]
    %v248 = vld [vmem:[#allocation5 + $0x1e8] sm:$0xff]
    %v249 = vld [vmem:[#allocation5 + $0x1f0] sm:$0xff]
    %v250 = vld [vmem:[#allocation5 + $0x1f8] sm:$0xff]
    %v251 = vld [vmem:[#allocation5 + $0x200] sm:$0xff]
    %v252 = vld [vmem:[#allocation5 + $0x208] sm:$0xff]
    %v253 = vld [vmem:[#allocation5 + $0x210] sm:$0xff]
    %v254 = vld [vmem:[#allocation5 + $0x218] sm:$0xff]
    %v255 = vld [vmem:[#allocation5 + $0x220] sm:$0xff]
    %v256 = vld [vmem:[#allocation5 + $0x228] sm:$0xff]
    %v257 = vld [vmem:[#allocation5 + $0x230] sm:$0xff]
    %v258 = vld [vmem:[#allocation5 + $0x238] sm:$0xff]
    %v259 = vld [vmem:[#allocation5 + $0x240] sm:$0xff]
    %v260 = vld [vmem:[#allocation5 + $0x248] sm:$0xff]
    %v261 = vld [vmem:[#allocation5 + $0x250] sm:$0xff]
    %v262 = vld [vmem:[#allocation5 + $0x258] sm:$0xff]
    %v263 = vld [vmem:[#allocation5 + $0x260] sm:$0xff]
    %v264 = vld [vmem:[#allocation5 + $0x268] sm:$0xff]
    %v265 = vld [vmem:[#allocation5 + $0x270] sm:$0xff]
    %v266 = vld [vmem:[#allocation5 + $0x278] sm:$0xff]
    %v267 = vld [vmem:[#allocation5 + $0x280] sm:$0xff]
    %v268 = vld [vmem:[#allocation5 + $0x288] sm:$0xff]
    %v269 = vld [vmem:[#allocation5 + $0x290] sm:$0xff]
    %v270 = vld [vmem:[#allocation5 + $0x298] sm:$0xff]
    %v271 = vld [vmem:[#allocation5 + $0x2a0] sm:$0xff]
    %v272 = vld [vmem:[#allocation5 + $0x2a8] sm:$0xff]
    %v273 = vld [vmem:[#allocation5 + $0x2b0] sm:$0xff]
    %v274 = vld [vmem:[#allocation5 + $0x2b8] sm:$0xff]
    %v275 = vld [vmem:[#allocation5 + $0x2c0] sm:$0xff]
    %v276 = vld [vmem:[#allocation5 + $0x2c8] sm:$0xff]
    %v277 = vld [vmem:[#allocation5 + $0x2d0] sm:$0xff]
    %v278 = vld [vmem:[#allocation5 + $0x2d8] sm:$0xff]
    %v279 = vld [vmem:[#allocation5 + $0x2e0] sm:$0xff]
    %v280 = vld [vmem:[#allocation5 + $0x2e8] sm:$0xff]
    %v281 = vld [vmem:[#allocation5 + $0x2f0] sm:$0xff]
    %v282 = vld [vmem:[#allocation5 + $0x2f8] sm:$0xff]
    %v283 = vld [vmem:[#allocation5 + $0x300] sm:$0xff]
    %v284 = vld [vmem:[#allocation5 + $0x308] sm:$0xff]
    %v285 = vld [vmem:[#allocation5 + $0x310] sm:$0xff]
    %v286 = vld [vmem:[#allocation5 + $0x318] sm:$0xff]
    %v287 = vld [vmem:[#allocation5 + $0x320] sm:$0xff]
    %v288 = vld [vmem:[#allocation5 + $0x328] sm:$0xff]
    %v289 = vld [vmem:[#allocation5 + $0x330] sm:$0xff]
    %v290 = vld [vmem:[#allocation5 + $0x338] sm:$0xff]
    %v291 = vld [vmem:[#allocation5 + $0x340] sm:$0xff]
    %v292 = vld [vmem:[#allocation5 + $0x348] sm:$0xff]
    %v293 = vld [vmem:[#allocation5 + $0x350] sm:$0xff]
    %v294 = vld [vmem:[#allocation5 + $0x358] sm:$0xff]
    %v295 = vld [vmem:[#allocation5 + $0x360] sm:$0xff]
    %v296 = vld [vmem:[#allocation5 + $0x368] sm:$0xff]
    %v297 = vld [vmem:[#allocation5 + $0x370] sm:$0xff]
    %v298 = vld [vmem:[#allocation5 + $0x378] sm:$0xff]
    %v299 = vld [vmem:[#allocation5 + $0x380] sm:$0xff]
    %v300 = vld [vmem:[#allocation5 + $0x388] sm:$0xff]
    %v301 = vld [vmem:[#allocation5 + $0x390] sm:$0xff]
    %v302 = vld [vmem:[#allocation5 + $0x398] sm:$0xff]
    %v303 = vld [vmem:[#allocation5 + $0x3a0] sm:$0xff]
    %v304 = vld [vmem:[#allocation5 + $0x3a8] sm:$0xff]
    %v305 = vld [vmem:[#allocation5 + $0x3b0] sm:$0xff]
    %v306 = vld [vmem:[#allocation5 + $0x3b8] sm:$0xff]
    %v307 = vld [vmem:[#allocation5 + $0x3c0] sm:$0xff]
    %v308 = vld [vmem:[#allocation5 + $0x3c8] sm:$0xff]
    %v309 = vld [vmem:[#allocation5 + $0x3d0] sm:$0xff]
    %v310 = vld [vmem:[#allocation5 + $0x3d8] sm:$0xff]
    %v311 = vld [vmem:[#allocation5 + $0x3e0] sm:$0xff]
    %v312 = vld [vmem:[#allocation5 + $0x3e8] sm:$0xff]
    %v313 = vld [vmem:[#allocation5 + $0x3f0] sm:$0xff]
    %v314 = vld [vmem:[#allocation5 + $0x3f8] sm:$0xff]
    %v315 = vld [vmem:[#allocation5 + $0x400] sm:$0xff]
    %v316 = vld [vmem:[#allocation5 + $0x408] sm:$0xff]
    %v317 = vld [vmem:[#allocation5 + $0x410] sm:$0xff]
    %v318 = vld [vmem:[#allocation5 + $0x418] sm:$0xff]
    %v319 = vld [vmem:[#allocation5 + $0x420] sm:$0xff]
    %v320 = vld [vmem:[#allocation5 + $0x428] sm:$0xff]
    %v321 = vld [vmem:[#allocation5 + $0x430] sm:$0xff]
    %v322 = vld [vmem:[#allocation5 + $0x438] sm:$0xff]
    %v323 = vld [vmem:[#allocation5 + $0x440] sm:$0xff]
    %v324 = vld [vmem:[#allocation5 + $0x448] sm:$0xff]
    %v325 = vld [vmem:[#allocation5 + $0x450] sm:$0xff]
    %v326 = vld [vmem:[#allocation5 + $0x458] sm:$0xff]
    %v327 = vld [vmem:[#allocation5 + $0x460] sm:$0xff]
    %v328 = vld [vmem:[#allocation5 + $0x468] sm:$0xff]
    %v329 = vld [vmem:[#allocation5 + $0x470] sm:$0xff]
    %v330 = vld [vmem:[#allocation5 + $0x478] sm:$0xff]
    %v331 = vld [vmem:[#allocation5 + $0x480] sm:$0xff]
    %v332 = vld [vmem:[#allocation5 + $0x488] sm:$0xff]
    %v333 = vld [vmem:[#allocation5 + $0x490] sm:$0xff]
    %v334 = vld [vmem:[#allocation5 + $0x498] sm:$0xff]
    %v335 = vld [vmem:[#allocation5 + $0x4a0] sm:$0xff]
    %v336 = vld [vmem:[#allocation5 + $0x4a8] sm:$0xff]
    %v337 = vld [vmem:[#allocation5 + $0x4b0] sm:$0xff]
    %v338 = vld [vmem:[#allocation5 + $0x4b8] sm:$0xff]
    %v339 = vld [vmem:[#allocation5 + $0x4c0] sm:$0xff]
    %v340 = vld [vmem:[#allocation5 + $0x4c8] sm:$0xff]
    %v341 = vld [vmem:[#allocation5 + $0x4d0] sm:$0xff]
    %v342 = vld [vmem:[#allocation5 + $0x4d8] sm:$0xff]
    %v343 = vld [vmem:[#allocation5 + $0x4e0] sm:$0xff]
    %v344 = vld [vmem:[#allocation5 + $0x4e8] sm:$0xff]
    %v345 = vld [vmem:[#allocation5 + $0x4f0] sm:$0xff]
    %v346 = vld [vmem:[#allocation5 + $0x4f8] sm:$0xff]
    %v347 = vld [vmem:[#allocation5 + $0x500] sm:$0xff]
    %v348 = vld [vmem:[#allocation5 + $0x508] sm:$0xff]
    %v349 = vld [vmem:[#allocation5 + $0x510] sm:$0xff]
    %v350 = vld [vmem:[#allocation5 + $0x518] sm:$0xff]
    %v351 = vld [vmem:[#allocation5 + $0x520] sm:$0xff]
    %v352 = vld [vmem:[#allocation5 + $0x528] sm:$0xff]
    %v353 = vld [vmem:[#allocation5 + $0x530] sm:$0xff]
    %v354 = vld [vmem:[#allocation5 + $0x538] sm:$0xff]
    %v355 = vld [vmem:[#allocation5 + $0x540] sm:$0xff]
    %v356 = vld [vmem:[#allocation5 + $0x548] sm:$0xff]
    %v357 = vld [vmem:[#allocation5 + $0x550] sm:$0xff]
    %v358 = vld [vmem:[#allocation5 + $0x558] sm:$0xff]
    %v359 = vld [vmem:[#allocation5 + $0x560] sm:$0xff]
    %v360 = vld [vmem:[#allocation5 + $0x568] sm:$0xff]
    %v361 = vld [vmem:[#allocation5 + $0x570] sm:$0xff]
    %v362 = vld [vmem:[#allocation5 + $0x578] sm:$0xff]
    %v363 = vld [vmem:[#allocation5 + $0x580] sm:$0xff]
    %v364 = vld [vmem:[#allocation5 + $0x588] sm:$0xff]
    %v365 = vld [vmem:[#allocation5 + $0x590] sm:$0xff]
    %v366 = vld [vmem:[#allocation5 + $0x598] sm:$0xff]
    %v367 = vld [vmem:[#allocation5 + $0x5a0] sm:$0xff]
    %v368 = vld [vmem:[#allocation5 + $0x5a8] sm:$0xff]
    %v369 = vld [vmem:[#allocation5 + $0x5b0] sm:$0xff]
    %v370 = vld [vmem:[#allocation5 + $0x5b8] sm:$0xff]
    %v371 = vld [vmem:[#allocation5 + $0x5c0] sm:$0xff]
    %v372 = vld [vmem:[#allocation5 + $0x5c8] sm:$0xff]
    %v373 = vld [vmem:[#allocation5 + $0x5d0] sm:$0xff]
    %v374 = vld [vmem:[#allocation5 + $0x5d8] sm:$0xff]
    %v375 = vld [vmem:[#allocation5 + $0x5e0] sm:$0xff]
    %v376 = vld [vmem:[#allocation5 + $0x5e8] sm:$0xff]
    %v377 = vld [vmem:[#allocation5 + $0x5f0] sm:$0xff]
    %v378 = vld [vmem:[#allocation5 + $0x5f8] sm:$0xff]
    %v379 = vld [vmem:[#allocation5 + $0x600] sm:$0xff]
    %v380 = vld [vmem:[#allocation5 + $0x608] sm:$0xff]
    %v381 = vld [vmem:[#allocation5 + $0x610] sm:$0xff]
    %v382 = vld [vmem:[#allocation5 + $0x618] sm:$0xff]
    %v383 = vld [vmem:[#allocation5 + $0x620] sm:$0xff]
    %v384 = vld [vmem:[#allocation5 + $0x628] sm:$0xff]
    %v385 = vld [vmem:[#allocation5 + $0x630] sm:$0xff]
    %v386 = vld [vmem:[#allocation5 + $0x638] sm:$0xff]
    %v387 = vld [vmem:[#allocation5 + $0x640] sm:$0xff]
    %v388 = vld [vmem:[#allocation5 + $0x648] sm:$0xff]
    %v389 = vld [vmem:[#allocation5 + $0x650] sm:$0xff]
    %v390 = vld [vmem:[#allocation5 + $0x658] sm:$0xff]
    %v391 = vld [vmem:[#allocation5 + $0x660] sm:$0xff]
    %v392 = vld [vmem:[#allocation5 + $0x668] sm:$0xff]
    %v393 = vld [vmem:[#allocation5 + $0x670] sm:$0xff]
    %v394 = vld [vmem:[#allocation5 + $0x678] sm:$0xff]
    %v395 = vld [vmem:[#allocation5 + $0x680] sm:$0xff]
    %v396 = vld [vmem:[#allocation5 + $0x688] sm:$0xff]
    %v397 = vld [vmem:[#allocation5 + $0x690] sm:$0xff]
    %v398 = vld [vmem:[#allocation5 + $0x698] sm:$0xff]
    %v399 = vld [vmem:[#allocation5 + $0x6a0] sm:$0xff]
    %v400 = vld [vmem:[#allocation5 + $0x6a8] sm:$0xff]
    %v401 = vld [vmem:[#allocation5 + $0x6b0] sm:$0xff]
    %v402 = vld [vmem:[#allocation5 + $0x6b8] sm:$0xff]
    %v403 = vld [vmem:[#allocation5 + $0x6c0] sm:$0xff]
    %v404 = vld [vmem:[#allocation5 + $0x6c8] sm:$0xff]
    %v405 = vld [vmem:[#allocation5 + $0x6d0] sm:$0xff]
    %v406 = vld [vmem:[#allocation5 + $0x6d8] sm:$0xff]
    %v407 = vld [vmem:[#allocation5 + $0x6e0] sm:$0xff]
    %v408 = vld [vmem:[#allocation5 + $0x6e8] sm:$0xff]
    %v409 = vld [vmem:[#allocation5 + $0x6f0] sm:$0xff]
    %v410 = vld [vmem:[#allocation5 + $0x6f8] sm:$0xff]
    %v411 = vld [vmem:[#allocation5 + $0x700] sm:$0xff]
    %v412 = vld [vmem:[#allocation5 + $0x708] sm:$0xff]
    %v413 = vld [vmem:[#allocation5 + $0x710] sm:$0xff]
    %v414 = vld [vmem:[#allocation5 + $0x718] sm:$0xff]
    %v415 = vld [vmem:[#allocation5 + $0x720] sm:$0xff]
    %v416 = vld [vmem:[#allocation5 + $0x728] sm:$0xff]
    %v417 = vld [vmem:[#allocation5 + $0x730] sm:$0xff]
    %v418 = vld [vmem:[#allocation5 + $0x738] sm:$0xff]
    %v419 = vld [vmem:[#allocation5 + $0x740] sm:$0xff]
    %v420 = vld [vmem:[#allocation5 + $0x748] sm:$0xff]
    %v421 = vld [vmem:[#allocation5 + $0x750] sm:$0xff]
    %v422 = vld [vmem:[#allocation5 + $0x758] sm:$0xff]
    %v423 = vld [vmem:[#allocation5 + $0x760] sm:$0xff]
    %v424 = vld [vmem:[#allocation5 + $0x768] sm:$0xff]
    %v425 = vld [vmem:[#allocation5 + $0x770] sm:$0xff]
    %v426 = vld [vmem:[#allocation5 + $0x778] sm:$0xff]
    %v427 = vld [vmem:[#allocation5 + $0x780] sm:$0xff]
    %v428 = vld [vmem:[#allocation5 + $0x788] sm:$0xff]
    %v429 = vld [vmem:[#allocation5 + $0x790] sm:$0xff]
    %v430 = vld [vmem:[#allocation5 + $0x798] sm:$0xff]
    %v431 = vld [vmem:[#allocation5 + $0x7a0] sm:$0xff]
    %v432 = vld [vmem:[#allocation5 + $0x7a8] sm:$0xff]
    %v433 = vld [vmem:[#allocation5 + $0x7b0] sm:$0xff]
    %v434 = vld [vmem:[#allocation5 + $0x7b8] sm:$0xff]
    %v435 = vld [vmem:[#allocation5 + $0x7c0] sm:$0xff]
    %v436 = vld [vmem:[#allocation5 + $0x7c8] sm:$0xff]
    %v437 = vld [vmem:[#allocation5 + $0x7d0] sm:$0xff]
    %v438 = vld [vmem:[#allocation5 + $0x7d8] sm:$0xff]
    %v439 = vld [vmem:[#allocation5 + $0x7e0] sm:$0xff]
    %v440 = vld [vmem:[#allocation5 + $0x7e8] sm:$0xff]
    %v441 = vld [vmem:[#allocation5 + $0x7f0] sm:$0xff]
    %v442 = vld [vmem:[#allocation5 + $0x7f8] sm:$0xff]
    %v443 = vld [vmem:[#allocation5 + $0x800] sm:$0xff]
    %v444 = vld [vmem:[#allocation5 + $0x808] sm:$0xff]
    %v445 = vld [vmem:[#allocation5 + $0x810] sm:$0xff]
    %v446 = vld [vmem:[#allocation5 + $0x818] sm:$0xff]
    %v447 = vld [vmem:[#allocation5 + $0x820] sm:$0xff]
    %v448 = vld [vmem:[#allocation5 + $0x828] sm:$0xff]
    %v449 = vld [vmem:[#allocation5 + $0x830] sm:$0xff]
    %v450 = vld [vmem:[#allocation5 + $0x838] sm:$0xff]
    %v451 = vld [vmem:[#allocation5 + $0x840] sm:$0xff]
    %v452 = vld [vmem:[#allocation5 + $0x848] sm:$0xff]
    %v453 = vld [vmem:[#allocation5 + $0x850] sm:$0xff]
    %v454 = vld [vmem:[#allocation5 + $0x858] sm:$0xff]
    %v455 = vld [vmem:[#allocation5 + $0x860] sm:$0xff]
    %v456 = vld [vmem:[#allocation5 + $0x868] sm:$0xff]
    %v457 = vld [vmem:[#allocation5 + $0x870] sm:$0xff]
    %v458 = vld [vmem:[#allocation5 + $0x878] sm:$0xff]
    %v459 = vld [vmem:[#allocation5 + $0x880] sm:$0xff]
    %v460 = vld [vmem:[#allocation5 + $0x888] sm:$0xff]
    %v461 = vld [vmem:[#allocation5 + $0x890] sm:$0xff]
    %v462 = vld [vmem:[#allocation5 + $0x898] sm:$0xff]
    %v463 = vld [vmem:[#allocation5 + $0x8a0] sm:$0xff]
    %v464 = vld [vmem:[#allocation5 + $0x8a8] sm:$0xff]
    %v465 = vld [vmem:[#allocation5 + $0x8b0] sm:$0xff]
    %v466 = vld [vmem:[#allocation5 + $0x8b8] sm:$0xff]
    %v467 = vld [vmem:[#allocation5 + $0x8c0] sm:$0xff]
    %v468 = vld [vmem:[#allocation5 + $0x8c8] sm:$0xff]
    %v469 = vld [vmem:[#allocation5 + $0x8d0] sm:$0xff]
    %v470 = vld [vmem:[#allocation5 + $0x8d8] sm:$0xff]
    %v471 = vld [vmem:[#allocation5 + $0x8e0] sm:$0xff]
    %v472 = vld [vmem:[#allocation5 + $0x8e8] sm:$0xff]
    %v473 = vld [vmem:[#allocation5 + $0x8f0] sm:$0xff]
    %v474 = vld [vmem:[#allocation5 + $0x8f8] sm:$0xff]
    %v475 = vld [vmem:[#allocation5 + $0x900] sm:$0xff]
    %v476 = vld [vmem:[#allocation5 + $0x908] sm:$0xff]
    %v477 = vld [vmem:[#allocation5 + $0x910] sm:$0xff]
    %v478 = vld [vmem:[#allocation5 + $0x918] sm:$0xff]
    %v479 = vld [vmem:[#allocation5 + $0x920] sm:$0xff]
    %v480 = vld [vmem:[#allocation5 + $0x928] sm:$0xff]
    %v481 = vld [vmem:[#allocation5 + $0x930] sm:$0xff]
    %v482 = vld [vmem:[#allocation5 + $0x938] sm:$0xff]
    %v483 = vld [vmem:[#allocation5 + $0x940] sm:$0xff]
    %v484 = vld [vmem:[#allocation5 + $0x948] sm:$0xff]
    %v485 = vld [vmem:[#allocation5 + $0x950] sm:$0xff]
    %v486 = vld [vmem:[#allocation5 + $0x958] sm:$0xff]
    %v487 = vld [vmem:[#allocation5 + $0x960] sm:$0xff]
    %v488 = vld [vmem:[#allocation5 + $0x968] sm:$0xff]
    %v489 = vld [vmem:[#allocation5 + $0x970] sm:$0xff]
    %v490 = vld [vmem:[#allocation5 + $0x978] sm:$0xff]
    %v491 = vld [vmem:[#allocation5 + $0x980] sm:$0xff]
    %v492 = vld [vmem:[#allocation5 + $0x988] sm:$0xff]
    %v493 = vld [vmem:[#allocation5 + $0x990] sm:$0xff]
    %v494 = vld [vmem:[#allocation5 + $0x998] sm:$0xff]
    %v495 = vld [vmem:[#allocation5 + $0x9a0] sm:$0xff]
    %v496 = vld [vmem:[#allocation5 + $0x9a8] sm:$0xff]
    %v497 = vld [vmem:[#allocation5 + $0x9b0] sm:$0xff]
    %v498 = vld [vmem:[#allocation5 + $0x9b8] sm:$0xff]
    %v499 = vld [vmem:[#allocation5 + $0x9c0] sm:$0xff]
    %v500 = vld [vmem:[#allocation5 + $0x9c8] sm:$0xff]
    %v501 = vld [vmem:[#allocation5 + $0x9d0] sm:$0xff]
    %v502 = vld [vmem:[#allocation5 + $0x9d8] sm:$0xff]
    %v503 = vld [vmem:[#allocation5 + $0x9e0] sm:$0xff]
    %v504 = vld [vmem:[#allocation5 + $0x9e8] sm:$0xff]
    %v505 = vld [vmem:[#allocation5 + $0x9f0] sm:$0xff]
    %v506 = vld [vmem:[#allocation5 + $0x9f8] sm:$0xff]
    %v507 = vld [vmem:[#allocation5 + $0xa00] sm:$0xff]
    %v508 = vld [vmem:[#allocation5 + $0xa08] sm:$0xff]
    %v509 = vld [vmem:[#allocation5 + $0xa10] sm:$0xff]
    %v510 = vld [vmem:[#allocation5 + $0xa18] sm:$0xff]
    %v511 = vld [vmem:[#allocation5 + $0xa20] sm:$0xff]
    %v512 = vld [vmem:[#allocation5 + $0xa28] sm:$0xff]
    %v513 = vld [vmem:[#allocation5 + $0xa30] sm:$0xff]
    %v514 = vld [vmem:[#allocation5 + $0xa38] sm:$0xff]
    %v515 = vld [vmem:[#allocation5 + $0xa40] sm:$0xff]
    %v516 = vld [vmem:[#allocation5 + $0xa48] sm:$0xff]
    %v517 = vld [vmem:[#allocation5 + $0xa50] sm:$0xff]
    %v518 = vld [vmem:[#allocation5 + $0xa58] sm:$0xff]
    %v519 = vld [vmem:[#allocation5 + $0xa60] sm:$0xff]
    %v520 = vld [vmem:[#allocation5 + $0xa68] sm:$0xff]
    %v521 = vld [vmem:[#allocation5 + $0xa70] sm:$0xff]
    %v522 = vld [vmem:[#allocation5 + $0xa78] sm:$0xff]
    %v523 = vld [vmem:[#allocation5 + $0xa80] sm:$0xff]
    %v524 = vld [vmem:[#allocation5 + $0xa88] sm:$0xff]
    %v525 = vld [vmem:[#allocation5 + $0xa90] sm:$0xff]
    %v526 = vld [vmem:[#allocation5 + $0xa98] sm:$0xff]
    %v527 = vld [vmem:[#allocation5 + $0xaa0] sm:$0xff]
    %v528 = vld [vmem:[#allocation5 + $0xaa8] sm:$0xff]
    %v529 = vld [vmem:[#allocation5 + $0xab0] sm:$0xff]
    %v530 = vld [vmem:[#allocation5 + $0xab8] sm:$0xff]
    %v531 = vld [vmem:[#allocation5 + $0xac0] sm:$0xff]
    %v532 = vld [vmem:[#allocation5 + $0xac8] sm:$0xff]
    %v533 = vld [vmem:[#allocation5 + $0xad0] sm:$0xff]
    %v534 = vld [vmem:[#allocation5 + $0xad8] sm:$0xff]
    %v535 = vld [vmem:[#allocation5 + $0xae0] sm:$0xff]
    %v536 = vld [vmem:[#allocation5 + $0xae8] sm:$0xff]
    %v537 = vld [vmem:[#allocation5 + $0xaf0] sm:$0xff]
    %v538 = vld [vmem:[#allocation5 + $0xaf8] sm:$0xff]
    %v539 = vld [vmem:[#allocation5 + $0xb00] sm:$0xff]
    %v540 = vld [vmem:[#allocation5 + $0xb08] sm:$0xff]
    %v541 = vld [vmem:[#allocation5 + $0xb10] sm:$0xff]
    %v542 = vld [vmem:[#allocation5 + $0xb18] sm:$0xff]
    %v543 = vld [vmem:[#allocation5 + $0xb20] sm:$0xff]
    %v544 = vld [vmem:[#allocation5 + $0xb28] sm:$0xff]
    %v545 = vld [vmem:[#allocation5 + $0xb30] sm:$0xff]
    %v546 = vld [vmem:[#allocation5 + $0xb38] sm:$0xff]
    %v547 = vld [vmem:[#allocation5 + $0xb40] sm:$0xff]
    %v548 = vld [vmem:[#allocation5 + $0xb48] sm:$0xff]
    %v549 = vld [vmem:[#allocation5 + $0xb50] sm:$0xff]
    %v550 = vld [vmem:[#allocation5 + $0xb58] sm:$0xff]
    %v551 = vld [vmem:[#allocation5 + $0xb60] sm:$0xff]
    %v552 = vld [vmem:[#allocation5 + $0xb68] sm:$0xff]
    %v553 = vld [vmem:[#allocation5 + $0xb70] sm:$0xff]
    %v554 = vld [vmem:[#allocation5 + $0xb78] sm:$0xff]
    %v555 = vld [vmem:[#allocation5 + $0xb80] sm:$0xff]
    %v556 = vld [vmem:[#allocation5 + $0xb88] sm:$0xff]
    %v557 = vld [vmem:[#allocation5 + $0xb90] sm:$0xff]
    %v558 = vld [vmem:[#allocation5 + $0xb98] sm:$0xff]
    %v559 = vld [vmem:[#allocation5 + $0xba0] sm:$0xff]
    %v560 = vld [vmem:[#allocation5 + $0xba8] sm:$0xff]
    %v561 = vld [vmem:[#allocation5 + $0xbb0] sm:$0xff]
    %v562 = vld [vmem:[#allocation5 + $0xbb8] sm:$0xff]
    %v563 = vld [vmem:[#allocation5 + $0xbc0] sm:$0xff]
    %v564 = vld [vmem:[#allocation5 + $0xbc8] sm:$0xff]
    %v565 = vld [vmem:[#allocation5 + $0xbd0] sm:$0xff]
    %v566 = vld [vmem:[#allocation5 + $0xbd8] sm:$0xff]
    %v567 = vld [vmem:[#allocation5 + $0xbe0] sm:$0xff]
    %v568 = vld [vmem:[#allocation5 + $0xbe8] sm:$0xff]
    %v569 = vld [vmem:[#allocation5 + $0xbf0] sm:$0xff]
    %v570 = vld [vmem:[#allocation5 + $0xbf8] sm:$0xff]
    %v571 = vld [vmem:[#allocation5 + $0xc00] sm:$0xff]
    %v572 = vld [vmem:[#allocation5 + $0xc08] sm:$0xff]
    %v573 = vld [vmem:[#allocation5 + $0xc10] sm:$0xff]
    %v574 = vld [vmem:[#allocation5 + $0xc18] sm:$0xff]
    %v575 = vld [vmem:[#allocation5 + $0xc20] sm:$0xff]
    %v576 = vld [vmem:[#allocation5 + $0xc28] sm:$0xff]
    %v577 = vld [vmem:[#allocation5 + $0xc30] sm:$0xff]
    %v578 = vld [vmem:[#allocation5 + $0xc38] sm:$0xff]
    %v579 = vld [vmem:[#allocation7] sm:$0xff]
    %v581 = vlaneseq
    %v582 = vshrl.u32 %v581, 7
    %v583 = vsub.s32 0, %v582
    %v584 = vrot.slane %v579, %v583
    %v585 = vlaneseq
    %v586 = vshrl.u32 %v585, 7
    %v587 = vsub.s32 1, %v586
    %v588 = vrot.slane %v579, %v587
    %v589 = vlaneseq
    %v590 = vshrl.u32 %v589, 7
    %v591 = vsub.s32 2, %v590
    %v592 = vrot.slane %v579, %v591
    %v593 = vlaneseq
    %v594 = vshrl.u32 %v593, 7
    %v595 = vsub.s32 3, %v594
    %v596 = vrot.slane %v579, %v595
    %v597 = vlaneseq
    %v598 = vshrl.u32 %v597, 7
    %v599 = vsub.s32 4, %v598
    %v600 = vrot.slane %v579, %v599
    %v601 = vlaneseq
    %v602 = vshrl.u32 %v601, 7
    %v603 = vsub.s32 5, %v602
    %v604 = vrot.slane %v579, %v603
    %v605 = vlaneseq
    %v606 = vshrl.u32 %v605, 7
    %v607 = vsub.s32 6, %v606
    %v608 = vrot.slane %v579, %v607
    %v609 = vlaneseq
    %v610 = vshrl.u32 %v609, 7
    %v611 = vsub.s32 7, %v610
    %v612 = vrot.slane %v579, %v611
    %v629 = vunpack.c.l.b16 %v179
    %v630 = vunpack.c.h.b16 %v179
    %v631 = vunpack.c.l.b16 %v180
    %v632 = vunpack.c.h.b16 %v180
    %v633 = vunpack.c.l.b16 %v181
    %v634 = vunpack.c.h.b16 %v181
    %v635 = vunpack.c.l.b16 %v182
    %v636 = vunpack.c.l.b16 %v183
    %v637 = vunpack.c.h.b16 %v183
    %v638 = vunpack.c.l.b16 %v184
    %v639 = vunpack.c.h.b16 %v184
    %v640 = vunpack.c.l.b16 %v185
    %v641 = vunpack.c.h.b16 %v185
    %v642 = vunpack.c.l.b16 %v186
    %v643 = vpack.c.b16 %v636, %v629
    %v644 = vpack.c.b16 %v637, %v630
    %v645 = vpack.c.b16 %v638, %v631
    %v646 = vpack.c.b16 %v639, %v632
    %v647 = vpack.c.b16 %v640, %v633
    %v648 = vpack.c.b16 %v641, %v634
    %v649 = vpack.c.b16 %v642, %v635
    %v1048 = vunpack.c.l.b16 %v187
    %v1049 = vunpack.c.h.b16 %v187
    %v1050 = vunpack.c.l.b16 %v188
    %v1051 = vunpack.c.h.b16 %v188
    %v1052 = vunpack.c.l.b16 %v189
    %v1053 = vunpack.c.h.b16 %v189
    %v1054 = vunpack.c.l.b16 %v190
    %v1055 = vunpack.c.h.b16 %v190
    %v1056 = vunpack.c.l.b16 %v191
    %v1057 = vunpack.c.h.b16 %v191
    %v1058 = vunpack.c.l.b16 %v192
    %v1059 = vunpack.c.h.b16 %v192
    %v1060 = vunpack.c.l.b16 %v193
    %v1061 = vunpack.c.h.b16 %v193
    %v1062 = vunpack.c.l.b16 %v194
    %v1063 = vunpack.c.h.b16 %v194
    %v1064 = vunpack.c.l.b16 %v195
    %v1065 = vunpack.c.h.b16 %v195
    %v1066 = vunpack.c.l.b16 %v196
    %v1067 = vunpack.c.h.b16 %v196
    %v1068 = vunpack.c.l.b16 %v197
    %v1069 = vunpack.c.h.b16 %v197
    %v1070 = vunpack.c.l.b16 %v198
    %v1071 = vunpack.c.h.b16 %v198
    %v1072 = vunpack.c.l.b16 %v199
    %v1073 = vunpack.c.h.b16 %v199
    %v1074 = vunpack.c.l.b16 %v200
    %v1075 = vunpack.c.h.b16 %v200
    %v1076 = vunpack.c.l.b16 %v201
    %v1077 = vunpack.c.h.b16 %v201
    %v1078 = vunpack.c.l.b16 %v202
    %v1079 = vunpack.c.h.b16 %v202
    %v1080 = vunpack.c.l.b16 %v203
    %v1081 = vunpack.c.h.b16 %v203
    %v1082 = vunpack.c.l.b16 %v204
    %v1083 = vunpack.c.h.b16 %v204
    %v1084 = vunpack.c.l.b16 %v205
    %v1085 = vunpack.c.h.b16 %v205
    %v1086 = vunpack.c.l.b16 %v206
    %v1087 = vunpack.c.h.b16 %v206
    %v1088 = vunpack.c.l.b16 %v207
    %v1089 = vunpack.c.h.b16 %v207
    %v1090 = vunpack.c.l.b16 %v208
    %v1091 = vunpack.c.h.b16 %v208
    %v1092 = vunpack.c.l.b16 %v209
    %v1093 = vunpack.c.h.b16 %v209
    %v1094 = vunpack.c.l.b16 %v210
    %v1095 = vunpack.c.h.b16 %v210
    %v1096 = vunpack.c.l.b16 %v211
    %v1097 = vunpack.c.h.b16 %v211
    %v1098 = vunpack.c.l.b16 %v212
    %v1099 = vunpack.c.h.b16 %v212
    %v1100 = vunpack.c.l.b16 %v213
    %v1101 = vunpack.c.h.b16 %v213
    %v1102 = vunpack.c.l.b16 %v214
    %v1103 = vunpack.c.h.b16 %v214
    %v1104 = vunpack.c.l.b16 %v215
    %v1105 = vunpack.c.h.b16 %v215
    %v1106 = vunpack.c.l.b16 %v216
    %v1107 = vunpack.c.h.b16 %v216
    %v1108 = vunpack.c.l.b16 %v217
    %v1109 = vunpack.c.h.b16 %v217
    %v1110 = vunpack.c.l.b16 %v218
    %v1111 = vunpack.c.h.b16 %v218
    %v1112 = vunpack.c.l.b16 %v219
    %v1113 = vunpack.c.h.b16 %v219
    %v1114 = vunpack.c.l.b16 %v220
    %v1115 = vunpack.c.h.b16 %v220
    %v1116 = vunpack.c.l.b16 %v221
    %v1117 = vunpack.c.h.b16 %v221
    %v1118 = vunpack.c.l.b16 %v222
    %v1119 = vunpack.c.h.b16 %v222
    %v1120 = vunpack.c.l.b16 %v223
    %v1121 = vunpack.c.h.b16 %v223
    %v1122 = vunpack.c.l.b16 %v224
    %v1123 = vunpack.c.h.b16 %v224
    %v1124 = vunpack.c.l.b16 %v225
    %v1125 = vunpack.c.h.b16 %v225
    %v1126 = vunpack.c.l.b16 %v226
    %v1127 = vunpack.c.h.b16 %v226
    %v1128 = vunpack.c.l.b16 %v227
    %v1129 = vunpack.c.h.b16 %v227
    %v1130 = vunpack.c.l.b16 %v228
    %v1131 = vunpack.c.h.b16 %v228
    %v1132 = vunpack.c.l.b16 %v229
    %v1133 = vunpack.c.h.b16 %v229
    %v1134 = vunpack.c.l.b16 %v230
    %v1135 = vunpack.c.h.b16 %v230
    %v1136 = vunpack.c.l.b16 %v231
    %v1137 = vunpack.c.h.b16 %v231
    %v1138 = vunpack.c.l.b16 %v232
    %v1139 = vunpack.c.h.b16 %v232
    %v1140 = vunpack.c.l.b16 %v233
    %v1141 = vunpack.c.h.b16 %v233
    %v1142 = vunpack.c.l.b16 %v234
    %v1143 = vunpack.c.h.b16 %v234
    %v1144 = vunpack.c.l.b16 %v235
    %v1145 = vunpack.c.h.b16 %v235
    %v1146 = vunpack.c.l.b16 %v236
    %v1147 = vunpack.c.h.b16 %v236
    %v1148 = vunpack.c.l.b16 %v237
    %v1149 = vunpack.c.h.b16 %v237
    %v1150 = vunpack.c.l.b16 %v238
    %v1151 = vunpack.c.h.b16 %v238
    %v1152 = vunpack.c.l.b16 %v239
    %v1153 = vunpack.c.h.b16 %v239
    %v1154 = vunpack.c.l.b16 %v240
    %v1155 = vunpack.c.h.b16 %v240
    %v1156 = vunpack.c.l.b16 %v241
    %v1157 = vunpack.c.h.b16 %v241
    %v1158 = vunpack.c.l.b16 %v242
    %v1159 = vunpack.c.h.b16 %v242
    %v1160 = vunpack.c.l.b16 %v243
    %v1161 = vunpack.c.h.b16 %v243
    %v1162 = vunpack.c.l.b16 %v244
    %v1163 = vunpack.c.h.b16 %v244
    %v1164 = vunpack.c.l.b16 %v245
    %v1165 = vunpack.c.h.b16 %v245
    %v1166 = vunpack.c.l.b16 %v246
    %v1167 = vunpack.c.h.b16 %v246
    %v1168 = vunpack.c.l.b16 %v247
    %v1169 = vunpack.c.h.b16 %v247
    %v1170 = vunpack.c.l.b16 %v248
    %v1171 = vunpack.c.h.b16 %v248
    %v1172 = vunpack.c.l.b16 %v249
    %v1173 = vunpack.c.h.b16 %v249
    %v1174 = vunpack.c.l.b16 %v250
    %v1175 = vunpack.c.h.b16 %v250
    %v1176 = vunpack.c.l.b16 %v251
    %v1177 = vunpack.c.h.b16 %v251
    %v1178 = vunpack.c.l.b16 %v252
    %v1179 = vunpack.c.h.b16 %v252
    %v1180 = vunpack.c.l.b16 %v253
    %v1181 = vunpack.c.h.b16 %v253
    %v1182 = vunpack.c.l.b16 %v254
    %v1183 = vunpack.c.h.b16 %v254
    %v1184 = vunpack.c.l.b16 %v255
    %v1185 = vunpack.c.h.b16 %v255
    %v1186 = vunpack.c.l.b16 %v256
    %v1187 = vunpack.c.h.b16 %v256
    %v1188 = vunpack.c.l.b16 %v257
    %v1189 = vunpack.c.h.b16 %v257
    %v1190 = vunpack.c.l.b16 %v258
    %v1191 = vunpack.c.h.b16 %v258
    %v1192 = vunpack.c.l.b16 %v259
    %v1193 = vunpack.c.h.b16 %v259
    %v1194 = vunpack.c.l.b16 %v260
    %v1195 = vunpack.c.h.b16 %v260
    %v1196 = vunpack.c.l.b16 %v261
    %v1197 = vunpack.c.h.b16 %v261
    %v1198 = vunpack.c.l.b16 %v262
    %v1199 = vunpack.c.h.b16 %v262
    %v1200 = vunpack.c.l.b16 %v263
    %v1201 = vunpack.c.h.b16 %v263
    %v1202 = vunpack.c.l.b16 %v264
    %v1203 = vunpack.c.h.b16 %v264
    %v1204 = vunpack.c.l.b16 %v265
    %v1205 = vunpack.c.h.b16 %v265
    %v1206 = vunpack.c.l.b16 %v266
    %v1207 = vunpack.c.h.b16 %v266
    %v1208 = vunpack.c.l.b16 %v267
    %v1209 = vunpack.c.h.b16 %v267
    %v1210 = vunpack.c.l.b16 %v268
    %v1211 = vunpack.c.h.b16 %v268
    %v1212 = vunpack.c.l.b16 %v269
    %v1213 = vunpack.c.h.b16 %v269
    %v1214 = vunpack.c.l.b16 %v270
    %v1215 = vunpack.c.h.b16 %v270
    %v1216 = vunpack.c.l.b16 %v271
    %v1217 = vunpack.c.h.b16 %v271
    %v1218 = vunpack.c.l.b16 %v272
    %v1219 = vunpack.c.h.b16 %v272
    %v1220 = vunpack.c.l.b16 %v273
    %v1221 = vunpack.c.h.b16 %v273
    %v1222 = vunpack.c.l.b16 %v274
    %v1223 = vunpack.c.h.b16 %v274
    %v1224 = vunpack.c.l.b16 %v275
    %v1225 = vunpack.c.h.b16 %v275
    %v1226 = vunpack.c.l.b16 %v276
    %v1227 = vunpack.c.h.b16 %v276
    %v1228 = vunpack.c.l.b16 %v277
    %v1229 = vunpack.c.h.b16 %v277
    %v1230 = vunpack.c.l.b16 %v278
    %v1231 = vunpack.c.h.b16 %v278
    %v1232 = vunpack.c.l.b16 %v279
    %v1233 = vunpack.c.h.b16 %v279
    %v1234 = vunpack.c.l.b16 %v280
    %v1235 = vunpack.c.h.b16 %v280
    %v1236 = vunpack.c.l.b16 %v281
    %v1237 = vunpack.c.h.b16 %v281
    %v1238 = vunpack.c.l.b16 %v282
    %v1239 = vunpack.c.h.b16 %v282
    %v1240 = vunpack.c.l.b16 %v283
    %v1241 = vunpack.c.h.b16 %v283
    %v1242 = vunpack.c.l.b16 %v284
    %v1243 = vunpack.c.h.b16 %v284
    %v1244 = vunpack.c.l.b16 %v285
    %v1245 = vunpack.c.h.b16 %v285
    %v1246 = vunpack.c.l.b16 %v286
    %v1247 = vunpack.c.h.b16 %v286
    %v1248 = vunpack.c.l.b16 %v287
    %v1249 = vunpack.c.h.b16 %v287
    %v1250 = vunpack.c.l.b16 %v288
    %v1251 = vunpack.c.h.b16 %v288
    %v1252 = vunpack.c.l.b16 %v289
    %v1253 = vunpack.c.h.b16 %v289
    %v1254 = vunpack.c.l.b16 %v290
    %v1255 = vunpack.c.h.b16 %v290
    %v1256 = vunpack.c.l.b16 %v291
    %v1257 = vunpack.c.h.b16 %v291
    %v1258 = vunpack.c.l.b16 %v292
    %v1259 = vunpack.c.h.b16 %v292
    %v1260 = vunpack.c.l.b16 %v293
    %v1261 = vunpack.c.h.b16 %v293
    %v1262 = vunpack.c.l.b16 %v294
    %v1263 = vunpack.c.h.b16 %v294
    %v1264 = vunpack.c.l.b16 %v295
    %v1265 = vunpack.c.h.b16 %v295
    %v1266 = vunpack.c.l.b16 %v296
    %v1267 = vunpack.c.h.b16 %v296
    %v1268 = vunpack.c.l.b16 %v297
    %v1269 = vunpack.c.h.b16 %v297
    %v1270 = vunpack.c.l.b16 %v298
    %v1271 = vunpack.c.h.b16 %v298
    %v1272 = vunpack.c.l.b16 %v299
    %v1273 = vunpack.c.h.b16 %v299
    %v1274 = vunpack.c.l.b16 %v300
    %v1275 = vunpack.c.h.b16 %v300
    %v1276 = vunpack.c.l.b16 %v301
    %v1277 = vunpack.c.h.b16 %v301
    %v1278 = vunpack.c.l.b16 %v302
    %v1279 = vunpack.c.h.b16 %v302
    %v1280 = vunpack.c.l.b16 %v303
    %v1281 = vunpack.c.h.b16 %v303
    %v1282 = vunpack.c.l.b16 %v304
    %v1283 = vunpack.c.h.b16 %v304
    %v1284 = vunpack.c.l.b16 %v305
    %v1285 = vunpack.c.h.b16 %v305
    %v1286 = vunpack.c.l.b16 %v306
    %v1287 = vunpack.c.h.b16 %v306
    %v1288 = vunpack.c.l.b16 %v307
    %v1289 = vunpack.c.h.b16 %v307
    %v1290 = vunpack.c.l.b16 %v308
    %v1291 = vunpack.c.h.b16 %v308
    %v1292 = vunpack.c.l.b16 %v309
    %v1293 = vunpack.c.h.b16 %v309
    %v1294 = vunpack.c.l.b16 %v310
    %v1295 = vunpack.c.h.b16 %v310
    %v1296 = vunpack.c.l.b16 %v311
    %v1297 = vunpack.c.h.b16 %v311
    %v1298 = vunpack.c.l.b16 %v312
    %v1299 = vunpack.c.h.b16 %v312
    %v1300 = vunpack.c.l.b16 %v313
    %v1301 = vunpack.c.h.b16 %v313
    %v1302 = vunpack.c.l.b16 %v314
    %v1303 = vunpack.c.h.b16 %v314
    %v1304 = vunpack.c.l.b16 %v315
    %v1305 = vunpack.c.h.b16 %v315
    %v1306 = vunpack.c.l.b16 %v316
    %v1307 = vunpack.c.h.b16 %v316
    %v1308 = vunpack.c.l.b16 %v317
    %v1309 = vunpack.c.h.b16 %v317
    %v1310 = vunpack.c.l.b16 %v318
    %v1311 = vunpack.c.h.b16 %v318
    %v1312 = vunpack.c.l.b16 %v319
    %v1313 = vunpack.c.h.b16 %v319
    %v1314 = vunpack.c.l.b16 %v320
    %v1315 = vunpack.c.h.b16 %v320
    %v1316 = vunpack.c.l.b16 %v321
    %v1317 = vunpack.c.h.b16 %v321
    %v1318 = vunpack.c.l.b16 %v322
    %v1319 = vunpack.c.h.b16 %v322
    %v1320 = vunpack.c.l.b16 %v323
    %v1321 = vunpack.c.h.b16 %v323
    %v1322 = vunpack.c.l.b16 %v324
    %v1323 = vunpack.c.h.b16 %v324
    %v1324 = vunpack.c.l.b16 %v325
    %v1325 = vunpack.c.h.b16 %v325
    %v1326 = vunpack.c.l.b16 %v326
    %v1327 = vunpack.c.h.b16 %v326
    %v1328 = vunpack.c.l.b16 %v327
    %v1329 = vunpack.c.h.b16 %v327
    %v1330 = vunpack.c.l.b16 %v328
    %v1331 = vunpack.c.h.b16 %v328
    %v1332 = vunpack.c.l.b16 %v329
    %v1333 = vunpack.c.h.b16 %v329
    %v1334 = vunpack.c.l.b16 %v330
    %v1335 = vunpack.c.h.b16 %v330
    %v1336 = vunpack.c.l.b16 %v331
    %v1337 = vunpack.c.h.b16 %v331
    %v1338 = vunpack.c.l.b16 %v332
    %v1339 = vunpack.c.h.b16 %v332
    %v1340 = vunpack.c.l.b16 %v333
    %v1341 = vunpack.c.h.b16 %v333
    %v1342 = vunpack.c.l.b16 %v334
    %v1343 = vunpack.c.h.b16 %v334
    %v1344 = vunpack.c.l.b16 %v335
    %v1345 = vunpack.c.h.b16 %v335
    %v1346 = vunpack.c.l.b16 %v336
    %v1347 = vunpack.c.h.b16 %v336
    %v1348 = vunpack.c.l.b16 %v337
    %v1349 = vunpack.c.h.b16 %v337
    %v1350 = vunpack.c.l.b16 %v338
    %v1351 = vunpack.c.h.b16 %v338
    %v1352 = vunpack.c.l.b16 %v339
    %v1353 = vunpack.c.h.b16 %v339
    %v1354 = vunpack.c.l.b16 %v340
    %v1355 = vunpack.c.h.b16 %v340
    %v1356 = vunpack.c.l.b16 %v341
    %v1357 = vunpack.c.h.b16 %v341
    %v1358 = vunpack.c.l.b16 %v342
    %v1359 = vunpack.c.h.b16 %v342
    %v1360 = vunpack.c.l.b16 %v343
    %v1361 = vunpack.c.h.b16 %v343
    %v1362 = vunpack.c.l.b16 %v344
    %v1363 = vunpack.c.h.b16 %v344
    %v1364 = vunpack.c.l.b16 %v345
    %v1365 = vunpack.c.h.b16 %v345
    %v1366 = vunpack.c.l.b16 %v346
    %v1367 = vunpack.c.h.b16 %v346
    %v1368 = vunpack.c.l.b16 %v347
    %v1369 = vunpack.c.h.b16 %v347
    %v1370 = vunpack.c.l.b16 %v348
    %v1371 = vunpack.c.h.b16 %v348
    %v1372 = vunpack.c.l.b16 %v349
    %v1373 = vunpack.c.h.b16 %v349
    %v1374 = vunpack.c.l.b16 %v350
    %v1375 = vunpack.c.h.b16 %v350
    %v1376 = vunpack.c.l.b16 %v351
    %v1377 = vunpack.c.h.b16 %v351
    %v1378 = vunpack.c.l.b16 %v352
    %v1379 = vunpack.c.h.b16 %v352
    %v1380 = vunpack.c.l.b16 %v353
    %v1381 = vunpack.c.h.b16 %v353
    %v1382 = vunpack.c.l.b16 %v354
    %v1383 = vunpack.c.h.b16 %v354
    %v1384 = vunpack.c.l.b16 %v355
    %v1385 = vunpack.c.h.b16 %v355
    %v1386 = vunpack.c.l.b16 %v356
    %v1387 = vunpack.c.h.b16 %v356
    %v1388 = vunpack.c.l.b16 %v357
    %v1389 = vunpack.c.h.b16 %v357
    %v1390 = vunpack.c.l.b16 %v358
    %v1391 = vunpack.c.h.b16 %v358
    %v1392 = vunpack.c.l.b16 %v359
    %v1393 = vunpack.c.h.b16 %v359
    %v1394 = vunpack.c.l.b16 %v360
    %v1395 = vunpack.c.h.b16 %v360
    %v1396 = vunpack.c.l.b16 %v361
    %v1397 = vunpack.c.h.b16 %v361
    %v1398 = vunpack.c.l.b16 %v362
    %v1399 = vunpack.c.h.b16 %v362
    %v1400 = vunpack.c.l.b16 %v363
    %v1401 = vunpack.c.h.b16 %v363
    %v1402 = vunpack.c.l.b16 %v364
    %v1403 = vunpack.c.h.b16 %v364
    %v1404 = vunpack.c.l.b16 %v365
    %v1405 = vunpack.c.h.b16 %v365
    %v1406 = vunpack.c.l.b16 %v366
    %v1407 = vunpack.c.h.b16 %v366
    %v1408 = vunpack.c.l.b16 %v367
    %v1409 = vunpack.c.h.b16 %v367
    %v1410 = vunpack.c.l.b16 %v368
    %v1411 = vunpack.c.h.b16 %v368
    %v1412 = vunpack.c.l.b16 %v369
    %v1413 = vunpack.c.h.b16 %v369
    %v1414 = vunpack.c.l.b16 %v370
    %v1415 = vunpack.c.h.b16 %v370
    %v1416 = vunpack.c.l.b16 %v371
    %v1417 = vunpack.c.h.b16 %v371
    %v1418 = vunpack.c.l.b16 %v372
    %v1419 = vunpack.c.h.b16 %v372
    %v1420 = vunpack.c.l.b16 %v373
    %v1421 = vunpack.c.h.b16 %v373
    %v1422 = vunpack.c.l.b16 %v374
    %v1423 = vunpack.c.h.b16 %v374
    %v1424 = vunpack.c.l.b16 %v375
    %v1425 = vunpack.c.h.b16 %v375
    %v1426 = vunpack.c.l.b16 %v376
    %v1427 = vunpack.c.h.b16 %v376
    %v1428 = vunpack.c.l.b16 %v377
    %v1429 = vunpack.c.h.b16 %v377
    %v1430 = vunpack.c.l.b16 %v378
    %v1431 = vunpack.c.h.b16 %v378
    %v1432 = vunpack.c.l.b16 %v379
    %v1433 = vunpack.c.h.b16 %v379
    %v1434 = vunpack.c.l.b16 %v380
    %v1435 = vunpack.c.h.b16 %v380
    %v1436 = vunpack.c.l.b16 %v381
    %v1437 = vunpack.c.h.b16 %v381
    %v1438 = vunpack.c.l.b16 %v382
    %v1439 = vunpack.c.h.b16 %v382
    %v1440 = vunpack.c.l.b16 %v383
    %v1441 = vunpack.c.h.b16 %v383
    %v1442 = vunpack.c.l.b16 %v384
    %v1443 = vunpack.c.h.b16 %v384
    %v1444 = vunpack.c.l.b16 %v385
    %v1445 = vunpack.c.h.b16 %v385
    %v1446 = vunpack.c.l.b16 %v386
    %v1447 = vunpack.c.h.b16 %v386
    %v1448 = vunpack.c.l.b16 %v387
    %v1449 = vunpack.c.h.b16 %v387
    %v1450 = vunpack.c.l.b16 %v388
    %v1451 = vunpack.c.h.b16 %v388
    %v1452 = vunpack.c.l.b16 %v389
    %v1453 = vunpack.c.h.b16 %v389
    %v1454 = vunpack.c.l.b16 %v390
    %v1455 = vunpack.c.h.b16 %v390
    %v1456 = vunpack.c.l.b16 %v391
    %v1457 = vunpack.c.h.b16 %v391
    %v1458 = vunpack.c.l.b16 %v392
    %v1459 = vunpack.c.h.b16 %v392
    %v1460 = vunpack.c.l.b16 %v393
    %v1461 = vunpack.c.h.b16 %v393
    %v1462 = vunpack.c.l.b16 %v394
    %v1463 = vunpack.c.h.b16 %v394
    %v1464 = vunpack.c.l.b16 %v395
    %v1465 = vunpack.c.h.b16 %v395
    %v1466 = vunpack.c.l.b16 %v396
    %v1467 = vunpack.c.h.b16 %v396
    %v1468 = vunpack.c.l.b16 %v397
    %v1469 = vunpack.c.h.b16 %v397
    %v1470 = vunpack.c.l.b16 %v398
    %v1471 = vunpack.c.h.b16 %v398
    %v1472 = vunpack.c.l.b16 %v399
    %v1473 = vunpack.c.h.b16 %v399
    %v1474 = vunpack.c.l.b16 %v400
    %v1475 = vunpack.c.h.b16 %v400
    %v1476 = vunpack.c.l.b16 %v401
    %v1477 = vunpack.c.h.b16 %v401
    %v1478 = vunpack.c.l.b16 %v402
    %v1479 = vunpack.c.h.b16 %v402
    %v1480 = vunpack.c.l.b16 %v403
    %v1481 = vunpack.c.h.b16 %v403
    %v1482 = vunpack.c.l.b16 %v404
    %v1483 = vunpack.c.h.b16 %v404
    %v1484 = vunpack.c.l.b16 %v405
    %v1485 = vunpack.c.h.b16 %v405
    %v1486 = vunpack.c.l.b16 %v406
    %v1487 = vunpack.c.h.b16 %v406
    %v1488 = vunpack.c.l.b16 %v407
    %v1489 = vunpack.c.h.b16 %v407
    %v1490 = vunpack.c.l.b16 %v408
    %v1491 = vunpack.c.h.b16 %v408
    %v1492 = vunpack.c.l.b16 %v409
    %v1493 = vunpack.c.h.b16 %v409
    %v1494 = vunpack.c.l.b16 %v410
    %v1495 = vunpack.c.h.b16 %v410
    %v1496 = vunpack.c.l.b16 %v411
    %v1497 = vunpack.c.h.b16 %v411
    %v1498 = vunpack.c.l.b16 %v412
    %v1499 = vunpack.c.h.b16 %v412
    %v1500 = vunpack.c.l.b16 %v413
    %v1501 = vunpack.c.h.b16 %v413
    %v1502 = vunpack.c.l.b16 %v414
    %v1503 = vunpack.c.h.b16 %v414
    %v1504 = vunpack.c.l.b16 %v415
    %v1505 = vunpack.c.h.b16 %v415
    %v1506 = vunpack.c.l.b16 %v416
    %v1507 = vunpack.c.h.b16 %v416
    %v1508 = vunpack.c.l.b16 %v417
    %v1509 = vunpack.c.h.b16 %v417
    %v1510 = vunpack.c.l.b16 %v418
    %v1511 = vunpack.c.h.b16 %v418
    %v1512 = vunpack.c.l.b16 %v419
    %v1513 = vunpack.c.h.b16 %v419
    %v1514 = vunpack.c.l.b16 %v420
    %v1515 = vunpack.c.h.b16 %v420
    %v1516 = vunpack.c.l.b16 %v421
    %v1517 = vunpack.c.h.b16 %v421
    %v1518 = vunpack.c.l.b16 %v422
    %v1519 = vunpack.c.h.b16 %v422
    %v1520 = vunpack.c.l.b16 %v423
    %v1521 = vunpack.c.h.b16 %v423
    %v1522 = vunpack.c.l.b16 %v424
    %v1523 = vunpack.c.h.b16 %v424
    %v1524 = vunpack.c.l.b16 %v425
    %v1525 = vunpack.c.h.b16 %v425
    %v1526 = vunpack.c.l.b16 %v426
    %v1527 = vunpack.c.h.b16 %v426
    %v1528 = vunpack.c.l.b16 %v427
    %v1529 = vunpack.c.h.b16 %v427
    %v1530 = vunpack.c.l.b16 %v428
    %v1531 = vunpack.c.h.b16 %v428
    %v1532 = vunpack.c.l.b16 %v429
    %v1533 = vunpack.c.h.b16 %v429
    %v1534 = vunpack.c.l.b16 %v430
    %v1535 = vunpack.c.h.b16 %v430
    %v1536 = vunpack.c.l.b16 %v431
    %v1537 = vunpack.c.h.b16 %v431
    %v1538 = vunpack.c.l.b16 %v432
    %v1539 = vunpack.c.h.b16 %v432
    %v1540 = vunpack.c.l.b16 %v433
    %v1541 = vunpack.c.h.b16 %v433
    %v1542 = vunpack.c.l.b16 %v434
    %v1543 = vunpack.c.h.b16 %v434
    %v1544 = vunpack.c.l.b16 %v435
    %v1545 = vunpack.c.h.b16 %v435
    %v1546 = vunpack.c.l.b16 %v436
    %v1547 = vunpack.c.h.b16 %v436
    %v1548 = vunpack.c.l.b16 %v437
    %v1549 = vunpack.c.h.b16 %v437
    %v1550 = vunpack.c.l.b16 %v438
    %v1551 = vunpack.c.h.b16 %v438
    %v1552 = vunpack.c.l.b16 %v439
    %v1553 = vunpack.c.h.b16 %v439
    %v1554 = vunpack.c.l.b16 %v440
    %v1555 = vunpack.c.h.b16 %v440
    %v1556 = vunpack.c.l.b16 %v441
    %v1557 = vunpack.c.h.b16 %v441
    %v1558 = vunpack.c.l.b16 %v442
    %v1559 = vunpack.c.h.b16 %v442
    %v1560 = vunpack.c.l.b16 %v443
    %v1561 = vunpack.c.h.b16 %v443
    %v1562 = vunpack.c.l.b16 %v444
    %v1563 = vunpack.c.h.b16 %v444
    %v1564 = vunpack.c.l.b16 %v445
    %v1565 = vunpack.c.h.b16 %v445
    %v1566 = vunpack.c.l.b16 %v446
    %v1567 = vunpack.c.h.b16 %v446
    %v1568 = vunpack.c.l.b16 %v447
    %v1569 = vunpack.c.h.b16 %v447
    %v1570 = vunpack.c.l.b16 %v448
    %v1571 = vunpack.c.h.b16 %v448
    %v1572 = vunpack.c.l.b16 %v449
    %v1573 = vunpack.c.h.b16 %v449
    %v1574 = vunpack.c.l.b16 %v450
    %v1575 = vunpack.c.h.b16 %v450
    %v1576 = vunpack.c.l.b16 %v451
    %v1577 = vunpack.c.h.b16 %v451
    %v1578 = vunpack.c.l.b16 %v452
    %v1579 = vunpack.c.h.b16 %v452
    %v1580 = vunpack.c.l.b16 %v453
    %v1581 = vunpack.c.h.b16 %v453
    %v1582 = vunpack.c.l.b16 %v454
    %v1583 = vunpack.c.h.b16 %v454
    %v1584 = vunpack.c.l.b16 %v455
    %v1585 = vunpack.c.h.b16 %v455
    %v1586 = vunpack.c.l.b16 %v456
    %v1587 = vunpack.c.h.b16 %v456
    %v1588 = vunpack.c.l.b16 %v457
    %v1589 = vunpack.c.h.b16 %v457
    %v1590 = vunpack.c.l.b16 %v458
    %v1591 = vunpack.c.h.b16 %v458
    %v1592 = vunpack.c.l.b16 %v459
    %v1593 = vunpack.c.h.b16 %v459
    %v1594 = vunpack.c.l.b16 %v460
    %v1595 = vunpack.c.h.b16 %v460
    %v1596 = vunpack.c.l.b16 %v461
    %v1597 = vunpack.c.h.b16 %v461
    %v1598 = vunpack.c.l.b16 %v462
    %v1599 = vunpack.c.h.b16 %v462
    %v1600 = vunpack.c.l.b16 %v463
    %v1601 = vunpack.c.h.b16 %v463
    %v1602 = vunpack.c.l.b16 %v464
    %v1603 = vunpack.c.h.b16 %v464
    %v1604 = vunpack.c.l.b16 %v465
    %v1605 = vunpack.c.h.b16 %v465
    %v1606 = vunpack.c.l.b16 %v466
    %v1607 = vunpack.c.h.b16 %v466
    %v1608 = vunpack.c.l.b16 %v467
    %v1609 = vunpack.c.h.b16 %v467
    %v1610 = vunpack.c.l.b16 %v468
    %v1611 = vunpack.c.h.b16 %v468
    %v1612 = vunpack.c.l.b16 %v469
    %v1613 = vunpack.c.h.b16 %v469
    %v1614 = vunpack.c.l.b16 %v470
    %v1615 = vunpack.c.h.b16 %v470
    %v1616 = vunpack.c.l.b16 %v471
    %v1617 = vunpack.c.h.b16 %v471
    %v1618 = vunpack.c.l.b16 %v472
    %v1619 = vunpack.c.h.b16 %v472
    %v1620 = vunpack.c.l.b16 %v473
    %v1621 = vunpack.c.h.b16 %v473
    %v1622 = vunpack.c.l.b16 %v474
    %v1623 = vunpack.c.h.b16 %v474
    %v1624 = vunpack.c.l.b16 %v475
    %v1625 = vunpack.c.h.b16 %v475
    %v1626 = vunpack.c.l.b16 %v476
    %v1627 = vunpack.c.h.b16 %v476
    %v1628 = vunpack.c.l.b16 %v477
    %v1629 = vunpack.c.h.b16 %v477
    %v1630 = vunpack.c.l.b16 %v478
    %v1631 = vunpack.c.h.b16 %v478
    %v1632 = vunpack.c.l.b16 %v479
    %v1633 = vunpack.c.h.b16 %v479
    %v1634 = vunpack.c.l.b16 %v480
    %v1635 = vunpack.c.h.b16 %v480
    %v1636 = vunpack.c.l.b16 %v481
    %v1637 = vunpack.c.h.b16 %v481
    %v1638 = vunpack.c.l.b16 %v482
    %v1639 = vunpack.c.h.b16 %v482
    %v1640 = vunpack.c.l.b16 %v483
    %v1641 = vunpack.c.h.b16 %v483
    %v1642 = vunpack.c.l.b16 %v484
    %v1643 = vunpack.c.h.b16 %v484
    %v1644 = vunpack.c.l.b16 %v485
    %v1645 = vunpack.c.h.b16 %v485
    %v1646 = vunpack.c.l.b16 %v486
    %v1647 = vunpack.c.h.b16 %v486
    %v1648 = vunpack.c.l.b16 %v487
    %v1649 = vunpack.c.h.b16 %v487
    %v1650 = vunpack.c.l.b16 %v488
    %v1651 = vunpack.c.h.b16 %v488
    %v1652 = vunpack.c.l.b16 %v489
    %v1653 = vunpack.c.h.b16 %v489
    %v1654 = vunpack.c.l.b16 %v490
    %v1655 = vunpack.c.h.b16 %v490
    %v1656 = vunpack.c.l.b16 %v491
    %v1657 = vunpack.c.h.b16 %v491
    %v1658 = vunpack.c.l.b16 %v492
    %v1659 = vunpack.c.h.b16 %v492
    %v1660 = vunpack.c.l.b16 %v493
    %v1661 = vunpack.c.h.b16 %v493
    %v1662 = vunpack.c.l.b16 %v494
    %v1663 = vunpack.c.h.b16 %v494
    %v1664 = vunpack.c.l.b16 %v495
    %v1665 = vunpack.c.h.b16 %v495
    %v1666 = vunpack.c.l.b16 %v496
    %v1667 = vunpack.c.h.b16 %v496
    %v1668 = vunpack.c.l.b16 %v497
    %v1669 = vunpack.c.h.b16 %v497
    %v1670 = vunpack.c.l.b16 %v498
    %v1671 = vunpack.c.h.b16 %v498
    %v1672 = vunpack.c.l.b16 %v499
    %v1673 = vunpack.c.h.b16 %v499
    %v1674 = vunpack.c.l.b16 %v500
    %v1675 = vunpack.c.h.b16 %v500
    %v1676 = vunpack.c.l.b16 %v501
    %v1677 = vunpack.c.h.b16 %v501
    %v1678 = vunpack.c.l.b16 %v502
    %v1679 = vunpack.c.h.b16 %v502
    %v1680 = vunpack.c.l.b16 %v503
    %v1681 = vunpack.c.h.b16 %v503
    %v1682 = vunpack.c.l.b16 %v504
    %v1683 = vunpack.c.h.b16 %v504
    %v1684 = vunpack.c.l.b16 %v505
    %v1685 = vunpack.c.h.b16 %v505
    %v1686 = vunpack.c.l.b16 %v506
    %v1687 = vunpack.c.h.b16 %v506
    %v1688 = vunpack.c.l.b16 %v507
    %v1689 = vunpack.c.h.b16 %v507
    %v1690 = vunpack.c.l.b16 %v508
    %v1691 = vunpack.c.h.b16 %v508
    %v1692 = vunpack.c.l.b16 %v509
    %v1693 = vunpack.c.h.b16 %v509
    %v1694 = vunpack.c.l.b16 %v510
    %v1695 = vunpack.c.h.b16 %v510
    %v1696 = vunpack.c.l.b16 %v511
    %v1697 = vunpack.c.h.b16 %v511
    %v1698 = vunpack.c.l.b16 %v512
    %v1699 = vunpack.c.h.b16 %v512
    %v1700 = vunpack.c.l.b16 %v513
    %v1701 = vunpack.c.h.b16 %v513
    %v1702 = vunpack.c.l.b16 %v514
    %v1703 = vunpack.c.h.b16 %v514
    %v1704 = vunpack.c.l.b16 %v515
    %v1705 = vunpack.c.h.b16 %v515
    %v1706 = vunpack.c.l.b16 %v516
    %v1707 = vunpack.c.h.b16 %v516
    %v1708 = vunpack.c.l.b16 %v517
    %v1709 = vunpack.c.h.b16 %v517
    %v1710 = vunpack.c.l.b16 %v518
    %v1711 = vunpack.c.h.b16 %v518
    %v1712 = vunpack.c.l.b16 %v519
    %v1713 = vunpack.c.h.b16 %v519
    %v1714 = vunpack.c.l.b16 %v520
    %v1715 = vunpack.c.h.b16 %v520
    %v1716 = vunpack.c.l.b16 %v521
    %v1717 = vunpack.c.h.b16 %v521
    %v1718 = vunpack.c.l.b16 %v522
    %v1719 = vunpack.c.h.b16 %v522
    %v1720 = vunpack.c.l.b16 %v523
    %v1721 = vunpack.c.h.b16 %v523
    %v1722 = vunpack.c.l.b16 %v524
    %v1723 = vunpack.c.h.b16 %v524
    %v1724 = vunpack.c.l.b16 %v525
    %v1725 = vunpack.c.h.b16 %v525
    %v1726 = vunpack.c.l.b16 %v526
    %v1727 = vunpack.c.h.b16 %v526
    %v1728 = vunpack.c.l.b16 %v527
    %v1729 = vunpack.c.h.b16 %v527
    %v1730 = vunpack.c.l.b16 %v528
    %v1731 = vunpack.c.h.b16 %v528
    %v1732 = vunpack.c.l.b16 %v529
    %v1733 = vunpack.c.h.b16 %v529
    %v1734 = vunpack.c.l.b16 %v530
    %v1735 = vunpack.c.h.b16 %v530
    %v1736 = vunpack.c.l.b16 %v531
    %v1737 = vunpack.c.h.b16 %v531
    %v1738 = vunpack.c.l.b16 %v532
    %v1739 = vunpack.c.h.b16 %v532
    %v1740 = vunpack.c.l.b16 %v533
    %v1741 = vunpack.c.h.b16 %v533
    %v1742 = vunpack.c.l.b16 %v534
    %v1743 = vunpack.c.h.b16 %v534
    %v1744 = vunpack.c.l.b16 %v535
    %v1745 = vunpack.c.h.b16 %v535
    %v1746 = vunpack.c.l.b16 %v536
    %v1747 = vunpack.c.h.b16 %v536
    %v1748 = vunpack.c.l.b16 %v537
    %v1749 = vunpack.c.h.b16 %v537
    %v1750 = vunpack.c.l.b16 %v538
    %v1751 = vunpack.c.h.b16 %v538
    %v1752 = vunpack.c.l.b16 %v539
    %v1753 = vunpack.c.h.b16 %v539
    %v1754 = vunpack.c.l.b16 %v540
    %v1755 = vunpack.c.h.b16 %v540
    %v1756 = vunpack.c.l.b16 %v541
    %v1757 = vunpack.c.h.b16 %v541
    %v1758 = vunpack.c.l.b16 %v542
    %v1759 = vunpack.c.h.b16 %v542
    %v1760 = vunpack.c.l.b16 %v543
    %v1761 = vunpack.c.h.b16 %v543
    %v1762 = vunpack.c.l.b16 %v544
    %v1763 = vunpack.c.h.b16 %v544
    %v1764 = vunpack.c.l.b16 %v545
    %v1765 = vunpack.c.h.b16 %v545
    %v1766 = vunpack.c.l.b16 %v546
    %v1767 = vunpack.c.h.b16 %v546
    %v1768 = vunpack.c.l.b16 %v547
    %v1769 = vunpack.c.h.b16 %v547
    %v1770 = vunpack.c.l.b16 %v548
    %v1771 = vunpack.c.h.b16 %v548
    %v1772 = vunpack.c.l.b16 %v549
    %v1773 = vunpack.c.h.b16 %v549
    %v1774 = vunpack.c.l.b16 %v550
    %v1775 = vunpack.c.h.b16 %v550
    %v1776 = vunpack.c.l.b16 %v551
    %v1777 = vunpack.c.h.b16 %v551
    %v1778 = vunpack.c.l.b16 %v552
    %v1779 = vunpack.c.h.b16 %v552
    %v1780 = vunpack.c.l.b16 %v553
    %v1781 = vunpack.c.h.b16 %v553
    %v1782 = vunpack.c.l.b16 %v554
    %v1783 = vunpack.c.h.b16 %v554
    %v1784 = vunpack.c.l.b16 %v555
    %v1785 = vunpack.c.h.b16 %v555
    %v1786 = vunpack.c.l.b16 %v556
    %v1787 = vunpack.c.h.b16 %v556
    %v1788 = vunpack.c.l.b16 %v557
    %v1789 = vunpack.c.h.b16 %v557
    %v1790 = vunpack.c.l.b16 %v558
    %v1791 = vunpack.c.h.b16 %v558
    %v1792 = vunpack.c.l.b16 %v559
    %v1793 = vunpack.c.h.b16 %v559
    %v1794 = vunpack.c.l.b16 %v560
    %v1795 = vunpack.c.h.b16 %v560
    %v1796 = vunpack.c.l.b16 %v561
    %v1797 = vunpack.c.h.b16 %v561
    %v1798 = vunpack.c.l.b16 %v562
    %v1799 = vunpack.c.h.b16 %v562
    %v1800 = vunpack.c.l.b16 %v563
    %v1801 = vunpack.c.h.b16 %v563
    %v1802 = vunpack.c.l.b16 %v564
    %v1803 = vunpack.c.h.b16 %v564
    %v1804 = vunpack.c.l.b16 %v565
    %v1805 = vunpack.c.h.b16 %v565
    %v1806 = vunpack.c.l.b16 %v566
    %v1807 = vunpack.c.h.b16 %v566
    %v1808 = vunpack.c.l.b16 %v567
    %v1809 = vunpack.c.h.b16 %v567
    %v1810 = vunpack.c.l.b16 %v568
    %v1811 = vunpack.c.h.b16 %v568
    %v1812 = vunpack.c.l.b16 %v569
    %v1813 = vunpack.c.h.b16 %v569
    %v1814 = vunpack.c.l.b16 %v570
    %v1815 = vunpack.c.h.b16 %v570
    %v1816 = vunpack.c.l.b16 %v571
    %v1817 = vunpack.c.h.b16 %v571
    %v1818 = vunpack.c.l.b16 %v572
    %v1819 = vunpack.c.h.b16 %v572
    %v1820 = vunpack.c.l.b16 %v573
    %v1821 = vunpack.c.h.b16 %v573
    %v1822 = vunpack.c.l.b16 %v574
    %v1823 = vunpack.c.h.b16 %v574
    %v1824 = vunpack.c.l.b16 %v575
    %v1825 = vunpack.c.h.b16 %v575
    %v1826 = vunpack.c.l.b16 %v576
    %v1827 = vunpack.c.h.b16 %v576
    %v1828 = vunpack.c.l.b16 %v577
    %v1829 = vunpack.c.h.b16 %v577
    %v1830 = vunpack.c.l.b16 %v578
    %v1831 = vunpack.c.h.b16 %v578
    %v1832 = vpack.c.b16 %v1056, %v1048
    %v1833 = vpack.c.b16 %v1057, %v1049
    %v1834 = vpack.c.b16 %v1058, %v1050
    %v1835 = vpack.c.b16 %v1059, %v1051
    %v1836 = vpack.c.b16 %v1060, %v1052
    %v1837 = vpack.c.b16 %v1061, %v1053
    %v1838 = vpack.c.b16 %v1062, %v1054
    %v1839 = vpack.c.b16 %v1063, %v1055
    %v1840 = vpack.c.b16 %v1072, %v1064
    %v1841 = vpack.c.b16 %v1073, %v1065
    %v1842 = vpack.c.b16 %v1074, %v1066
    %v1843 = vpack.c.b16 %v1075, %v1067
    %v1844 = vpack.c.b16 %v1076, %v1068
    %v1845 = vpack.c.b16 %v1077, %v1069
    %v1846 = vpack.c.b16 %v1078, %v1070
    %v1847 = vpack.c.b16 %v1079, %v1071
    %v1848 = vpack.c.b16 %v1088, %v1080
    %v1849 = vpack.c.b16 %v1089, %v1081
    %v1850 = vpack.c.b16 %v1090, %v1082
    %v1851 = vpack.c.b16 %v1091, %v1083
    %v1852 = vpack.c.b16 %v1092, %v1084
    %v1853 = vpack.c.b16 %v1093, %v1085
    %v1854 = vpack.c.b16 %v1094, %v1086
    %v1855 = vpack.c.b16 %v1095, %v1087
    %v1856 = vpack.c.b16 %v1104, %v1096
    %v1857 = vpack.c.b16 %v1105, %v1097
    %v1858 = vpack.c.b16 %v1106, %v1098
    %v1859 = vpack.c.b16 %v1107, %v1099
    %v1860 = vpack.c.b16 %v1108, %v1100
    %v1861 = vpack.c.b16 %v1109, %v1101
    %v1862 = vpack.c.b16 %v1110, %v1102
    %v1863 = vpack.c.b16 %v1111, %v1103
    %v1864 = vpack.c.b16 %v1120, %v1112
    %v1865 = vpack.c.b16 %v1121, %v1113
    %v1866 = vpack.c.b16 %v1122, %v1114
    %v1867 = vpack.c.b16 %v1123, %v1115
    %v1868 = vpack.c.b16 %v1124, %v1116
    %v1869 = vpack.c.b16 %v1125, %v1117
    %v1870 = vpack.c.b16 %v1126, %v1118
    %v1871 = vpack.c.b16 %v1127, %v1119
    %v1872 = vpack.c.b16 %v1136, %v1128
    %v1873 = vpack.c.b16 %v1137, %v1129
    %v1874 = vpack.c.b16 %v1138, %v1130
    %v1875 = vpack.c.b16 %v1139, %v1131
    %v1876 = vpack.c.b16 %v1140, %v1132
    %v1877 = vpack.c.b16 %v1141, %v1133
    %v1878 = vpack.c.b16 %v1142, %v1134
    %v1879 = vpack.c.b16 %v1143, %v1135
    %v1880 = vpack.c.b16 %v1152, %v1144
    %v1881 = vpack.c.b16 %v1153, %v1145
    %v1882 = vpack.c.b16 %v1154, %v1146
    %v1883 = vpack.c.b16 %v1155, %v1147
    %v1884 = vpack.c.b16 %v1156, %v1148
    %v1885 = vpack.c.b16 %v1157, %v1149
    %v1886 = vpack.c.b16 %v1158, %v1150
    %v1887 = vpack.c.b16 %v1159, %v1151
    %v1888 = vpack.c.b16 %v1168, %v1160
    %v1889 = vpack.c.b16 %v1169, %v1161
    %v1890 = vpack.c.b16 %v1170, %v1162
    %v1891 = vpack.c.b16 %v1171, %v1163
    %v1892 = vpack.c.b16 %v1172, %v1164
    %v1893 = vpack.c.b16 %v1173, %v1165
    %v1894 = vpack.c.b16 %v1174, %v1166
    %v1895 = vpack.c.b16 %v1175, %v1167
    %v1896 = vpack.c.b16 %v1184, %v1176
    %v1897 = vpack.c.b16 %v1185, %v1177
    %v1898 = vpack.c.b16 %v1186, %v1178
    %v1899 = vpack.c.b16 %v1187, %v1179
    %v1900 = vpack.c.b16 %v1188, %v1180
    %v1901 = vpack.c.b16 %v1189, %v1181
    %v1902 = vpack.c.b16 %v1190, %v1182
    %v1903 = vpack.c.b16 %v1191, %v1183
    %v1904 = vpack.c.b16 %v1200, %v1192
    %v1905 = vpack.c.b16 %v1201, %v1193
    %v1906 = vpack.c.b16 %v1202, %v1194
    %v1907 = vpack.c.b16 %v1203, %v1195
    %v1908 = vpack.c.b16 %v1204, %v1196
    %v1909 = vpack.c.b16 %v1205, %v1197
    %v1910 = vpack.c.b16 %v1206, %v1198
    %v1911 = vpack.c.b16 %v1207, %v1199
    %v1912 = vpack.c.b16 %v1216, %v1208
    %v1913 = vpack.c.b16 %v1217, %v1209
    %v1914 = vpack.c.b16 %v1218, %v1210
    %v1915 = vpack.c.b16 %v1219, %v1211
    %v1916 = vpack.c.b16 %v1220, %v1212
    %v1917 = vpack.c.b16 %v1221, %v1213
    %v1918 = vpack.c.b16 %v1222, %v1214
    %v1919 = vpack.c.b16 %v1223, %v1215
    %v1920 = vpack.c.b16 %v1232, %v1224
    %v1921 = vpack.c.b16 %v1233, %v1225
    %v1922 = vpack.c.b16 %v1234, %v1226
    %v1923 = vpack.c.b16 %v1235, %v1227
    %v1924 = vpack.c.b16 %v1236, %v1228
    %v1925 = vpack.c.b16 %v1237, %v1229
    %v1926 = vpack.c.b16 %v1238, %v1230
    %v1927 = vpack.c.b16 %v1239, %v1231
    %v1928 = vpack.c.b16 %v1248, %v1240
    %v1929 = vpack.c.b16 %v1249, %v1241
    %v1930 = vpack.c.b16 %v1250, %v1242
    %v1931 = vpack.c.b16 %v1251, %v1243
    %v1932 = vpack.c.b16 %v1252, %v1244
    %v1933 = vpack.c.b16 %v1253, %v1245
    %v1934 = vpack.c.b16 %v1254, %v1246
    %v1935 = vpack.c.b16 %v1255, %v1247
    %v1936 = vpack.c.b16 %v1264, %v1256
    %v1937 = vpack.c.b16 %v1265, %v1257
    %v1938 = vpack.c.b16 %v1266, %v1258
    %v1939 = vpack.c.b16 %v1267, %v1259
    %v1940 = vpack.c.b16 %v1268, %v1260
    %v1941 = vpack.c.b16 %v1269, %v1261
    %v1942 = vpack.c.b16 %v1270, %v1262
    %v1943 = vpack.c.b16 %v1271, %v1263
    %v1944 = vpack.c.b16 %v1280, %v1272
    %v1945 = vpack.c.b16 %v1281, %v1273
    %v1946 = vpack.c.b16 %v1282, %v1274
    %v1947 = vpack.c.b16 %v1283, %v1275
    %v1948 = vpack.c.b16 %v1284, %v1276
    %v1949 = vpack.c.b16 %v1285, %v1277
    %v1950 = vpack.c.b16 %v1286, %v1278
    %v1951 = vpack.c.b16 %v1287, %v1279
    %v1952 = vpack.c.b16 %v1296, %v1288
    %v1953 = vpack.c.b16 %v1297, %v1289
    %v1954 = vpack.c.b16 %v1298, %v1290
    %v1955 = vpack.c.b16 %v1299, %v1291
    %v1956 = vpack.c.b16 %v1300, %v1292
    %v1957 = vpack.c.b16 %v1301, %v1293
    %v1958 = vpack.c.b16 %v1302, %v1294
    %v1959 = vpack.c.b16 %v1303, %v1295
    %v1960 = vpack.c.b16 %v1312, %v1304
    %v1961 = vpack.c.b16 %v1313, %v1305
    %v1962 = vpack.c.b16 %v1314, %v1306
    %v1963 = vpack.c.b16 %v1315, %v1307
    %v1964 = vpack.c.b16 %v1316, %v1308
    %v1965 = vpack.c.b16 %v1317, %v1309
    %v1966 = vpack.c.b16 %v1318, %v1310
    %v1967 = vpack.c.b16 %v1319, %v1311
    %v1968 = vpack.c.b16 %v1328, %v1320
    %v1969 = vpack.c.b16 %v1329, %v1321
    %v1970 = vpack.c.b16 %v1330, %v1322
    %v1971 = vpack.c.b16 %v1331, %v1323
    %v1972 = vpack.c.b16 %v1332, %v1324
    %v1973 = vpack.c.b16 %v1333, %v1325
    %v1974 = vpack.c.b16 %v1334, %v1326
    %v1975 = vpack.c.b16 %v1335, %v1327
    %v1976 = vpack.c.b16 %v1344, %v1336
    %v1977 = vpack.c.b16 %v1345, %v1337
    %v1978 = vpack.c.b16 %v1346, %v1338
    %v1979 = vpack.c.b16 %v1347, %v1339
    %v1980 = vpack.c.b16 %v1348, %v1340
    %v1981 = vpack.c.b16 %v1349, %v1341
    %v1982 = vpack.c.b16 %v1350, %v1342
    %v1983 = vpack.c.b16 %v1351, %v1343
    %v1984 = vpack.c.b16 %v1360, %v1352
    %v1985 = vpack.c.b16 %v1361, %v1353
    %v1986 = vpack.c.b16 %v1362, %v1354
    %v1987 = vpack.c.b16 %v1363, %v1355
    %v1988 = vpack.c.b16 %v1364, %v1356
    %v1989 = vpack.c.b16 %v1365, %v1357
    %v1990 = vpack.c.b16 %v1366, %v1358
    %v1991 = vpack.c.b16 %v1367, %v1359
    %v1992 = vpack.c.b16 %v1376, %v1368
    %v1993 = vpack.c.b16 %v1377, %v1369
    %v1994 = vpack.c.b16 %v1378, %v1370
    %v1995 = vpack.c.b16 %v1379, %v1371
    %v1996 = vpack.c.b16 %v1380, %v1372
    %v1997 = vpack.c.b16 %v1381, %v1373
    %v1998 = vpack.c.b16 %v1382, %v1374
    %v1999 = vpack.c.b16 %v1383, %v1375
    %v2000 = vpack.c.b16 %v1392, %v1384
    %v2001 = vpack.c.b16 %v1393, %v1385
    %v2002 = vpack.c.b16 %v1394, %v1386
    %v2003 = vpack.c.b16 %v1395, %v1387
    %v2004 = vpack.c.b16 %v1396, %v1388
    %v2005 = vpack.c.b16 %v1397, %v1389
    %v2006 = vpack.c.b16 %v1398, %v1390
    %v2007 = vpack.c.b16 %v1399, %v1391
    %v2008 = vpack.c.b16 %v1408, %v1400
    %v2009 = vpack.c.b16 %v1409, %v1401
    %v2010 = vpack.c.b16 %v1410, %v1402
    %v2011 = vpack.c.b16 %v1411, %v1403
    %v2012 = vpack.c.b16 %v1412, %v1404
    %v2013 = vpack.c.b16 %v1413, %v1405
    %v2014 = vpack.c.b16 %v1414, %v1406
    %v2015 = vpack.c.b16 %v1415, %v1407
    %v2016 = vpack.c.b16 %v1424, %v1416
    %v2017 = vpack.c.b16 %v1425, %v1417
    %v2018 = vpack.c.b16 %v1426, %v1418
    %v2019 = vpack.c.b16 %v1427, %v1419
    %v2020 = vpack.c.b16 %v1428, %v1420
    %v2021 = vpack.c.b16 %v1429, %v1421
    %v2022 = vpack.c.b16 %v1430, %v1422
    %v2023 = vpack.c.b16 %v1431, %v1423
    %v2024 = vpack.c.b16 %v1440, %v1432
    %v2025 = vpack.c.b16 %v1441, %v1433
    %v2026 = vpack.c.b16 %v1442, %v1434
    %v2027 = vpack.c.b16 %v1443, %v1435
    %v2028 = vpack.c.b16 %v1444, %v1436
    %v2029 = vpack.c.b16 %v1445, %v1437
    %v2030 = vpack.c.b16 %v1446, %v1438
    %v2031 = vpack.c.b16 %v1447, %v1439
    %v2032 = vpack.c.b16 %v1456, %v1448
    %v2033 = vpack.c.b16 %v1457, %v1449
    %v2034 = vpack.c.b16 %v1458, %v1450
    %v2035 = vpack.c.b16 %v1459, %v1451
    %v2036 = vpack.c.b16 %v1460, %v1452
    %v2037 = vpack.c.b16 %v1461, %v1453
    %v2038 = vpack.c.b16 %v1462, %v1454
    %v2039 = vpack.c.b16 %v1463, %v1455
    %v2040 = vpack.c.b16 %v1472, %v1464
    %v2041 = vpack.c.b16 %v1473, %v1465
    %v2042 = vpack.c.b16 %v1474, %v1466
    %v2043 = vpack.c.b16 %v1475, %v1467
    %v2044 = vpack.c.b16 %v1476, %v1468
    %v2045 = vpack.c.b16 %v1477, %v1469
    %v2046 = vpack.c.b16 %v1478, %v1470
    %v2047 = vpack.c.b16 %v1479, %v1471
    %v2048 = vpack.c.b16 %v1488, %v1480
    %v2049 = vpack.c.b16 %v1489, %v1481
    %v2050 = vpack.c.b16 %v1490, %v1482
    %v2051 = vpack.c.b16 %v1491, %v1483
    %v2052 = vpack.c.b16 %v1492, %v1484
    %v2053 = vpack.c.b16 %v1493, %v1485
    %v2054 = vpack.c.b16 %v1494, %v1486
    %v2055 = vpack.c.b16 %v1495, %v1487
    %v2056 = vpack.c.b16 %v1504, %v1496
    %v2057 = vpack.c.b16 %v1505, %v1497
    %v2058 = vpack.c.b16 %v1506, %v1498
    %v2059 = vpack.c.b16 %v1507, %v1499
    %v2060 = vpack.c.b16 %v1508, %v1500
    %v2061 = vpack.c.b16 %v1509, %v1501
    %v2062 = vpack.c.b16 %v1510, %v1502
    %v2063 = vpack.c.b16 %v1511, %v1503
    %v2064 = vpack.c.b16 %v1520, %v1512
    %v2065 = vpack.c.b16 %v1521, %v1513
    %v2066 = vpack.c.b16 %v1522, %v1514
    %v2067 = vpack.c.b16 %v1523, %v1515
    %v2068 = vpack.c.b16 %v1524, %v1516
    %v2069 = vpack.c.b16 %v1525, %v1517
    %v2070 = vpack.c.b16 %v1526, %v1518
    %v2071 = vpack.c.b16 %v1527, %v1519
    %v2072 = vpack.c.b16 %v1536, %v1528
    %v2073 = vpack.c.b16 %v1537, %v1529
    %v2074 = vpack.c.b16 %v1538, %v1530
    %v2075 = vpack.c.b16 %v1539, %v1531
    %v2076 = vpack.c.b16 %v1540, %v1532
    %v2077 = vpack.c.b16 %v1541, %v1533
    %v2078 = vpack.c.b16 %v1542, %v1534
    %v2079 = vpack.c.b16 %v1543, %v1535
    %v2080 = vpack.c.b16 %v1552, %v1544
    %v2081 = vpack.c.b16 %v1553, %v1545
    %v2082 = vpack.c.b16 %v1554, %v1546
    %v2083 = vpack.c.b16 %v1555, %v1547
    %v2084 = vpack.c.b16 %v1556, %v1548
    %v2085 = vpack.c.b16 %v1557, %v1549
    %v2086 = vpack.c.b16 %v1558, %v1550
    %v2087 = vpack.c.b16 %v1559, %v1551
    %v2088 = vpack.c.b16 %v1568, %v1560
    %v2089 = vpack.c.b16 %v1569, %v1561
    %v2090 = vpack.c.b16 %v1570, %v1562
    %v2091 = vpack.c.b16 %v1571, %v1563
    %v2092 = vpack.c.b16 %v1572, %v1564
    %v2093 = vpack.c.b16 %v1573, %v1565
    %v2094 = vpack.c.b16 %v1574, %v1566
    %v2095 = vpack.c.b16 %v1575, %v1567
    %v2096 = vpack.c.b16 %v1584, %v1576
    %v2097 = vpack.c.b16 %v1585, %v1577
    %v2098 = vpack.c.b16 %v1586, %v1578
    %v2099 = vpack.c.b16 %v1587, %v1579
    %v2100 = vpack.c.b16 %v1588, %v1580
    %v2101 = vpack.c.b16 %v1589, %v1581
    %v2102 = vpack.c.b16 %v1590, %v1582
    %v2103 = vpack.c.b16 %v1591, %v1583
    %v2104 = vpack.c.b16 %v1600, %v1592
    %v2105 = vpack.c.b16 %v1601, %v1593
    %v2106 = vpack.c.b16 %v1602, %v1594
    %v2107 = vpack.c.b16 %v1603, %v1595
    %v2108 = vpack.c.b16 %v1604, %v1596
    %v2109 = vpack.c.b16 %v1605, %v1597
    %v2110 = vpack.c.b16 %v1606, %v1598
    %v2111 = vpack.c.b16 %v1607, %v1599
    %v2112 = vpack.c.b16 %v1616, %v1608
    %v2113 = vpack.c.b16 %v1617, %v1609
    %v2114 = vpack.c.b16 %v1618, %v1610
    %v2115 = vpack.c.b16 %v1619, %v1611
    %v2116 = vpack.c.b16 %v1620, %v1612
    %v2117 = vpack.c.b16 %v1621, %v1613
    %v2118 = vpack.c.b16 %v1622, %v1614
    %v2119 = vpack.c.b16 %v1623, %v1615
    %v2120 = vpack.c.b16 %v1632, %v1624
    %v2121 = vpack.c.b16 %v1633, %v1625
    %v2122 = vpack.c.b16 %v1634, %v1626
    %v2123 = vpack.c.b16 %v1635, %v1627
    %v2124 = vpack.c.b16 %v1636, %v1628
    %v2125 = vpack.c.b16 %v1637, %v1629
    %v2126 = vpack.c.b16 %v1638, %v1630
    %v2127 = vpack.c.b16 %v1639, %v1631
    %v2128 = vpack.c.b16 %v1648, %v1640
    %v2129 = vpack.c.b16 %v1649, %v1641
    %v2130 = vpack.c.b16 %v1650, %v1642
    %v2131 = vpack.c.b16 %v1651, %v1643
    %v2132 = vpack.c.b16 %v1652, %v1644
    %v2133 = vpack.c.b16 %v1653, %v1645
    %v2134 = vpack.c.b16 %v1654, %v1646
    %v2135 = vpack.c.b16 %v1655, %v1647
    %v2136 = vpack.c.b16 %v1664, %v1656
    %v2137 = vpack.c.b16 %v1665, %v1657
    %v2138 = vpack.c.b16 %v1666, %v1658
    %v2139 = vpack.c.b16 %v1667, %v1659
    %v2140 = vpack.c.b16 %v1668, %v1660
    %v2141 = vpack.c.b16 %v1669, %v1661
    %v2142 = vpack.c.b16 %v1670, %v1662
    %v2143 = vpack.c.b16 %v1671, %v1663
    %v2144 = vpack.c.b16 %v1680, %v1672
    %v2145 = vpack.c.b16 %v1681, %v1673
    %v2146 = vpack.c.b16 %v1682, %v1674
    %v2147 = vpack.c.b16 %v1683, %v1675
    %v2148 = vpack.c.b16 %v1684, %v1676
    %v2149 = vpack.c.b16 %v1685, %v1677
    %v2150 = vpack.c.b16 %v1686, %v1678
    %v2151 = vpack.c.b16 %v1687, %v1679
    %v2152 = vpack.c.b16 %v1696, %v1688
    %v2153 = vpack.c.b16 %v1697, %v1689
    %v2154 = vpack.c.b16 %v1698, %v1690
    %v2155 = vpack.c.b16 %v1699, %v1691
    %v2156 = vpack.c.b16 %v1700, %v1692
    %v2157 = vpack.c.b16 %v1701, %v1693
    %v2158 = vpack.c.b16 %v1702, %v1694
    %v2159 = vpack.c.b16 %v1703, %v1695
    %v2160 = vpack.c.b16 %v1712, %v1704
    %v2161 = vpack.c.b16 %v1713, %v1705
    %v2162 = vpack.c.b16 %v1714, %v1706
    %v2163 = vpack.c.b16 %v1715, %v1707
    %v2164 = vpack.c.b16 %v1716, %v1708
    %v2165 = vpack.c.b16 %v1717, %v1709
    %v2166 = vpack.c.b16 %v1718, %v1710
    %v2167 = vpack.c.b16 %v1719, %v1711
    %v2168 = vpack.c.b16 %v1728, %v1720
    %v2169 = vpack.c.b16 %v1729, %v1721
    %v2170 = vpack.c.b16 %v1730, %v1722
    %v2171 = vpack.c.b16 %v1731, %v1723
    %v2172 = vpack.c.b16 %v1732, %v1724
    %v2173 = vpack.c.b16 %v1733, %v1725
    %v2174 = vpack.c.b16 %v1734, %v1726
    %v2175 = vpack.c.b16 %v1735, %v1727
    %v2176 = vpack.c.b16 %v1744, %v1736
    %v2177 = vpack.c.b16 %v1745, %v1737
    %v2178 = vpack.c.b16 %v1746, %v1738
    %v2179 = vpack.c.b16 %v1747, %v1739
    %v2180 = vpack.c.b16 %v1748, %v1740
    %v2181 = vpack.c.b16 %v1749, %v1741
    %v2182 = vpack.c.b16 %v1750, %v1742
    %v2183 = vpack.c.b16 %v1751, %v1743
    %v2184 = vpack.c.b16 %v1760, %v1752
    %v2185 = vpack.c.b16 %v1761, %v1753
    %v2186 = vpack.c.b16 %v1762, %v1754
    %v2187 = vpack.c.b16 %v1763, %v1755
    %v2188 = vpack.c.b16 %v1764, %v1756
    %v2189 = vpack.c.b16 %v1765, %v1757
    %v2190 = vpack.c.b16 %v1766, %v1758
    %v2191 = vpack.c.b16 %v1767, %v1759
    %v2192 = vpack.c.b16 %v1776, %v1768
    %v2193 = vpack.c.b16 %v1777, %v1769
    %v2194 = vpack.c.b16 %v1778, %v1770
    %v2195 = vpack.c.b16 %v1779, %v1771
    %v2196 = vpack.c.b16 %v1780, %v1772
    %v2197 = vpack.c.b16 %v1781, %v1773
    %v2198 = vpack.c.b16 %v1782, %v1774
    %v2199 = vpack.c.b16 %v1783, %v1775
    %v2200 = vpack.c.b16 %v1792, %v1784
    %v2201 = vpack.c.b16 %v1793, %v1785
    %v2202 = vpack.c.b16 %v1794, %v1786
    %v2203 = vpack.c.b16 %v1795, %v1787
    %v2204 = vpack.c.b16 %v1796, %v1788
    %v2205 = vpack.c.b16 %v1797, %v1789
    %v2206 = vpack.c.b16 %v1798, %v1790
    %v2207 = vpack.c.b16 %v1799, %v1791
    %v2208 = vpack.c.b16 %v1808, %v1800
    %v2209 = vpack.c.b16 %v1809, %v1801
    %v2210 = vpack.c.b16 %v1810, %v1802
    %v2211 = vpack.c.b16 %v1811, %v1803
    %v2212 = vpack.c.b16 %v1812, %v1804
    %v2213 = vpack.c.b16 %v1813, %v1805
    %v2214 = vpack.c.b16 %v1814, %v1806
    %v2215 = vpack.c.b16 %v1815, %v1807
    %v2216 = vpack.c.b16 %v1824, %v1816
    %v2217 = vpack.c.b16 %v1825, %v1817
    %v2218 = vpack.c.b16 %v1826, %v1818
    %v2219 = vpack.c.b16 %v1827, %v1819
    %v2220 = vpack.c.b16 %v1828, %v1820
    %v2221 = vpack.c.b16 %v1829, %v1821
    %v2222 = vpack.c.b16 %v1830, %v1822
    %v2223 = vpack.c.b16 %v1831, %v1823
    %vm2616 = vcmask 130048
    %v2618 = vsel %vm2616, %v649, 0
    %2620 = vmatprep.subr.bf16.mxu0 %v1833
    %2621 = vmatpush1.bf16.msra.mxu0 %v1832
    %2622 = vmatprep.subr.bf16.mxu0 %v1841
    %2623 = vmatpush1.bf16.msra.mxu0 %v1840
    %2624 = vmatprep.subr.bf16.mxu0 %v1849
    %2625 = vmatpush1.bf16.msra.mxu0 %v1848
    %2626 = vmatprep.subr.bf16.mxu0 %v1857
    %2627 = vmatpush1.bf16.msra.mxu0 %v1856
    %2628 = vmatprep.subr.bf16.mxu0 %v1865
    %2629 = vmatpush1.bf16.msra.mxu0 %v1864
    %2630 = vmatprep.subr.bf16.mxu0 %v1873
    %2631 = vmatpush1.bf16.msra.mxu0 %v1872
    %2632 = vmatprep.subr.bf16.mxu0 %v1881
    %2633 = vmatpush1.bf16.msra.mxu0 %v1880
    %2634 = vmatprep.subr.bf16.mxu0 %v1889
    %2635 = vmatpush1.bf16.msra.mxu0 %v1888
    %2636 = vmatprep.subr.bf16.mxu0 %v1897
    %2637 = vmatpush1.bf16.msra.mxu0 %v1896
    %2638 = vmatprep.subr.bf16.mxu0 %v1905
    %2639 = vmatpush1.bf16.msra.mxu0 %v1904
    %2640 = vmatprep.subr.bf16.mxu0 %v1913
    %2641 = vmatpush1.bf16.msra.mxu0 %v1912
    %2642 = vmatprep.subr.bf16.mxu0 %v1921
    %2643 = vmatpush1.bf16.msra.mxu0 %v1920
    %2644 = vmatprep.subr.bf16.mxu0 %v1929
    %2645 = vmatpush1.bf16.msra.mxu0 %v1928
    %2646 = vmatprep.subr.bf16.mxu0 %v1937
    %2647 = vmatpush1.bf16.msra.mxu0 %v1936
    %2648 = vmatprep.subr.bf16.mxu0 %v1945
    %2649 = vmatpush1.bf16.msra.mxu0 %v1944
    %2650 = vmatprep.subr.bf16.mxu0 %v1953
    %2651 = vmatpush1.bf16.msra.mxu0 %v1952
    %2652 = vmatprep.mubr.bf16.mxu0 %v644
    %2653 = vmatmul.mubr.bf16.gmra.mrb[0].mxu0 %v643
    %v2654 = vpop.f32.mrb[0].mxu0
    %v2655 = vadd.f32 %v584, %v2654
    %v2656 = vpop.f32.mrb[0].mxu0
    %v2657 = vadd.f32 %v588, %v2656
    %v2658 = vpop.f32.mrb[0].mxu0
    %v2659 = vadd.f32 %v584, %v2658
    %v2660 = vpop.f32.mrb[0].mxu0
    %v2661 = vadd.f32 %v588, %v2660
    %2662 = vdwg.mxu0
    %2663 = vmatprep.subr.bf16.mxu0 %v1961
    %2664 = vmatpush1.bf16.msra.mxu0 %v1960
    %2665 = vmatprep.subr.bf16.mxu0 %v1969
    %2666 = vmatpush1.bf16.msra.mxu0 %v1968
    %2667 = vmatprep.subr.bf16.mxu0 %v1977
    %2668 = vmatpush1.bf16.msra.mxu0 %v1976
    %2669 = vmatprep.subr.bf16.mxu0 %v1985
    %2670 = vmatpush1.bf16.msra.mxu0 %v1984
    %2671 = vmatprep.subr.bf16.mxu0 %v1993
    %2672 = vmatpush1.bf16.msra.mxu0 %v1992
    %2673 = vmatprep.subr.bf16.mxu0 %v2001
    %2674 = vmatpush1.bf16.msra.mxu0 %v2000
    %2675 = vmatprep.subr.bf16.mxu0 %v2009
    %2676 = vmatpush1.bf16.msra.mxu0 %v2008
    %2677 = vmatprep.subr.bf16.mxu0 %v2017
    %2678 = vmatpush1.bf16.msra.mxu0 %v2016
    %2679 = vmatprep.subr.bf16.mxu0 %v2025
    %2680 = vmatpush1.bf16.msra.mxu0 %v2024
    %2681 = vmatprep.subr.bf16.mxu0 %v2033
    %2682 = vmatpush1.bf16.msra.mxu0 %v2032
    %2683 = vmatprep.subr.bf16.mxu0 %v2041
    %2684 = vmatpush1.bf16.msra.mxu0 %v2040
    %2685 = vmatprep.subr.bf16.mxu0 %v2049
    %2686 = vmatpush1.bf16.msra.mxu0 %v2048
    %2687 = vmatprep.subr.bf16.mxu0 %v2057
    %2688 = vmatpush1.bf16.msra.mxu0 %v2056
    %2689 = vmatprep.subr.bf16.mxu0 %v2065
    %2690 = vmatpush1.bf16.msra.mxu0 %v2064
    %2691 = vmatprep.subr.bf16.mxu0 %v2073
    %2692 = vmatpush1.bf16.msra.mxu0 %v2072
    %2693 = vmatprep.subr.bf16.mxu0 %v2081
    %2694 = vmatpush1.bf16.msra.mxu0 %v2080
    %2695 = vmatprep.mubr.bf16.mxu0 %v646
    %2696 = vmatmul.mubr.bf16.gmra.mrb[0].mxu0 %v645
    %v2697 = vpop.f32.mrb[0].mxu0
    %v2698 = vadd.f32 %v2655, %v2697
    %v2699 = vpop.f32.mrb[0].mxu0
    %v2700 = vadd.f32 %v2657, %v2699
    %v2701 = vpop.f32.mrb[0].mxu0
    %v2702 = vadd.f32 %v2659, %v2701
    %v2703 = vpop.f32.mrb[0].mxu0
    %v2704 = vadd.f32 %v2661, %v2703
    %2705 = vdwg.mxu0
    %2706 = vmatprep.subr.bf16.mxu0 %v2089
    %2707 = vmatpush1.bf16.msra.mxu0 %v2088
    %2708 = vmatprep.subr.bf16.mxu0 %v2097
    %2709 = vmatpush1.bf16.msra.mxu0 %v2096
    %2710 = vmatprep.subr.bf16.mxu0 %v2105
    %2711 = vmatpush1.bf16.msra.mxu0 %v2104
    %2712 = vmatprep.subr.bf16.mxu0 %v2113
    %2713 = vmatpush1.bf16.msra.mxu0 %v2112
    %2714 = vmatprep.subr.bf16.mxu0 %v2121
    %2715 = vmatpush1.bf16.msra.mxu0 %v2120
    %2716 = vmatprep.subr.bf16.mxu0 %v2129
    %2717 = vmatpush1.bf16.msra.mxu0 %v2128
    %2718 = vmatprep.subr.bf16.mxu0 %v2137
    %2719 = vmatpush1.bf16.msra.mxu0 %v2136
    %2720 = vmatprep.subr.bf16.mxu0 %v2145
    %2721 = vmatpush1.bf16.msra.mxu0 %v2144
    %2722 = vmatprep.subr.bf16.mxu0 %v2153
    %2723 = vmatpush1.bf16.msra.mxu0 %v2152
    %2724 = vmatprep.subr.bf16.mxu0 %v2161
    %2725 = vmatpush1.bf16.msra.mxu0 %v2160
    %2726 = vmatprep.subr.bf16.mxu0 %v2169
    %2727 = vmatpush1.bf16.msra.mxu0 %v2168
    %2728 = vmatprep.subr.bf16.mxu0 %v2177
    %2729 = vmatpush1.bf16.msra.mxu0 %v2176
    %2730 = vmatprep.subr.bf16.mxu0 %v2185
    %2731 = vmatpush1.bf16.msra.mxu0 %v2184
    %2732 = vmatprep.subr.bf16.mxu0 %v2193
    %2733 = vmatpush1.bf16.msra.mxu0 %v2192
    %2734 = vmatprep.subr.bf16.mxu0 %v2201
    %2735 = vmatpush1.bf16.msra.mxu0 %v2200
    %2736 = vmatprep.subr.bf16.mxu0 %v2209
    %2737 = vmatpush1.bf16.msra.mxu0 %v2208
    %2738 = vmatprep.mubr.bf16.mxu0 %v648
    %2739 = vmatmul.mubr.bf16.gmra.mrb[0].mxu0 %v647
    %v2740 = vpop.f32.mrb[0].mxu0
    %v2741 = vadd.f32 %v2698, %v2740
    %v2742 = vpop.f32.mrb[0].mxu0
    %v2743 = vadd.f32 %v2700, %v2742
    %v2744 = vpop.f32.mrb[0].mxu0
    %v2745 = vadd.f32 %v2702, %v2744
    %v2746 = vpop.f32.mrb[0].mxu0
    %v2747 = vadd.f32 %v2704, %v2746
    %2748 = vdwg.mxu0
    %2749 = vmatprep.subr.bf16.mxu0 %v2217
    %2750 = vmatpush1.bf16.msra.mxu0 %v2216
    %2751 = vmatprep.subr.bf16.mxu0 0
    %2752 = vmatpush1.bf16.msra.mxu0 0
    %2753 = vmatprep.subr.bf16.mxu0 0
    %2754 = vmatpush1.bf16.msra.mxu0 0
    %2755 = vmatprep.subr.bf16.mxu0 0
    %2756 = vmatpush1.bf16.msra.mxu0 0
    %2757 = vmatprep.subr.bf16.mxu0 0
    %2758 = vmatpush1.bf16.msra.mxu0 0
    %2759 = vmatprep.subr.bf16.mxu0 0
    %2760 = vmatpush1.bf16.msra.mxu0 0
    %2761 = vmatprep.subr.bf16.mxu0 0
    %2762 = vmatpush1.bf16.msra.mxu0 0
    %2763 = vmatprep.subr.bf16.mxu0 0
    %2764 = vmatpush1.bf16.msra.mxu0 0
    %2765 = vmatprep.subr.bf16.mxu0 0
    %2766 = vmatpush1.bf16.msra.mxu0 0
    %2767 = vmatprep.subr.bf16.mxu0 0
    %2768 = vmatpush1.bf16.msra.mxu0 0
    %2769 = vmatprep.subr.bf16.mxu0 0
    %2770 = vmatpush1.bf16.msra.mxu0 0
    %2771 = vmatprep.subr.bf16.mxu0 0
    %2772 = vmatpush1.bf16.msra.mxu0 0
    %2773 = vmatprep.subr.bf16.mxu0 0
    %2774 = vmatpush1.bf16.msra.mxu0 0
    %2775 = vmatprep.subr.bf16.mxu0 0
    %2776 = vmatpush1.bf16.msra.mxu0 0
    %2777 = vmatprep.subr.bf16.mxu0 0
    %2778 = vmatpush1.bf16.msra.mxu0 0
    %2779 = vmatprep.subr.bf16.mxu0 0
    %2780 = vmatpush1.bf16.msra.mxu0 0
    %2781 = vmatprep.mubr.bf16.mxu0 0
    %2782 = vmatmul.mubr.bf16.gmra.mrb[0].mxu0 %v2618
    %v2783 = vpop.f32.mrb[0].mxu0
    %v2784 = vadd.f32 %v2741, %v2783
    %v2785 = vpop.f32.mrb[0].mxu0
    %v2786 = vadd.f32 %v2743, %v2785
    %v2787 = vpop.f32.mrb[0].mxu0
    %v2788 = vadd.f32 %v2745, %v2787
    %v2789 = vpop.f32.mrb[0].mxu0
    %v2790 = vadd.f32 %v2747, %v2789
    %2791 = vdwg.mxu0
    %2792 = vmatprep.subr.bf16.mxu0 %v1835
    %2793 = vmatpush1.bf16.msra.mxu0 %v1834
    %2794 = vmatprep.subr.bf16.mxu0 %v1843
    %2795 = vmatpush1.bf16.msra.mxu0 %v1842
    %2796 = vmatprep.subr.bf16.mxu0 %v1851
    %2797 = vmatpush1.bf16.msra.mxu0 %v1850
    %2798 = vmatprep.subr.bf16.mxu0 %v1859
    %2799 = vmatpush1.bf16.msra.mxu0 %v1858
    %2800 = vmatprep.subr.bf16.mxu0 %v1867
    %2801 = vmatpush1.bf16.msra.mxu0 %v1866
    %2802 = vmatprep.subr.bf16.mxu0 %v1875
    %2803 = vmatpush1.bf16.msra.mxu0 %v1874
    %2804 = vmatprep.subr.bf16.mxu0 %v1883
    %2805 = vmatpush1.bf16.msra.mxu0 %v1882
    %2806 = vmatprep.subr.bf16.mxu0 %v1891
    %2807 = vmatpush1.bf16.msra.mxu0 %v1890
    %2808 = vmatprep.subr.bf16.mxu0 %v1899
    %2809 = vmatpush1.bf16.msra.mxu0 %v1898
    %2810 = vmatprep.subr.bf16.mxu0 %v1907
    %2811 = vmatpush1.bf16.msra.mxu0 %v1906
    %2812 = vmatprep.subr.bf16.mxu0 %v1915
    %2813 = vmatpush1.bf16.msra.mxu0 %v1914
    %2814 = vmatprep.subr.bf16.mxu0 %v1923
    %2815 = vmatpush1.bf16.msra.mxu0 %v1922
    %2816 = vmatprep.subr.bf16.mxu0 %v1931
    %2817 = vmatpush1.bf16.msra.mxu0 %v1930
    %2818 = vmatprep.subr.bf16.mxu0 %v1939
    %2819 = vmatpush1.bf16.msra.mxu0 %v1938
    %2820 = vmatprep.subr.bf16.mxu0 %v1947
    %2821 = vmatpush1.bf16.msra.mxu0 %v1946
    %2822 = vmatprep.subr.bf16.mxu0 %v1955
    %2823 = vmatpush1.bf16.msra.mxu0 %v1954
    %2824 = vmatprep.mubr.bf16.mxu0 %v644
    %2825 = vmatmul.mubr.bf16.gmra.mrb[0].mxu0 %v643
    %v2826 = vpop.f32.mrb[0].mxu0
    %v2827 = vadd.f32 %v592, %v2826
    %v2828 = vpop.f32.mrb[0].mxu0
    %v2829 = vadd.f32 %v596, %v2828
    %v2830 = vpop.f32.mrb[0].mxu0
    %v2831 = vadd.f32 %v592, %v2830
    %v2832 = vpop.f32.mrb[0].mxu0
    %v2833 = vadd.f32 %v596, %v2832
    %2834 = vdwg.mxu0
    %2835 = vmatprep.subr.bf16.mxu0 %v1963
    %2836 = vmatpush1.bf16.msra.mxu0 %v1962
    %2837 = vmatprep.subr.bf16.mxu0 %v1971
    %2838 = vmatpush1.bf16.msra.mxu0 %v1970
    %2839 = vmatprep.subr.bf16.mxu0 %v1979
    %2840 = vmatpush1.bf16.msra.mxu0 %v1978
    %2841 = vmatprep.subr.bf16.mxu0 %v1987
    %2842 = vmatpush1.bf16.msra.mxu0 %v1986
    %2843 = vmatprep.subr.bf16.mxu0 %v1995
    %2844 = vmatpush1.bf16.msra.mxu0 %v1994
    %2845 = vmatprep.subr.bf16.mxu0 %v2003
    %2846 = vmatpush1.bf16.msra.mxu0 %v2002
    %2847 = vmatprep.subr.bf16.mxu0 %v2011
    %2848 = vmatpush1.bf16.msra.mxu0 %v2010
    %2849 = vmatprep.subr.bf16.mxu0 %v2019
    %2850 = vmatpush1.bf16.msra.mxu0 %v2018
    %2851 = vmatprep.subr.bf16.mxu0 %v2027
    %2852 = vmatpush1.bf16.msra.mxu0 %v2026
    %2853 = vmatprep.subr.bf16.mxu0 %v2035
    %2854 = vmatpush1.bf16.msra.mxu0 %v2034
    %2855 = vmatprep.subr.bf16.mxu0 %v2043
    %2856 = vmatpush1.bf16.msra.mxu0 %v2042
    %2857 = vmatprep.subr.bf16.mxu0 %v2051
    %2858 = vmatpush1.bf16.msra.mxu0 %v2050
    %2859 = vmatprep.subr.bf16.mxu0 %v2059
    %2860 = vmatpush1.bf16.msra.mxu0 %v2058
    %2861 = vmatprep.subr.bf16.mxu0 %v2067
    %2862 = vmatpush1.bf16.msra.mxu0 %v2066
    %2863 = vmatprep.subr.bf16.mxu0 %v2075
    %2864 = vmatpush1.bf16.msra.mxu0 %v2074
    %2865 = vmatprep.subr.bf16.mxu0 %v2083
    %2866 = vmatpush1.bf16.msra.mxu0 %v2082
    %2867 = vmatprep.mubr.bf16.mxu0 %v646
    %2868 = vmatmul.mubr.bf16.gmra.mrb[0].mxu0 %v645
    %v2869 = vpop.f32.mrb[0].mxu0
    %v2870 = vadd.f32 %v2827, %v2869
    %v2871 = vpop.f32.mrb[0].mxu0
    %v2872 = vadd.f32 %v2829, %v2871
    %v2873 = vpop.f32.mrb[0].mxu0
    %v2874 = vadd.f32 %v2831, %v2873
    %v2875 = vpop.f32.mrb[0].mxu0
    %v2876 = vadd.f32 %v2833, %v2875
    %2877 = vdwg.mxu0
    %2878 = vmatprep.subr.bf16.mxu0 %v2091
    %2879 = vmatpush1.bf16.msra.mxu0 %v2090
    %2880 = vmatprep.subr.bf16.mxu0 %v2099
    %2881 = vmatpush1.bf16.msra.mxu0 %v2098
    %2882 = vmatprep.subr.bf16.mxu0 %v2107
    %2883 = vmatpush1.bf16.msra.mxu0 %v2106
    %2884 = vmatprep.subr.bf16.mxu0 %v2115
    %2885 = vmatpush1.bf16.msra.mxu0 %v2114
    %2886 = vmatprep.subr.bf16.mxu0 %v2123
    %2887 = vmatpush1.bf16.msra.mxu0 %v2122
    %2888 = vmatprep.subr.bf16.mxu0 %v2131
    %2889 = vmatpush1.bf16.msra.mxu0 %v2130
    %2890 = vmatprep.subr.bf16.mxu0 %v2139
    %2891 = vmatpush1.bf16.msra.mxu0 %v2138
    %2892 = vmatprep.subr.bf16.mxu0 %v2147
    %2893 = vmatpush1.bf16.msra.mxu0 %v2146
    %2894 = vmatprep.subr.bf16.mxu0 %v2155
    %2895 = vmatpush1.bf16.msra.mxu0 %v2154
    %2896 = vmatprep.subr.bf16.mxu0 %v2163
    %2897 = vmatpush1.bf16.msra.mxu0 %v2162
    %2898 = vmatprep.subr.bf16.mxu0 %v2171
    %2899 = vmatpush1.bf16.msra.mxu0 %v2170
    %2900 = vmatprep.subr.bf16.mxu0 %v2179
    %2901 = vmatpush1.bf16.msra.mxu0 %v2178
    %2902 = vmatprep.subr.bf16.mxu0 %v2187
    %2903 = vmatpush1.bf16.msra.mxu0 %v2186
    %2904 = vmatprep.subr.bf16.mxu0 %v2195
    %2905 = vmatpush1.bf16.msra.mxu0 %v2194
    %2906 = vmatprep.subr.bf16.mxu0 %v2203
    %2907 = vmatpush1.bf16.msra.mxu0 %v2202
    %2908 = vmatprep.subr.bf16.mxu0 %v2211
    %2909 = vmatpush1.bf16.msra.mxu0 %v2210
    %2910 = vmatprep.mubr.bf16.mxu0 %v648
    %2911 = vmatmul.mubr.bf16.gmra.mrb[0].mxu0 %v647
    %v2912 = vpop.f32.mrb[0].mxu0
    %v2913 = vadd.f32 %v2870, %v2912
    %v2914 = vpop.f32.mrb[0].mxu0
    %v2915 = vadd.f32 %v2872, %v2914
    %v2916 = vpop.f32.mrb[0].mxu0
    %v2917 = vadd.f32 %v2874, %v2916
    %v2918 = vpop.f32.mrb[0].mxu0
    %v2919 = vadd.f32 %v2876, %v2918
    %2920 = vdwg.mxu0
    %2921 = vmatprep.subr.bf16.mxu0 %v2219
    %2922 = vmatpush1.bf16.msra.mxu0 %v2218
    %2923 = vmatprep.subr.bf16.mxu0 0
    %2924 = vmatpush1.bf16.msra.mxu0 0
    %2925 = vmatprep.subr.bf16.mxu0 0
    %2926 = vmatpush1.bf16.msra.mxu0 0
    %2927 = vmatprep.subr.bf16.mxu0 0
    %2928 = vmatpush1.bf16.msra.mxu0 0
    %2929 = vmatprep.subr.bf16.mxu0 0
    %2930 = vmatpush1.bf16.msra.mxu0 0
    %2931 = vmatprep.subr.bf16.mxu0 0
    %2932 = vmatpush1.bf16.msra.mxu0 0
    %2933 = vmatprep.subr.bf16.mxu0 0
    %2934 = vmatpush1.bf16.msra.mxu0 0
    %2935 = vmatprep.subr.bf16.mxu0 0
    %2936 = vmatpush1.bf16.msra.mxu0 0
    %2937 = vmatprep.subr.bf16.mxu0 0
    %2938 = vmatpush1.bf16.msra.mxu0 0
    %2939 = vmatprep.subr.bf16.mxu0 0
    %2940 = vmatpush1.bf16.msra.mxu0 0
    %2941 = vmatprep.subr.bf16.mxu0 0
    %2942 = vmatpush1.bf16.msra.mxu0 0
    %2943 = vmatprep.subr.bf16.mxu0 0
    %2944 = vmatpush1.bf16.msra.mxu0 0
    %2945 = vmatprep.subr.bf16.mxu0 0
    %2946 = vmatpush1.bf16.msra.mxu0 0
    %2947 = vmatprep.subr.bf16.mxu0 0
    %2948 = vmatpush1.bf16.msra.mxu0 0
    %2949 = vmatprep.subr.bf16.mxu0 0
    %2950 = vmatpush1.bf16.msra.mxu0 0
    %2951 = vmatprep.subr.bf16.mxu0 0
    %2952 = vmatpush1.bf16.msra.mxu0 0
    %2953 = vmatprep.mubr.bf16.mxu0 0
    %2954 = vmatmul.mubr.bf16.gmra.mrb[0].mxu0 %v2618
    %v2955 = vpop.f32.mrb[0].mxu0
    %v2956 = vadd.f32 %v2913, %v2955
    %v2957 = vpop.f32.mrb[0].mxu0
    %v2958 = vadd.f32 %v2915, %v2957
    %v2959 = vpop.f32.mrb[0].mxu0
    %v2960 = vadd.f32 %v2917, %v2959
    %v2961 = vpop.f32.mrb[0].mxu0
    %v2962 = vadd.f32 %v2919, %v2961
    %2963 = vdwg.mxu0
    %2964 = vmatprep.subr.bf16.mxu0 %v1837
    %2965 = vmatpush1.bf16.msra.mxu0 %v1836
    %2966 = vmatprep.subr.bf16.mxu0 %v1845
    %2967 = vmatpush1.bf16.msra.mxu0 %v1844
    %2968 = vmatprep.subr.bf16.mxu0 %v1853
    %2969 = vmatpush1.bf16.msra.mxu0 %v1852
    %2970 = vmatprep.subr.bf16.mxu0 %v1861
    %2971 = vmatpush1.bf16.msra.mxu0 %v1860
    %2972 = vmatprep.subr.bf16.mxu0 %v1869
    %2973 = vmatpush1.bf16.msra.mxu0 %v1868
    %2974 = vmatprep.subr.bf16.mxu0 %v1877
    %2975 = vmatpush1.bf16.msra.mxu0 %v1876
    %2976 = vmatprep.subr.bf16.mxu0 %v1885
    %2977 = vmatpush1.bf16.msra.mxu0 %v1884
    %2978 = vmatprep.subr.bf16.mxu0 %v1893
    %2979 = vmatpush1.bf16.msra.mxu0 %v1892
    %2980 = vmatprep.subr.bf16.mxu0 %v1901
    %2981 = vmatpush1.bf16.msra.mxu0 %v1900
    %2982 = vmatprep.subr.bf16.mxu0 %v1909
    %2983 = vmatpush1.bf16.msra.mxu0 %v1908
    %2984 = vmatprep.subr.bf16.mxu0 %v1917
    %2985 = vmatpush1.bf16.msra.mxu0 %v1916
    %2986 = vmatprep.subr.bf16.mxu0 %v1925
    %2987 = vmatpush1.bf16.msra.mxu0 %v1924
    %2988 = vmatprep.subr.bf16.mxu0 %v1933
    %2989 = vmatpush1.bf16.msra.mxu0 %v1932
    %2990 = vmatprep.subr.bf16.mxu0 %v1941
    %2991 = vmatpush1.bf16.msra.mxu0 %v1940
    %2992 = vmatprep.subr.bf16.mxu0 %v1949
    %2993 = vmatpush1.bf16.msra.mxu0 %v1948
    %2994 = vmatprep.subr.bf16.mxu0 %v1957
    %2995 = vmatpush1.bf16.msra.mxu0 %v1956
    %2996 = vmatprep.mubr.bf16.mxu0 %v644
    %2997 = vmatmul.mubr.bf16.gmra.mrb[0].mxu0 %v643
    %v2998 = vpop.f32.mrb[0].mxu0
    %v2999 = vadd.f32 %v600, %v2998
    %v3000 = vpop.f32.mrb[0].mxu0
    %v3001 = vadd.f32 %v604, %v3000
    %v3002 = vpop.f32.mrb[0].mxu0
    %v3003 = vadd.f32 %v600, %v3002
    %v3004 = vpop.f32.mrb[0].mxu0
    %v3005 = vadd.f32 %v604, %v3004
    %3006 = vdwg.mxu0
    %3007 = vmatprep.subr.bf16.mxu0 %v1965
    %3008 = vmatpush1.bf16.msra.mxu0 %v1964
    %3009 = vmatprep.subr.bf16.mxu0 %v1973
    %3010 = vmatpush1.bf16.msra.mxu0 %v1972
    %3011 = vmatprep.subr.bf16.mxu0 %v1981
    %3012 = vmatpush1.bf16.msra.mxu0 %v1980
    %3013 = vmatprep.subr.bf16.mxu0 %v1989
    %3014 = vmatpush1.bf16.msra.mxu0 %v1988
    %3015 = vmatprep.subr.bf16.mxu0 %v1997
    %3016 = vmatpush1.bf16.msra.mxu0 %v1996
    %3017 = vmatprep.subr.bf16.mxu0 %v2005
    %3018 = vmatpush1.bf16.msra.mxu0 %v2004
    %3019 = vmatprep.subr.bf16.mxu0 %v2013
    %3020 = vmatpush1.bf16.msra.mxu0 %v2012
    %3021 = vmatprep.subr.bf16.mxu0 %v2021
    %3022 = vmatpush1.bf16.msra.mxu0 %v2020
    %3023 = vmatprep.subr.bf16.mxu0 %v2029
    %3024 = vmatpush1.bf16.msra.mxu0 %v2028
    %3025 = vmatprep.subr.bf16.mxu0 %v2037
    %3026 = vmatpush1.bf16.msra.mxu0 %v2036
    %3027 = vmatprep.subr.bf16.mxu0 %v2045
    %3028 = vmatpush1.bf16.msra.mxu0 %v2044
    %3029 = vmatprep.subr.bf16.mxu0 %v2053
    %3030 = vmatpush1.bf16.msra.mxu0 %v2052
    %3031 = vmatprep.subr.bf16.mxu0 %v2061
    %3032 = vmatpush1.bf16.msra.mxu0 %v2060
    %3033 = vmatprep.subr.bf16.mxu0 %v2069
    %3034 = vmatpush1.bf16.msra.mxu0 %v2068
    %3035 = vmatprep.subr.bf16.mxu0 %v2077
    %3036 = vmatpush1.bf16.msra.mxu0 %v2076
    %3037 = vmatprep.subr.bf16.mxu0 %v2085
    %3038 = vmatpush1.bf16.msra.mxu0 %v2084
    %3039 = vmatprep.mubr.bf16.mxu0 %v646
    %3040 = vmatmul.mubr.bf16.gmra.mrb[0].mxu0 %v645
    %v3041 = vpop.f32.mrb[0].mxu0
    %v3042 = vadd.f32 %v2999, %v3041
    %v3043 = vpop.f32.mrb[0].mxu0
    %v3044 = vadd.f32 %v3001, %v3043
    %v3045 = vpop.f32.mrb[0].mxu0
    %v3046 = vadd.f32 %v3003, %v3045
    %v3047 = vpop.f32.mrb[0].mxu0
    %v3048 = vadd.f32 %v3005, %v3047
    %3049 = vdwg.mxu0
    %3050 = vmatprep.subr.bf16.mxu0 %v2093
    %3051 = vmatpush1.bf16.msra.mxu0 %v2092
    %3052 = vmatprep.subr.bf16.mxu0 %v2101
    %3053 = vmatpush1.bf16.msra.mxu0 %v2100
    %3054 = vmatprep.subr.bf16.mxu0 %v2109
    %3055 = vmatpush1.bf16.msra.mxu0 %v2108
    %3056 = vmatprep.subr.bf16.mxu0 %v2117
    %3057 = vmatpush1.bf16.msra.mxu0 %v2116
    %3058 = vmatprep.subr.bf16.mxu0 %v2125
    %3059 = vmatpush1.bf16.msra.mxu0 %v2124
    %3060 = vmatprep.subr.bf16.mxu0 %v2133
    %3061 = vmatpush1.bf16.msra.mxu0 %v2132
    %3062 = vmatprep.subr.bf16.mxu0 %v2141
    %3063 = vmatpush1.bf16.msra.mxu0 %v2140
    %3064 = vmatprep.subr.bf16.mxu0 %v2149
    %3065 = vmatpush1.bf16.msra.mxu0 %v2148
    %3066 = vmatprep.subr.bf16.mxu0 %v2157
    %3067 = vmatpush1.bf16.msra.mxu0 %v2156
    %3068 = vmatprep.subr.bf16.mxu0 %v2165
    %3069 = vmatpush1.bf16.msra.mxu0 %v2164
    %3070 = vmatprep.subr.bf16.mxu0 %v2173
    %3071 = vmatpush1.bf16.msra.mxu0 %v2172
    %3072 = vmatprep.subr.bf16.mxu0 %v2181
    %3073 = vmatpush1.bf16.msra.mxu0 %v2180
    %3074 = vmatprep.subr.bf16.mxu0 %v2189
    %3075 = vmatpush1.bf16.msra.mxu0 %v2188
    %3076 = vmatprep.subr.bf16.mxu0 %v2197
    %3077 = vmatpush1.bf16.msra.mxu0 %v2196
    %3078 = vmatprep.subr.bf16.mxu0 %v2205
    %3079 = vmatpush1.bf16.msra.mxu0 %v2204
    %3080 = vmatprep.subr.bf16.mxu0 %v2213
    %3081 = vmatpush1.bf16.msra.mxu0 %v2212
    %3082 = vmatprep.mubr.bf16.mxu0 %v648
    %3083 = vmatmul.mubr.bf16.gmra.mrb[0].mxu0 %v647
    %v3084 = vpop.f32.mrb[0].mxu0
    %v3085 = vadd.f32 %v3042, %v3084
    %v3086 = vpop.f32.mrb[0].mxu0
    %v3087 = vadd.f32 %v3044, %v3086
    %v3088 = vpop.f32.mrb[0].mxu0
    %v3089 = vadd.f32 %v3046, %v3088
    %v3090 = vpop.f32.mrb[0].mxu0
    %v3091 = vadd.f32 %v3048, %v3090
    %3092 = vdwg.mxu0
    %3093 = vmatprep.subr.bf16.mxu0 %v2221
    %3094 = vmatpush1.bf16.msra.mxu0 %v2220
    %3095 = vmatprep.subr.bf16.mxu0 0
    %3096 = vmatpush1.bf16.msra.mxu0 0
    %3097 = vmatprep.subr.bf16.mxu0 0
    %3098 = vmatpush1.bf16.msra.mxu0 0
    %3099 = vmatprep.subr.bf16.mxu0 0
    %3100 = vmatpush1.bf16.msra.mxu0 0
    %3101 = vmatprep.subr.bf16.mxu0 0
    %3102 = vmatpush1.bf16.msra.mxu0 0
    %3103 = vmatprep.subr.bf16.mxu0 0
    %3104 = vmatpush1.bf16.msra.mxu0 0
    %3105 = vmatprep.subr.bf16.mxu0 0
    %3106 = vmatpush1.bf16.msra.mxu0 0
    %3107 = vmatprep.subr.bf16.mxu0 0
    %3108 = vmatpush1.bf16.msra.mxu0 0
    %3109 = vmatprep.subr.bf16.mxu0 0
    %3110 = vmatpush1.bf16.msra.mxu0 0
    %3111 = vmatprep.subr.bf16.mxu0 0
    %3112 = vmatpush1.bf16.msra.mxu0 0
    %3113 = vmatprep.subr.bf16.mxu0 0
    %3114 = vmatpush1.bf16.msra.mxu0 0
    %3115 = vmatprep.subr.bf16.mxu0 0
    %3116 = vmatpush1.bf16.msra.mxu0 0
    %3117 = vmatprep.subr.bf16.mxu0 0
    %3118 = vmatpush1.bf16.msra.mxu0 0
    %3119 = vmatprep.subr.bf16.mxu0 0
    %3120 = vmatpush1.bf16.msra.mxu0 0
    %3121 = vmatprep.subr.bf16.mxu0 0
    %3122 = vmatpush1.bf16.msra.mxu0 0
    %3123 = vmatprep.subr.bf16.mxu0 0
    %3124 = vmatpush1.bf16.msra.mxu0 0
    %3125 = vmatprep.mubr.bf16.mxu0 0
    %3126 = vmatmul.mubr.bf16.gmra.mrb[0].mxu0 %v2618
    %v3127 = vpop.f32.mrb[0].mxu0
    %v3128 = vadd.f32 %v3085, %v3127
    %v3129 = vpop.f32.mrb[0].mxu0
    %v3130 = vadd.f32 %v3087, %v3129
    %v3131 = vpop.f32.mrb[0].mxu0
    %v3132 = vadd.f32 %v3089, %v3131
    %v3133 = vpop.f32.mrb[0].mxu0
    %v3134 = vadd.f32 %v3091, %v3133
    %3135 = vdwg.mxu0
    %3136 = vmatprep.subr.bf16.mxu0 %v1839
    %3137 = vmatpush1.bf16.msra.mxu0 %v1838
    %3138 = vmatprep.subr.bf16.mxu0 %v1847
    %3139 = vmatpush1.bf16.msra.mxu0 %v1846
    %3140 = vmatprep.subr.bf16.mxu0 %v1855
    %3141 = vmatpush1.bf16.msra.mxu0 %v1854
    %3142 = vmatprep.subr.bf16.mxu0 %v1863
    %3143 = vmatpush1.bf16.msra.mxu0 %v1862
    %3144 = vmatprep.subr.bf16.mxu0 %v1871
    %3145 = vmatpush1.bf16.msra.mxu0 %v1870
    %3146 = vmatprep.subr.bf16.mxu0 %v1879
    %3147 = vmatpush1.bf16.msra.mxu0 %v1878
    %3148 = vmatprep.subr.bf16.mxu0 %v1887
    %3149 = vmatpush1.bf16.msra.mxu0 %v1886
    %3150 = vmatprep.subr.bf16.mxu0 %v1895
    %3151 = vmatpush1.bf16.msra.mxu0 %v1894
    %3152 = vmatprep.subr.bf16.mxu0 %v1903
    %3153 = vmatpush1.bf16.msra.mxu0 %v1902
    %3154 = vmatprep.subr.bf16.mxu0 %v1911
    %3155 = vmatpush1.bf16.msra.mxu0 %v1910
    %3156 = vmatprep.subr.bf16.mxu0 %v1919
    %3157 = vmatpush1.bf16.msra.mxu0 %v1918
    %3158 = vmatprep.subr.bf16.mxu0 %v1927
    %3159 = vmatpush1.bf16.msra.mxu0 %v1926
    %3160 = vmatprep.subr.bf16.mxu0 %v1935
    %3161 = vmatpush1.bf16.msra.mxu0 %v1934
    %3162 = vmatprep.subr.bf16.mxu0 %v1943
    %3163 = vmatpush1.bf16.msra.mxu0 %v1942
    %3164 = vmatprep.subr.bf16.mxu0 %v1951
    %3165 = vmatpush1.bf16.msra.mxu0 %v1950
    %3166 = vmatprep.subr.bf16.mxu0 %v1959
    %3167 = vmatpush1.bf16.msra.mxu0 %v1958
    %3168 = vmatprep.mubr.bf16.mxu0 %v644
    %3169 = vmatmul.mubr.bf16.gmra.mrb[0].mxu0 %v643
    %v3170 = vpop.f32.mrb[0].mxu0
    %v3171 = vadd.f32 %v608, %v3170
    %v3172 = vpop.f32.mrb[0].mxu0
    %v3173 = vadd.f32 %v612, %v3172
    %v3174 = vpop.f32.mrb[0].mxu0
    %v3175 = vadd.f32 %v608, %v3174
    %v3176 = vpop.f32.mrb[0].mxu0
    %v3177 = vadd.f32 %v612, %v3176
    %3178 = vdwg.mxu0
    %3179 = vmatprep.subr.bf16.mxu0 %v1967
    %3180 = vmatpush1.bf16.msra.mxu0 %v1966
    %3181 = vmatprep.subr.bf16.mxu0 %v1975
    %3182 = vmatpush1.bf16.msra.mxu0 %v1974
    %3183 = vmatprep.subr.bf16.mxu0 %v1983
    %3184 = vmatpush1.bf16.msra.mxu0 %v1982
    %3185 = vmatprep.subr.bf16.mxu0 %v1991
    %3186 = vmatpush1.bf16.msra.mxu0 %v1990
    %3187 = vmatprep.subr.bf16.mxu0 %v1999
    %3188 = vmatpush1.bf16.msra.mxu0 %v1998
    %3189 = vmatprep.subr.bf16.mxu0 %v2007
    %3190 = vmatpush1.bf16.msra.mxu0 %v2006
    %3191 = vmatprep.subr.bf16.mxu0 %v2015
    %3192 = vmatpush1.bf16.msra.mxu0 %v2014
    %3193 = vmatprep.subr.bf16.mxu0 %v2023
    %3194 = vmatpush1.bf16.msra.mxu0 %v2022
    %3195 = vmatprep.subr.bf16.mxu0 %v2031
    %3196 = vmatpush1.bf16.msra.mxu0 %v2030
    %3197 = vmatprep.subr.bf16.mxu0 %v2039
    %3198 = vmatpush1.bf16.msra.mxu0 %v2038
    %3199 = vmatprep.subr.bf16.mxu0 %v2047
    %3200 = vmatpush1.bf16.msra.mxu0 %v2046
    %3201 = vmatprep.subr.bf16.mxu0 %v2055
    %3202 = vmatpush1.bf16.msra.mxu0 %v2054
    %3203 = vmatprep.subr.bf16.mxu0 %v2063
    %3204 = vmatpush1.bf16.msra.mxu0 %v2062
    %3205 = vmatprep.subr.bf16.mxu0 %v2071
    %3206 = vmatpush1.bf16.msra.mxu0 %v2070
    %3207 = vmatprep.subr.bf16.mxu0 %v2079
    %3208 = vmatpush1.bf16.msra.mxu0 %v2078
    %3209 = vmatprep.subr.bf16.mxu0 %v2087
    %3210 = vmatpush1.bf16.msra.mxu0 %v2086
    %3211 = vmatprep.mubr.bf16.mxu0 %v646
    %3212 = vmatmul.mubr.bf16.gmra.mrb[0].mxu0 %v645
    %v3213 = vpop.f32.mrb[0].mxu0
    %v3214 = vadd.f32 %v3171, %v3213
    %v3215 = vpop.f32.mrb[0].mxu0
    %v3216 = vadd.f32 %v3173, %v3215
    %v3217 = vpop.f32.mrb[0].mxu0
    %v3218 = vadd.f32 %v3175, %v3217
    %v3219 = vpop.f32.mrb[0].mxu0
    %v3220 = vadd.f32 %v3177, %v3219
    %3221 = vdwg.mxu0
    %3222 = vmatprep.subr.bf16.mxu0 %v2095
    %3223 = vmatpush1.bf16.msra.mxu0 %v2094
    %3224 = vmatprep.subr.bf16.mxu0 %v2103
    %3225 = vmatpush1.bf16.msra.mxu0 %v2102
    %3226 = vmatprep.subr.bf16.mxu0 %v2111
    %3227 = vmatpush1.bf16.msra.mxu0 %v2110
    %3228 = vmatprep.subr.bf16.mxu0 %v2119
    %3229 = vmatpush1.bf16.msra.mxu0 %v2118
    %3230 = vmatprep.subr.bf16.mxu0 %v2127
    %3231 = vmatpush1.bf16.msra.mxu0 %v2126
    %3232 = vmatprep.subr.bf16.mxu0 %v2135
    %3233 = vmatpush1.bf16.msra.mxu0 %v2134
    %3234 = vmatprep.subr.bf16.mxu0 %v2143
    %3235 = vmatpush1.bf16.msra.mxu0 %v2142
    %3236 = vmatprep.subr.bf16.mxu0 %v2151
    %3237 = vmatpush1.bf16.msra.mxu0 %v2150
    %3238 = vmatprep.subr.bf16.mxu0 %v2159
    %3239 = vmatpush1.bf16.msra.mxu0 %v2158
    %3240 = vmatprep.subr.bf16.mxu0 %v2167
    %3241 = vmatpush1.bf16.msra.mxu0 %v2166
    %3242 = vmatprep.subr.bf16.mxu0 %v2175
    %3243 = vmatpush1.bf16.msra.mxu0 %v2174
    %3244 = vmatprep.subr.bf16.mxu0 %v2183
    %3245 = vmatpush1.bf16.msra.mxu0 %v2182
    %3246 = vmatprep.subr.bf16.mxu0 %v2191
    %3247 = vmatpush1.bf16.msra.mxu0 %v2190
    %3248 = vmatprep.subr.bf16.mxu0 %v2199
    %3249 = vmatpush1.bf16.msra.mxu0 %v2198
    %3250 = vmatprep.subr.bf16.mxu0 %v2207
    %3251 = vmatpush1.bf16.msra.mxu0 %v2206
    %3252 = vmatprep.subr.bf16.mxu0 %v2215
    %3253 = vmatpush1.bf16.msra.mxu0 %v2214
    %3254 = vmatprep.mubr.bf16.mxu0 %v648
    %3255 = vmatmul.mubr.bf16.gmra.mrb[0].mxu0 %v647
    %v3256 = vpop.f32.mrb[0].mxu0
    %v3257 = vadd.f32 %v3214, %v3256
    %v3258 = vpop.f32.mrb[0].mxu0
    %v3259 = vadd.f32 %v3216, %v3258
    %v3260 = vpop.f32.mrb[0].mxu0
    %v3261 = vadd.f32 %v3218, %v3260
    %v3262 = vpop.f32.mrb[0].mxu0
    %v3263 = vadd.f32 %v3220, %v3262
    %3264 = vdwg.mxu0
    %3265 = vmatprep.subr.bf16.mxu0 %v2223
    %3266 = vmatpush1.bf16.msra.mxu0 %v2222
    %3267 = vmatprep.subr.bf16.mxu0 0
    %3268 = vmatpush1.bf16.msra.mxu0 0
    %3269 = vmatprep.subr.bf16.mxu0 0
    %3270 = vmatpush1.bf16.msra.mxu0 0
    %3271 = vmatprep.subr.bf16.mxu0 0
    %3272 = vmatpush1.bf16.msra.mxu0 0
    %3273 = vmatprep.subr.bf16.mxu0 0
    %3274 = vmatpush1.bf16.msra.mxu0 0
    %3275 = vmatprep.subr.bf16.mxu0 0
    %3276 = vmatpush1.bf16.msra.mxu0 0
    %3277 = vmatprep.subr.bf16.mxu0 0
    %3278 = vmatpush1.bf16.msra.mxu0 0
    %3279 = vmatprep.subr.bf16.mxu0 0
    %3280 = vmatpush1.bf16.msra.mxu0 0
    %3281 = vmatprep.subr.bf16.mxu0 0
    %3282 = vmatpush1.bf16.msra.mxu0 0
    %3283 = vmatprep.subr.bf16.mxu0 0
    %3284 = vmatpush1.bf16.msra.mxu0 0
    %3285 = vmatprep.subr.bf16.mxu0 0
    %3286 = vmatpush1.bf16.msra.mxu0 0
    %3287 = vmatprep.subr.bf16.mxu0 0
    %3288 = vmatpush1.bf16.msra.mxu0 0
    %3289 = vmatprep.subr.bf16.mxu0 0
    %3290 = vmatpush1.bf16.msra.mxu0 0
    %3291 = vmatprep.subr.bf16.mxu0 0
    %3292 = vmatpush1.bf16.msra.mxu0 0
    %3293 = vmatprep.subr.bf16.mxu0 0
    %3294 = vmatpush1.bf16.msra.mxu0 0
    %3295 = vmatprep.subr.bf16.mxu0 0
    %3296 = vmatpush1.bf16.msra.mxu0 0
    %3297 = vmatprep.mubr.bf16.mxu0 0
    %3298 = vmatmul.mubr.bf16.gmra.mrb[0].mxu0 %v2618
    %v3299 = vpop.f32.mrb[0].mxu0
    %v3300 = vadd.f32 %v3257, %v3299
    %v3301 = vpop.f32.mrb[0].mxu0
    %v3302 = vadd.f32 %v3259, %v3301
    %v3303 = vpop.f32.mrb[0].mxu0
    %v3304 = vadd.f32 %v3261, %v3303
    %v3305 = vpop.f32.mrb[0].mxu0
    %v3306 = vadd.f32 %v3263, %v3305
    %3307 = vdwg.mxu0
    %v3308 = vmul.f32 %v2784, 0.1
    %v3309 = vmul.f32 %v2786, 0.1
    %v3310 = vmul.f32 %v2956, 0.1
    %v3311 = vmul.f32 %v2958, 0.1
    %v3312 = vmul.f32 %v3128, 0.1
    %v3313 = vmul.f32 %v3130, 0.1
    %v3314 = vmul.f32 %v3300, 0.1
    %v3315 = vmul.f32 %v3302, 0.1
    %v3316 = vmul.f32 %v2788, 0.1
    %v3317 = vmul.f32 %v2790, 0.1
    %v3318 = vmul.f32 %v2960, 0.1
    %v3319 = vmul.f32 %v2962, 0.1
    %v3320 = vmul.f32 %v3132, 0.1
    %v3321 = vmul.f32 %v3134, 0.1
    %v3322 = vmul.f32 %v3304, 0.1
    %v3323 = vmul.f32 %v3306, 0.1
    %v3324 = vmax.f32 %v2784, %v3308
    %v3325 = vmax.f32 %v2786, %v3309
    %v3326 = vmax.f32 %v2956, %v3310
    %v3327 = vmax.f32 %v2958, %v3311
    %v3328 = vmax.f32 %v3128, %v3312
    %v3329 = vmax.f32 %v3130, %v3313
    %v3330 = vmax.f32 %v3300, %v3314
    %v3331 = vmax.f32 %v3302, %v3315
    %v3332 = vmax.f32 %v2788, %v3316
    %v3333 = vmax.f32 %v2790, %v3317
    %v3334 = vmax.f32 %v2960, %v3318
    %v3335 = vmax.f32 %v2962, %v3319
    %v3336 = vmax.f32 %v3132, %v3320
    %v3337 = vmax.f32 %v3134, %v3321
    %v3338 = vmax.f32 %v3304, %v3322
    %v3339 = vmax.f32 %v3306, %v3323
    %v3340 = vpack.c.bf16 %v3332, %v3324
    %v3341 = vpack.c.bf16 %v3333, %v3325
    %v3342 = vpack.c.bf16 %v3334, %v3326
    %v3343 = vpack.c.bf16 %v3335, %v3327
    %v3344 = vpack.c.bf16 %v3336, %v3328
    %v3345 = vpack.c.bf16 %v3337, %v3329
    %v3346 = vpack.c.bf16 %v3338, %v3330
    %v3347 = vpack.c.bf16 %v3339, %v3331
    %v3348 = vld [vmem:[#allocation8] sm:$0xf]
    %v3349 = vld [vmem:[#allocation8 + $0x4] sm:$0xf]
    %v3350 = vld [vmem:[#allocation8 + $0x8] sm:$0xf]
    %v3351 = vld [vmem:[#allocation8 + $0xc] sm:$0xf]
    %v3352 = vld [vmem:[#allocation8 + $0x10] sm:$0xf]
    %v3353 = vld [vmem:[#allocation8 + $0x14] sm:$0xf]
    %v3354 = vld [vmem:[#allocation8 + $0x18] sm:$0xf]
    %v3355 = vld [vmem:[#allocation8 + $0x1c] sm:$0xf]
    %v3356 = vld [vmem:[#allocation8 + $0x20] sm:$0xf]
    %v3357 = vld [vmem:[#allocation8 + $0x24] sm:$0xf]
    %v3358 = vld [vmem:[#allocation8 + $0x28] sm:$0xf]
    %v3359 = vld [vmem:[#allocation8 + $0x2c] sm:$0xf]
    %v3360 = vld [vmem:[#allocation8 + $0x30] sm:$0xf]
    %v3361 = vld [vmem:[#allocation8 + $0x34] sm:$0xf]
    %v3362 = vld [vmem:[#allocation8 + $0x38] sm:$0xf]
    %v3363 = vld [vmem:[#allocation8 + $0x3c] sm:$0xf]
    %v3364 = vld [vmem:[#allocation8 + $0x40] sm:$0xf]
    %v3365 = vld [vmem:[#allocation8 + $0x44] sm:$0xf]
    %v3366 = vld [vmem:[#allocation8 + $0x48] sm:$0xf]
    %v3367 = vld [vmem:[#allocation8 + $0x4c] sm:$0xf]
    %v3368 = vld [vmem:[#allocation8 + $0x50] sm:$0xf]
    %v3369 = vld [vmem:[#allocation8 + $0x54] sm:$0xf]
    %v3370 = vld [vmem:[#allocation8 + $0x58] sm:$0xf]
    %v3371 = vld [vmem:[#allocation8 + $0x5c] sm:$0xf]
    %v3372 = vld [vmem:[#allocation8 + $0x60] sm:$0xf]
    %v3373 = vld [vmem:[#allocation8 + $0x64] sm:$0xf]
    %v3374 = vld [vmem:[#allocation8 + $0x68] sm:$0xf]
    %v3375 = vld [vmem:[#allocation8 + $0x6c] sm:$0xf]
    %v3376 = vld [vmem:[#allocation8 + $0x70] sm:$0xf]
    %v3377 = vld [vmem:[#allocation8 + $0x74] sm:$0xf]
    %v3378 = vld [vmem:[#allocation8 + $0x78] sm:$0xf]
    %v3379 = vld [vmem:[#allocation8 + $0x7c] sm:$0xf]
    %v3380 = vld [vmem:[#allocation8 + $0x80] sm:$0xf]
    %v3381 = vld [vmem:[#allocation8 + $0x84] sm:$0xf]
    %v3382 = vld [vmem:[#allocation8 + $0x88] sm:$0xf]
    %v3383 = vld [vmem:[#allocation8 + $0x8c] sm:$0xf]
    %v3384 = vld [vmem:[#allocation8 + $0x90] sm:$0xf]
    %v3385 = vld [vmem:[#allocation8 + $0x94] sm:$0xf]
    %v3386 = vld [vmem:[#allocation8 + $0x98] sm:$0xf]
    %v3387 = vld [vmem:[#allocation8 + $0x9c] sm:$0xf]
    %v3388 = vld [vmem:[#allocation8 + $0xa0] sm:$0xf]
    %v3389 = vld [vmem:[#allocation8 + $0xa4] sm:$0xf]
    %v3390 = vld [vmem:[#allocation8 + $0xa8] sm:$0xf]
    %v3391 = vld [vmem:[#allocation8 + $0xac] sm:$0xf]
    %v3392 = vld [vmem:[#allocation8 + $0xb0] sm:$0xf]
    %v3393 = vld [vmem:[#allocation8 + $0xb4] sm:$0xf]
    %v3394 = vld [vmem:[#allocation8 + $0xb8] sm:$0xf]
    %v3395 = vld [vmem:[#allocation8 + $0xbc] sm:$0xf]
    %v3396 = vld [vmem:[#allocation8 + $0xc0] sm:$0xf]
    %v3397 = vld [vmem:[#allocation8 + $0xc4] sm:$0xf]
    %v3398 = vld [vmem:[#allocation8 + $0xc8] sm:$0xf]
    %v3399 = vld [vmem:[#allocation8 + $0xcc] sm:$0xf]
    %v3400 = vld [vmem:[#allocation8 + $0xd0] sm:$0xf]
    %v3401 = vld [vmem:[#allocation8 + $0xd4] sm:$0xf]
    %v3402 = vld [vmem:[#allocation8 + $0xd8] sm:$0xf]
    %v3403 = vld [vmem:[#allocation8 + $0xdc] sm:$0xf]
    %v3404 = vld [vmem:[#allocation8 + $0xe0] sm:$0xf]
    %v3405 = vld [vmem:[#allocation8 + $0xe4] sm:$0xf]
    %v3406 = vld [vmem:[#allocation8 + $0xe8] sm:$0xf]
    %v3407 = vld [vmem:[#allocation8 + $0xec] sm:$0xf]
    %v3408 = vld [vmem:[#allocation8 + $0xf0] sm:$0xf]
    %v3409 = vld [vmem:[#allocation8 + $0xf4] sm:$0xf]
    %v3410 = vld [vmem:[#allocation8 + $0xf8] sm:$0xf]
    %v3411 = vld [vmem:[#allocation8 + $0xfc] sm:$0xf]
    %v3412 = vld [vmem:[#allocation8 + $0x100] sm:$0xf]
    %v3413 = vld [vmem:[#allocation8 + $0x104] sm:$0xf]
    %v3414 = vld [vmem:[#allocation8 + $0x108] sm:$0xf]
    %v3415 = vld [vmem:[#allocation8 + $0x10c] sm:$0xf]
    %v3416 = vld [vmem:[#allocation8 + $0x110] sm:$0xf]
    %v3417 = vld [vmem:[#allocation8 + $0x114] sm:$0xf]
    %v3418 = vld [vmem:[#allocation8 + $0x118] sm:$0xf]
    %v3419 = vld [vmem:[#allocation8 + $0x11c] sm:$0xf]
    %v3420 = vld [vmem:[#allocation8 + $0x120] sm:$0xf]
    %v3421 = vld [vmem:[#allocation8 + $0x124] sm:$0xf]
    %v3422 = vld [vmem:[#allocation8 + $0x128] sm:$0xf]
    %v3423 = vld [vmem:[#allocation8 + $0x12c] sm:$0xf]
    %v3424 = vld [vmem:[#allocation8 + $0x130] sm:$0xf]
    %v3425 = vld [vmem:[#allocation8 + $0x134] sm:$0xf]
    %v3426 = vld [vmem:[#allocation8 + $0x138] sm:$0xf]
    %v3427 = vld [vmem:[#allocation8 + $0x13c] sm:$0xf]
    %v3428 = vld [vmem:[#allocation8 + $0x140] sm:$0xf]
    %v3429 = vld [vmem:[#allocation8 + $0x144] sm:$0xf]
    %v3430 = vld [vmem:[#allocation8 + $0x148] sm:$0xf]
    %v3431 = vld [vmem:[#allocation8 + $0x14c] sm:$0xf]
    %v3432 = vld [vmem:[#allocation8 + $0x150] sm:$0xf]
    %v3433 = vld [vmem:[#allocation8 + $0x154] sm:$0xf]
    %v3434 = vld [vmem:[#allocation8 + $0x158] sm:$0xf]
    %v3435 = vld [vmem:[#allocation8 + $0x15c] sm:$0xf]
    %v3436 = vld [vmem:[#allocation8 + $0x160] sm:$0xf]
    %v3437 = vld [vmem:[#allocation8 + $0x164] sm:$0xf]
    %v3438 = vld [vmem:[#allocation8 + $0x168] sm:$0xf]
    %v3439 = vld [vmem:[#allocation8 + $0x16c] sm:$0xf]
    %v3440 = vld [vmem:[#allocation8 + $0x170] sm:$0xf]
    %v3441 = vld [vmem:[#allocation8 + $0x174] sm:$0xf]
    %v3442 = vld [vmem:[#allocation8 + $0x178] sm:$0xf]
    %v3443 = vld [vmem:[#allocation8 + $0x17c] sm:$0xf]
    %v3444 = vld [vmem:[#allocation8 + $0x180] sm:$0xf]
    %v3445 = vld [vmem:[#allocation8 + $0x184] sm:$0xf]
    %v3446 = vld [vmem:[#allocation8 + $0x188] sm:$0xf]
    %v3447 = vld [vmem:[#allocation8 + $0x18c] sm:$0xf]
    %v3448 = vld [vmem:[#allocation8 + $0x190] sm:$0xf]
    %v3449 = vld [vmem:[#allocation8 + $0x194] sm:$0xf]
    %v3450 = vld [vmem:[#allocation8 + $0x198] sm:$0xf]
    %v3451 = vld [vmem:[#allocation8 + $0x19c] sm:$0xf]
    %v3452 = vld [vmem:[#allocation8 + $0x1a0] sm:$0xf]
    %v3453 = vld [vmem:[#allocation8 + $0x1a4] sm:$0xf]
    %v3454 = vld [vmem:[#allocation8 + $0x1a8] sm:$0xf]
    %v3455 = vld [vmem:[#allocation8 + $0x1ac] sm:$0xf]
    %v3456 = vld [vmem:[#allocation8 + $0x1b0] sm:$0xf]
    %v3457 = vld [vmem:[#allocation8 + $0x1b4] sm:$0xf]
    %v3458 = vld [vmem:[#allocation8 + $0x1b8] sm:$0xf]
    %v3459 = vld [vmem:[#allocation8 + $0x1bc] sm:$0xf]
    %v3460 = vld [vmem:[#allocation8 + $0x1c0] sm:$0xf]
    %v3461 = vld [vmem:[#allocation8 + $0x1c4] sm:$0xf]
    %v3462 = vld [vmem:[#allocation8 + $0x1c8] sm:$0xf]
    %v3463 = vld [vmem:[#allocation8 + $0x1cc] sm:$0xf]
    %v3464 = vld [vmem:[#allocation8 + $0x1d0] sm:$0xf]
    %v3465 = vld [vmem:[#allocation8 + $0x1d4] sm:$0xf]
    %v3466 = vld [vmem:[#allocation8 + $0x1d8] sm:$0xf]
    %v3467 = vld [vmem:[#allocation8 + $0x1dc] sm:$0xf]
    %v3468 = vld [vmem:[#allocation8 + $0x1e0] sm:$0xf]
    %v3469 = vld [vmem:[#allocation8 + $0x1e4] sm:$0xf]
    %v3470 = vld [vmem:[#allocation8 + $0x1e8] sm:$0xf]
    %v3471 = vld [vmem:[#allocation8 + $0x1ec] sm:$0xf]
    %v3472 = vld [vmem:[#allocation8 + $0x1f0] sm:$0xf]
    %v3473 = vld [vmem:[#allocation8 + $0x1f4] sm:$0xf]
    %v3474 = vld [vmem:[#allocation8 + $0x1f8] sm:$0xf]
    %v3475 = vld [vmem:[#allocation8 + $0x1fc] sm:$0xf]
    %v3476 = vld [vmem:[#allocation10] sm:$0x1]
    %v3478 = vlaneseq
    %v3479 = vshrl.u32 %v3478, 7
    %v3480 = vsub.s32 0, %v3479
    %v3481 = vrot.slane %v3476, %v3480
    %v3611 = vunpack.c.l.b16 %v3348
    %v3612 = vunpack.c.l.b16 %v3349
    %v3613 = vunpack.c.l.b16 %v3350
    %v3614 = vunpack.c.l.b16 %v3351
    %v3615 = vunpack.c.l.b16 %v3352
    %v3616 = vunpack.c.l.b16 %v3353
    %v3617 = vunpack.c.l.b16 %v3354
    %v3618 = vunpack.c.l.b16 %v3355
    %v3619 = vunpack.c.l.b16 %v3356
    %v3620 = vunpack.c.l.b16 %v3357
    %v3621 = vunpack.c.l.b16 %v3358
    %v3622 = vunpack.c.l.b16 %v3359
    %v3623 = vunpack.c.l.b16 %v3360
    %v3624 = vunpack.c.l.b16 %v3361
    %v3625 = vunpack.c.l.b16 %v3362
    %v3626 = vunpack.c.l.b16 %v3363
    %v3627 = vunpack.c.l.b16 %v3364
    %v3628 = vunpack.c.l.b16 %v3365
    %v3629 = vunpack.c.l.b16 %v3366
    %v3630 = vunpack.c.l.b16 %v3367
    %v3631 = vunpack.c.l.b16 %v3368
    %v3632 = vunpack.c.l.b16 %v3369
    %v3633 = vunpack.c.l.b16 %v3370
    %v3634 = vunpack.c.l.b16 %v3371
    %v3635 = vunpack.c.l.b16 %v3372
    %v3636 = vunpack.c.l.b16 %v3373
    %v3637 = vunpack.c.l.b16 %v3374
    %v3638 = vunpack.c.l.b16 %v3375
    %v3639 = vunpack.c.l.b16 %v3376
    %v3640 = vunpack.c.l.b16 %v3377
    %v3641 = vunpack.c.l.b16 %v3378
    %v3642 = vunpack.c.l.b16 %v3379
    %v3643 = vunpack.c.l.b16 %v3380
    %v3644 = vunpack.c.l.b16 %v3381
    %v3645 = vunpack.c.l.b16 %v3382
    %v3646 = vunpack.c.l.b16 %v3383
    %v3647 = vunpack.c.l.b16 %v3384
    %v3648 = vunpack.c.l.b16 %v3385
    %v3649 = vunpack.c.l.b16 %v3386
    %v3650 = vunpack.c.l.b16 %v3387
    %v3651 = vunpack.c.l.b16 %v3388
    %v3652 = vunpack.c.l.b16 %v3389
    %v3653 = vunpack.c.l.b16 %v3390
    %v3654 = vunpack.c.l.b16 %v3391
    %v3655 = vunpack.c.l.b16 %v3392
    %v3656 = vunpack.c.l.b16 %v3393
    %v3657 = vunpack.c.l.b16 %v3394
    %v3658 = vunpack.c.l.b16 %v3395
    %v3659 = vunpack.c.l.b16 %v3396
    %v3660 = vunpack.c.l.b16 %v3397
    %v3661 = vunpack.c.l.b16 %v3398
    %v3662 = vunpack.c.l.b16 %v3399
    %v3663 = vunpack.c.l.b16 %v3400
    %v3664 = vunpack.c.l.b16 %v3401
    %v3665 = vunpack.c.l.b16 %v3402
    %v3666 = vunpack.c.l.b16 %v3403
    %v3667 = vunpack.c.l.b16 %v3404
    %v3668 = vunpack.c.l.b16 %v3405
    %v3669 = vunpack.c.l.b16 %v3406
    %v3670 = vunpack.c.l.b16 %v3407
    %v3671 = vunpack.c.l.b16 %v3408
    %v3672 = vunpack.c.l.b16 %v3409
    %v3673 = vunpack.c.l.b16 %v3410
    %v3674 = vunpack.c.l.b16 %v3411
    %v3675 = vunpack.c.l.b16 %v3412
    %v3676 = vunpack.c.l.b16 %v3413
    %v3677 = vunpack.c.l.b16 %v3414
    %v3678 = vunpack.c.l.b16 %v3415
    %v3679 = vunpack.c.l.b16 %v3416
    %v3680 = vunpack.c.l.b16 %v3417
    %v3681 = vunpack.c.l.b16 %v3418
    %v3682 = vunpack.c.l.b16 %v3419
    %v3683 = vunpack.c.l.b16 %v3420
    %v3684 = vunpack.c.l.b16 %v3421
    %v3685 = vunpack.c.l.b16 %v3422
    %v3686 = vunpack.c.l.b16 %v3423
    %v3687 = vunpack.c.l.b16 %v3424
    %v3688 = vunpack.c.l.b16 %v3425
    %v3689 = vunpack.c.l.b16 %v3426
    %v3690 = vunpack.c.l.b16 %v3427
    %v3691 = vunpack.c.l.b16 %v3428
    %v3692 = vunpack.c.l.b16 %v3429
    %v3693 = vunpack.c.l.b16 %v3430
    %v3694 = vunpack.c.l.b16 %v3431
    %v3695 = vunpack.c.l.b16 %v3432
    %v3696 = vunpack.c.l.b16 %v3433
    %v3697 = vunpack.c.l.b16 %v3434
    %v3698 = vunpack.c.l.b16 %v3435
    %v3699 = vunpack.c.l.b16 %v3436
    %v3700 = vunpack.c.l.b16 %v3437
    %v3701 = vunpack.c.l.b16 %v3438
    %v3702 = vunpack.c.l.b16 %v3439
    %v3703 = vunpack.c.l.b16 %v3440
    %v3704 = vunpack.c.l.b16 %v3441
    %v3705 = vunpack.c.l.b16 %v3442
    %v3706 = vunpack.c.l.b16 %v3443
    %v3707 = vunpack.c.l.b16 %v3444
    %v3708 = vunpack.c.l.b16 %v3445
    %v3709 = vunpack.c.l.b16 %v3446
    %v3710 = vunpack.c.l.b16 %v3447
    %v3711 = vunpack.c.l.b16 %v3448
    %v3712 = vunpack.c.l.b16 %v3449
    %v3713 = vunpack.c.l.b16 %v3450
    %v3714 = vunpack.c.l.b16 %v3451
    %v3715 = vunpack.c.l.b16 %v3452
    %v3716 = vunpack.c.l.b16 %v3453
    %v3717 = vunpack.c.l.b16 %v3454
    %v3718 = vunpack.c.l.b16 %v3455
    %v3719 = vunpack.c.l.b16 %v3456
    %v3720 = vunpack.c.l.b16 %v3457
    %v3721 = vunpack.c.l.b16 %v3458
    %v3722 = vunpack.c.l.b16 %v3459
    %v3723 = vunpack.c.l.b16 %v3460
    %v3724 = vunpack.c.l.b16 %v3461
    %v3725 = vunpack.c.l.b16 %v3462
    %v3726 = vunpack.c.l.b16 %v3463
    %v3727 = vunpack.c.l.b16 %v3464
    %v3728 = vunpack.c.l.b16 %v3465
    %v3729 = vunpack.c.l.b16 %v3466
    %v3730 = vunpack.c.l.b16 %v3467
    %v3731 = vunpack.c.l.b16 %v3468
    %v3732 = vunpack.c.l.b16 %v3469
    %v3733 = vunpack.c.l.b16 %v3470
    %v3734 = vunpack.c.l.b16 %v3471
    %v3735 = vunpack.c.l.b16 %v3472
    %v3736 = vunpack.c.l.b16 %v3473
    %v3737 = vunpack.c.l.b16 %v3474
    %v3738 = vunpack.c.l.b16 %v3475
    %v3739 = vpack.c.b16 %v3612, %v3611
    %v3740 = vpack.c.b16 %v3614, %v3613
    %v3741 = vpack.c.b16 %v3616, %v3615
    %v3742 = vpack.c.b16 %v3618, %v3617
    %v3743 = vpack.c.b16 %v3620, %v3619
    %v3744 = vpack.c.b16 %v3622, %v3621
    %v3745 = vpack.c.b16 %v3624, %v3623
    %v3746 = vpack.c.b16 %v3626, %v3625
    %v3747 = vpack.c.b16 %v3628, %v3627
    %v3748 = vpack.c.b16 %v3630, %v3629
    %v3749 = vpack.c.b16 %v3632, %v3631
    %v3750 = vpack.c.b16 %v3634, %v3633
    %v3751 = vpack.c.b16 %v3636, %v3635
    %v3752 = vpack.c.b16 %v3638, %v3637
    %v3753 = vpack.c.b16 %v3640, %v3639
    %v3754 = vpack.c.b16 %v3642, %v3641
    %v3755 = vpack.c.b16 %v3644, %v3643
    %v3756 = vpack.c.b16 %v3646, %v3645
    %v3757 = vpack.c.b16 %v3648, %v3647
    %v3758 = vpack.c.b16 %v3650, %v3649
    %v3759 = vpack.c.b16 %v3652, %v3651
    %v3760 = vpack.c.b16 %v3654, %v3653
    %v3761 = vpack.c.b16 %v3656, %v3655
    %v3762 = vpack.c.b16 %v3658, %v3657
    %v3763 = vpack.c.b16 %v3660, %v3659
    %v3764 = vpack.c.b16 %v3662, %v3661
    %v3765 = vpack.c.b16 %v3664, %v3663
    %v3766 = vpack.c.b16 %v3666, %v3665
    %v3767 = vpack.c.b16 %v3668, %v3667
    %v3768 = vpack.c.b16 %v3670, %v3669
    %v3769 = vpack.c.b16 %v3672, %v3671
    %v3770 = vpack.c.b16 %v3674, %v3673
    %v3771 = vpack.c.b16 %v3676, %v3675
    %v3772 = vpack.c.b16 %v3678, %v3677
    %v3773 = vpack.c.b16 %v3680, %v3679
    %v3774 = vpack.c.b16 %v3682, %v3681
    %v3775 = vpack.c.b16 %v3684, %v3683
    %v3776 = vpack.c.b16 %v3686, %v3685
    %v3777 = vpack.c.b16 %v3688, %v3687
    %v3778 = vpack.c.b16 %v3690, %v3689
    %v3779 = vpack.c.b16 %v3692, %v3691
    %v3780 = vpack.c.b16 %v3694, %v3693
    %v3781 = vpack.c.b16 %v3696, %v3695
    %v3782 = vpack.c.b16 %v3698, %v3697
    %v3783 = vpack.c.b16 %v3700, %v3699
    %v3784 = vpack.c.b16 %v3702, %v3701
    %v3785 = vpack.c.b16 %v3704, %v3703
    %v3786 = vpack.c.b16 %v3706, %v3705
    %v3787 = vpack.c.b16 %v3708, %v3707
    %v3788 = vpack.c.b16 %v3710, %v3709
    %v3789 = vpack.c.b16 %v3712, %v3711
    %v3790 = vpack.c.b16 %v3714, %v3713
    %v3791 = vpack.c.b16 %v3716, %v3715
    %v3792 = vpack.c.b16 %v3718, %v3717
    %v3793 = vpack.c.b16 %v3720, %v3719
    %v3794 = vpack.c.b16 %v3722, %v3721
    %v3795 = vpack.c.b16 %v3724, %v3723
    %v3796 = vpack.c.b16 %v3726, %v3725
    %v3797 = vpack.c.b16 %v3728, %v3727
    %v3798 = vpack.c.b16 %v3730, %v3729
    %v3799 = vpack.c.b16 %v3732, %v3731
    %v3800 = vpack.c.b16 %v3734, %v3733
    %v3801 = vpack.c.b16 %v3736, %v3735
    %v3802 = vpack.c.b16 %v3738, %v3737
    %3867 = vmatprep.subr.bf16.mxu0 0
    %3868 = vmatpush1.bf16.msra.mxu0 %v3739
    %3869 = vmatprep.subr.bf16.mxu0 0
    %3870 = vmatpush1.bf16.msra.mxu0 %v3740
    %3871 = vmatprep.subr.bf16.mxu0 0
    %3872 = vmatpush1.bf16.msra.mxu0 %v3741
    %3873 = vmatprep.subr.bf16.mxu0 0
    %3874 = vmatpush1.bf16.msra.mxu0 %v3742
    %3875 = vmatprep.subr.bf16.mxu0 0
    %3876 = vmatpush1.bf16.msra.mxu0 %v3743
    %3877 = vmatprep.subr.bf16.mxu0 0
    %3878 = vmatpush1.bf16.msra.mxu0 %v3744
    %3879 = vmatprep.subr.bf16.mxu0 0
    %3880 = vmatpush1.bf16.msra.mxu0 %v3745
    %3881 = vmatprep.subr.bf16.mxu0 0
    %3882 = vmatpush1.bf16.msra.mxu0 %v3746
    %3883 = vmatprep.subr.bf16.mxu0 0
    %3884 = vmatpush1.bf16.msra.mxu0 %v3747
    %3885 = vmatprep.subr.bf16.mxu0 0
    %3886 = vmatpush1.bf16.msra.mxu0 %v3748
    %3887 = vmatprep.subr.bf16.mxu0 0
    %3888 = vmatpush1.bf16.msra.mxu0 %v3749
    %3889 = vmatprep.subr.bf16.mxu0 0
    %3890 = vmatpush1.bf16.msra.mxu0 %v3750
    %3891 = vmatprep.subr.bf16.mxu0 0
    %3892 = vmatpush1.bf16.msra.mxu0 %v3751
    %3893 = vmatprep.subr.bf16.mxu0 0
    %3894 = vmatpush1.bf16.msra.mxu0 %v3752
    %3895 = vmatprep.subr.bf16.mxu0 0
    %3896 = vmatpush1.bf16.msra.mxu0 %v3753
    %3897 = vmatprep.subr.bf16.mxu0 0
    %3898 = vmatpush1.bf16.msra.mxu0 %v3754
    %3899 = vmatprep.mubr.bf16.mxu0 %v3341
    %3900 = vmatmul.mubr.bf16.gmra.mrb[0].mxu0 %v3340
    %v3901 = vpop.f32.mrb[0].mxu0
    %v3902 = vadd.f32 %v3481, %v3901
    %v3903 = vpop.f32.mrb[0].mxu0
    %v3904 = vpop.f32.mrb[0].mxu0
    %v3905 = vadd.f32 %v3481, %v3904
    %v3906 = vpop.f32.mrb[0].mxu0
    %3907 = vdwg.mxu0
    %3908 = vmatprep.subr.bf16.mxu0 0
    %3909 = vmatpush1.bf16.msra.mxu0 %v3755
    %3910 = vmatprep.subr.bf16.mxu0 0
    %3911 = vmatpush1.bf16.msra.mxu0 %v3756
    %3912 = vmatprep.subr.bf16.mxu0 0
    %3913 = vmatpush1.bf16.msra.mxu0 %v3757
    %3914 = vmatprep.subr.bf16.mxu0 0
    %3915 = vmatpush1.bf16.msra.mxu0 %v3758
    %3916 = vmatprep.subr.bf16.mxu0 0
    %3917 = vmatpush1.bf16.msra.mxu0 %v3759
    %3918 = vmatprep.subr.bf16.mxu0 0
    %3919 = vmatpush1.bf16.msra.mxu0 %v3760
    %3920 = vmatprep.subr.bf16.mxu0 0
    %3921 = vmatpush1.bf16.msra.mxu0 %v3761
    %3922 = vmatprep.subr.bf16.mxu0 0
    %3923 = vmatpush1.bf16.msra.mxu0 %v3762
    %3924 = vmatprep.subr.bf16.mxu0 0
    %3925 = vmatpush1.bf16.msra.mxu0 %v3763
    %3926 = vmatprep.subr.bf16.mxu0 0
    %3927 = vmatpush1.bf16.msra.mxu0 %v3764
    %3928 = vmatprep.subr.bf16.mxu0 0
    %3929 = vmatpush1.bf16.msra.mxu0 %v3765
    %3930 = vmatprep.subr.bf16.mxu0 0
    %3931 = vmatpush1.bf16.msra.mxu0 %v3766
    %3932 = vmatprep.subr.bf16.mxu0 0
    %3933 = vmatpush1.bf16.msra.mxu0 %v3767
    %3934 = vmatprep.subr.bf16.mxu0 0
    %3935 = vmatpush1.bf16.msra.mxu0 %v3768
    %3936 = vmatprep.subr.bf16.mxu0 0
    %3937 = vmatpush1.bf16.msra.mxu0 %v3769
    %3938 = vmatprep.subr.bf16.mxu0 0
    %3939 = vmatpush1.bf16.msra.mxu0 %v3770
    %3940 = vmatprep.mubr.bf16.mxu0 %v3343
    %3941 = vmatmul.mubr.bf16.gmra.mrb[0].mxu0 %v3342
    %v3942 = vpop.f32.mrb[0].mxu0
    %v3943 = vadd.f32 %v3902, %v3942
    %v3944 = vpop.f32.mrb[0].mxu0
    %v3945 = vpop.f32.mrb[0].mxu0
    %v3946 = vadd.f32 %v3905, %v3945
    %v3947 = vpop.f32.mrb[0].mxu0
    %3948 = vdwg.mxu0
    %3949 = vmatprep.subr.bf16.mxu0 0
    %3950 = vmatpush1.bf16.msra.mxu0 %v3771
    %3951 = vmatprep.subr.bf16.mxu0 0
    %3952 = vmatpush1.bf16.msra.mxu0 %v3772
    %3953 = vmatprep.subr.bf16.mxu0 0
    %3954 = vmatpush1.bf16.msra.mxu0 %v3773
    %3955 = vmatprep.subr.bf16.mxu0 0
    %3956 = vmatpush1.bf16.msra.mxu0 %v3774
    %3957 = vmatprep.subr.bf16.mxu0 0
    %3958 = vmatpush1.bf16.msra.mxu0 %v3775
    %3959 = vmatprep.subr.bf16.mxu0 0
    %3960 = vmatpush1.bf16.msra.mxu0 %v3776
    %3961 = vmatprep.subr.bf16.mxu0 0
    %3962 = vmatpush1.bf16.msra.mxu0 %v3777
    %3963 = vmatprep.subr.bf16.mxu0 0
    %3964 = vmatpush1.bf16.msra.mxu0 %v3778
    %3965 = vmatprep.subr.bf16.mxu0 0
    %3966 = vmatpush1.bf16.msra.mxu0 %v3779
    %3967 = vmatprep.subr.bf16.mxu0 0
    %3968 = vmatpush1.bf16.msra.mxu0 %v3780
    %3969 = vmatprep.subr.bf16.mxu0 0
    %3970 = vmatpush1.bf16.msra.mxu0 %v3781
    %3971 = vmatprep.subr.bf16.mxu0 0
    %3972 = vmatpush1.bf16.msra.mxu0 %v3782
    %3973 = vmatprep.subr.bf16.mxu0 0
    %3974 = vmatpush1.bf16.msra.mxu0 %v3783
    %3975 = vmatprep.subr.bf16.mxu0 0
    %3976 = vmatpush1.bf16.msra.mxu0 %v3784
    %3977 = vmatprep.subr.bf16.mxu0 0
    %3978 = vmatpush1.bf16.msra.mxu0 %v3785
    %3979 = vmatprep.subr.bf16.mxu0 0
    %3980 = vmatpush1.bf16.msra.mxu0 %v3786
    %3981 = vmatprep.mubr.bf16.mxu0 %v3345
    %3982 = vmatmul.mubr.bf16.gmra.mrb[0].mxu0 %v3344
    %v3983 = vpop.f32.mrb[0].mxu0
    %v3984 = vadd.f32 %v3943, %v3983
    %v3985 = vpop.f32.mrb[0].mxu0
    %v3986 = vpop.f32.mrb[0].mxu0
    %v3987 = vadd.f32 %v3946, %v3986
    %v3988 = vpop.f32.mrb[0].mxu0
    %3989 = vdwg.mxu0
    %3990 = vmatprep.subr.bf16.mxu0 0
    %3991 = vmatpush1.bf16.msra.mxu0 %v3787
    %3992 = vmatprep.subr.bf16.mxu0 0
    %3993 = vmatpush1.bf16.msra.mxu0 %v3788
    %3994 = vmatprep.subr.bf16.mxu0 0
    %3995 = vmatpush1.bf16.msra.mxu0 %v3789
    %3996 = vmatprep.subr.bf16.mxu0 0
    %3997 = vmatpush1.bf16.msra.mxu0 %v3790
    %3998 = vmatprep.subr.bf16.mxu0 0
    %3999 = vmatpush1.bf16.msra.mxu0 %v3791
    %4000 = vmatprep.subr.bf16.mxu0 0
    %4001 = vmatpush1.bf16.msra.mxu0 %v3792
    %4002 = vmatprep.subr.bf16.mxu0 0
    %4003 = vmatpush1.bf16.msra.mxu0 %v3793
    %4004 = vmatprep.subr.bf16.mxu0 0
    %4005 = vmatpush1.bf16.msra.mxu0 %v3794
    %4006 = vmatprep.subr.bf16.mxu0 0
    %4007 = vmatpush1.bf16.msra.mxu0 %v3795
    %4008 = vmatprep.subr.bf16.mxu0 0
    %4009 = vmatpush1.bf16.msra.mxu0 %v3796
    %4010 = vmatprep.subr.bf16.mxu0 0
    %4011 = vmatpush1.bf16.msra.mxu0 %v3797
    %4012 = vmatprep.subr.bf16.mxu0 0
    %4013 = vmatpush1.bf16.msra.mxu0 %v3798
    %4014 = vmatprep.subr.bf16.mxu0 0
    %4015 = vmatpush1.bf16.msra.mxu0 %v3799
    %4016 = vmatprep.subr.bf16.mxu0 0
    %4017 = vmatpush1.bf16.msra.mxu0 %v3800
    %4018 = vmatprep.subr.bf16.mxu0 0
    %4019 = vmatpush1.bf16.msra.mxu0 %v3801
    %4020 = vmatprep.subr.bf16.mxu0 0
    %4021 = vmatpush1.bf16.msra.mxu0 %v3802
    %4022 = vmatprep.mubr.bf16.mxu0 %v3347
    %4023 = vmatmul.mubr.bf16.gmra.mrb[0].mxu0 %v3346
    %v4024 = vpop.f32.mrb[0].mxu0
    %v4025 = vadd.f32 %v3984, %v4024
    %v4026 = vpop.f32.mrb[0].mxu0
    %v4027 = vpop.f32.mrb[0].mxu0
    %v4028 = vadd.f32 %v3987, %v4027
    %v4029 = vpop.f32.mrb[0].mxu0
    %4030 = vdwg.mxu0
    %v4031 = vmul.f32 %v4025, 0.1
    %v4032 = vmul.f32 %v4028, 0.1
    %v4033 = vmax.f32 %v4025, %v4031
    %v4034 = vmax.f32 %v4028, %v4032
    %v4035 = vpack.c.bf16 %v4034, %v4033
    %v4036 = vld [vmem:[#allocation11] sm:$0xf]
    %v4037 = vld [vmem:[#allocation11 + $0x4] sm:$0xf]
    %v4038 = vld [vmem:[#allocation11 + $0x8] sm:$0xf]
    %v4039 = vld [vmem:[#allocation11 + $0xc] sm:$0xf]
    %v4040 = vld [vmem:[#allocation11 + $0x10] sm:$0xf]
    %v4041 = vld [vmem:[#allocation11 + $0x14] sm:$0xf]
    %v4042 = vld [vmem:[#allocation11 + $0x18] sm:$0xf]
    %v4043 = vld [vmem:[#allocation11 + $0x1c] sm:$0xf]
    %v4044 = vld [vmem:[#allocation11 + $0x20] sm:$0xf]
    %v4045 = vld [vmem:[#allocation11 + $0x24] sm:$0xf]
    %v4046 = vld [vmem:[#allocation11 + $0x28] sm:$0xf]
    %v4047 = vld [vmem:[#allocation11 + $0x2c] sm:$0xf]
    %v4048 = vld [vmem:[#allocation11 + $0x30] sm:$0xf]
    %v4049 = vld [vmem:[#allocation11 + $0x34] sm:$0xf]
    %v4050 = vld [vmem:[#allocation11 + $0x38] sm:$0xf]
    %v4051 = vld [vmem:[#allocation11 + $0x3c] sm:$0xf]
    %v4052 = vld [vmem:[#allocation13] sm:$0x1]
    %v4054 = vlaneseq
    %v4055 = vshrl.u32 %v4054, 7
    %v4056 = vsub.s32 0, %v4055
    %v4057 = vrot.slane %v4052, %v4056
    %v4075 = vunpack.c.l.b16 %v4036
    %v4076 = vunpack.c.l.b16 %v4037
    %v4077 = vunpack.c.l.b16 %v4038
    %v4078 = vunpack.c.l.b16 %v4039
    %v4079 = vunpack.c.l.b16 %v4040
    %v4080 = vunpack.c.l.b16 %v4041
    %v4081 = vunpack.c.l.b16 %v4042
    %v4082 = vunpack.c.l.b16 %v4043
    %v4083 = vunpack.c.l.b16 %v4044
    %v4084 = vunpack.c.l.b16 %v4045
    %v4085 = vunpack.c.l.b16 %v4046
    %v4086 = vunpack.c.l.b16 %v4047
    %v4087 = vunpack.c.l.b16 %v4048
    %v4088 = vunpack.c.l.b16 %v4049
    %v4089 = vunpack.c.l.b16 %v4050
    %v4090 = vunpack.c.l.b16 %v4051
    %v4091 = vpack.c.b16 %v4076, %v4075
    %v4092 = vpack.c.b16 %v4078, %v4077
    %v4093 = vpack.c.b16 %v4080, %v4079
    %v4094 = vpack.c.b16 %v4082, %v4081
    %v4095 = vpack.c.b16 %v4084, %v4083
    %v4096 = vpack.c.b16 %v4086, %v4085
    %v4097 = vpack.c.b16 %v4088, %v4087
    %v4098 = vpack.c.b16 %v4090, %v4089
    %4107 = vmatprep.subr.bf16.mxu0 0
    %4108 = vmatpush1.bf16.msra.mxu0 %v4091
    %4109 = vmatprep.subr.bf16.mxu0 0
    %4110 = vmatpush1.bf16.msra.mxu0 %v4092
    %4111 = vmatprep.subr.bf16.mxu0 0
    %4112 = vmatpush1.bf16.msra.mxu0 %v4093
    %4113 = vmatprep.subr.bf16.mxu0 0
    %4114 = vmatpush1.bf16.msra.mxu0 %v4094
    %4115 = vmatprep.subr.bf16.mxu0 0
    %4116 = vmatpush1.bf16.msra.mxu0 %v4095
    %4117 = vmatprep.subr.bf16.mxu0 0
    %4118 = vmatpush1.bf16.msra.mxu0 %v4096
    %4119 = vmatprep.subr.bf16.mxu0 0
    %4120 = vmatpush1.bf16.msra.mxu0 %v4097
    %4121 = vmatprep.subr.bf16.mxu0 0
    %4122 = vmatpush1.bf16.msra.mxu0 %v4098
    %4123 = vmatprep.subr.bf16.mxu0 0
    %4124 = vmatpush1.bf16.msra.mxu0 0
    %4125 = vmatprep.subr.bf16.mxu0 0
    %4126 = vmatpush1.bf16.msra.mxu0 0
    %4127 = vmatprep.subr.bf16.mxu0 0
    %4128 = vmatpush1.bf16.msra.mxu0 0
    %4129 = vmatprep.subr.bf16.mxu0 0
    %4130 = vmatpush1.bf16.msra.mxu0 0
    %4131 = vmatprep.subr.bf16.mxu0 0
    %4132 = vmatpush1.bf16.msra.mxu0 0
    %4133 = vmatprep.subr.bf16.mxu0 0
    %4134 = vmatpush1.bf16.msra.mxu0 0
    %4135 = vmatprep.subr.bf16.mxu0 0
    %4136 = vmatpush1.bf16.msra.mxu0 0
    %4137 = vmatprep.subr.bf16.mxu0 0
    %4138 = vmatpush1.bf16.msra.mxu0 0
    %4139 = vmatprep.mubr.bf16.mxu0 0
    %4140 = vmatmul.mubr.bf16.gmra.mrb[0].mxu0 %v4035
    %v4141 = vpop.f32.mrb[0].mxu0
    %v4142 = vadd.f32 %v4057, %v4141
    %v4143 = vpop.f32.mrb[0].mxu0
    %v4144 = vpop.f32.mrb[0].mxu0
    %v4145 = vadd.f32 %v4057, %v4144
    %v4146 = vpop.f32.mrb[0].mxu0
    %4147 = vdwg.mxu0
    %v4148 = vmul.f32 %v4142, 0.1
    %v4149 = vmul.f32 %v4145, 0.1
    %v4150 = vmax.f32 %v4142, %v4148
    %v4151 = vmax.f32 %v4145, %v4149
    %v4152 = vpack.c.bf16 %v4151, %v4150
    %v4153 = vld [vmem:[#allocation14] sm:$0xf]
    %v4154 = vld [vmem:[#allocation14 + $0x4] sm:$0xf]
    %v4155 = vld [vmem:[#allocation14 + $0x8] sm:$0xf]
    %v4156 = vld [vmem:[#allocation14 + $0xc] sm:$0xf]
    %v4157 = vld [vmem:[#allocation14 + $0x10] sm:$0xf]
    %v4158 = vld [vmem:[#allocation14 + $0x14] sm:$0xf]
    %v4159 = vld [vmem:[#allocation14 + $0x18] sm:$0xf]
    %v4160 = vld [vmem:[#allocation14 + $0x1c] sm:$0xf]
    %v4161 = vld [vmem:[#allocation14 + $0x20] sm:$0xf]
    %v4162 = vld [vmem:[#allocation14 + $0x24] sm:$0xf]
    %v4163 = vld [vmem:[#allocation14 + $0x28] sm:$0xf]
    %v4164 = vld [vmem:[#allocation14 + $0x2c] sm:$0xf]
    %v4165 = vld [vmem:[#allocation14 + $0x30] sm:$0xf]
    %v4166 = vld [vmem:[#allocation14 + $0x34] sm:$0xf]
    %v4167 = vld [vmem:[#allocation14 + $0x38] sm:$0xf]
    %v4168 = vld [vmem:[#allocation14 + $0x3c] sm:$0xf]
    %v4169 = vld [vmem:[#allocation16] sm:$0x1]
    %v4171 = vlaneseq
    %v4172 = vshrl.u32 %v4171, 7
    %v4173 = vsub.s32 0, %v4172
    %v4174 = vrot.slane %v4169, %v4173
    %v4192 = vunpack.c.l.b16 %v4153
    %v4193 = vunpack.c.l.b16 %v4154
    %v4194 = vunpack.c.l.b16 %v4155
    %v4195 = vunpack.c.l.b16 %v4156
    %v4196 = vunpack.c.l.b16 %v4157
    %v4197 = vunpack.c.l.b16 %v4158
    %v4198 = vunpack.c.l.b16 %v4159
    %v4199 = vunpack.c.l.b16 %v4160
    %v4200 = vunpack.c.l.b16 %v4161
    %v4201 = vunpack.c.l.b16 %v4162
    %v4202 = vunpack.c.l.b16 %v4163
    %v4203 = vunpack.c.l.b16 %v4164
    %v4204 = vunpack.c.l.b16 %v4165
    %v4205 = vunpack.c.l.b16 %v4166
    %v4206 = vunpack.c.l.b16 %v4167
    %v4207 = vunpack.c.l.b16 %v4168
    %v4208 = vpack.c.b16 %v4193, %v4192
    %v4209 = vpack.c.b16 %v4195, %v4194
    %v4210 = vpack.c.b16 %v4197, %v4196
    %v4211 = vpack.c.b16 %v4199, %v4198
    %v4212 = vpack.c.b16 %v4201, %v4200
    %v4213 = vpack.c.b16 %v4203, %v4202
    %v4214 = vpack.c.b16 %v4205, %v4204
    %v4215 = vpack.c.b16 %v4207, %v4206
    %4224 = vmatprep.subr.bf16.mxu0 0
    %4225 = vmatpush1.bf16.msra.mxu0 %v4208
    %4226 = vmatprep.subr.bf16.mxu0 0
    %4227 = vmatpush1.bf16.msra.mxu0 %v4209
    %4228 = vmatprep.subr.bf16.mxu0 0
    %4229 = vmatpush1.bf16.msra.mxu0 %v4210
    %4230 = vmatprep.subr.bf16.mxu0 0
    %4231 = vmatpush1.bf16.msra.mxu0 %v4211
    %4232 = vmatprep.subr.bf16.mxu0 0
    %4233 = vmatpush1.bf16.msra.mxu0 %v4212
    %4234 = vmatprep.subr.bf16.mxu0 0
    %4235 = vmatpush1.bf16.msra.mxu0 %v4213
    %4236 = vmatprep.subr.bf16.mxu0 0
    %4237 = vmatpush1.bf16.msra.mxu0 %v4214
    %4238 = vmatprep.subr.bf16.mxu0 0
    %4239 = vmatpush1.bf16.msra.mxu0 %v4215
    %4240 = vmatprep.subr.bf16.mxu0 0
    %4241 = vmatpush1.bf16.msra.mxu0 0
    %4242 = vmatprep.subr.bf16.mxu0 0
    %4243 = vmatpush1.bf16.msra.mxu0 0
    %4244 = vmatprep.subr.bf16.mxu0 0
    %4245 = vmatpush1.bf16.msra.mxu0 0
    %4246 = vmatprep.subr.bf16.mxu0 0
    %4247 = vmatpush1.bf16.msra.mxu0 0
    %4248 = vmatprep.subr.bf16.mxu0 0
    %4249 = vmatpush1.bf16.msra.mxu0 0
    %4250 = vmatprep.subr.bf16.mxu0 0
    %4251 = vmatpush1.bf16.msra.mxu0 0
    %4252 = vmatprep.subr.bf16.mxu0 0
    %4253 = vmatpush1.bf16.msra.mxu0 0
    %4254 = vmatprep.subr.bf16.mxu0 0
    %4255 = vmatpush1.bf16.msra.mxu0 0
    %4256 = vmatprep.mubr.bf16.mxu0 0
    %4257 = vmatmul.mubr.bf16.gmra.mrb[0].mxu0 %v4152
    %v4258 = vpop.f32.mrb[0].mxu0
    %v4259 = vadd.f32 %v4174, %v4258
    %v4260 = vpop.f32.mrb[0].mxu0
    %v4261 = vpop.f32.mrb[0].mxu0
    %v4262 = vadd.f32 %v4174, %v4261
    %v4263 = vpop.f32.mrb[0].mxu0
    %4264 = vdwg.mxu0
    %v4265 = vmul.f32 %v4259, 0.1
    %v4266 = vmul.f32 %v4262, 0.1
    %v4267 = vmax.f32 %v4259, %v4265
    %v4268 = vmax.f32 %v4262, %v4266
    %v4269 = vpack.c.bf16 %v4268, %v4267
    %v4270 = vld [vmem:[#allocation17] sm:$0xf]
    %v4271 = vld [vmem:[#allocation17 + $0x4] sm:$0xf]
    %v4272 = vld [vmem:[#allocation17 + $0x8] sm:$0xf]
    %v4273 = vld [vmem:[#allocation17 + $0xc] sm:$0xf]
    %v4274 = vld [vmem:[#allocation17 + $0x10] sm:$0xf]
    %v4275 = vld [vmem:[#allocation17 + $0x14] sm:$0xf]
    %v4276 = vld [vmem:[#allocation17 + $0x18] sm:$0xf]
    %v4277 = vld [vmem:[#allocation17 + $0x1c] sm:$0xf]
    %v4278 = vld [vmem:[#allocation17 + $0x20] sm:$0xf]
    %v4279 = vld [vmem:[#allocation17 + $0x24] sm:$0xf]
    %v4280 = vld [vmem:[#allocation17 + $0x28] sm:$0xf]
    %v4281 = vld [vmem:[#allocation17 + $0x2c] sm:$0xf]
    %v4282 = vld [vmem:[#allocation17 + $0x30] sm:$0xf]
    %v4283 = vld [vmem:[#allocation17 + $0x34] sm:$0xf]
    %v4284 = vld [vmem:[#allocation17 + $0x38] sm:$0xf]
    %v4285 = vld [vmem:[#allocation17 + $0x3c] sm:$0xf]
    %v4286 = vld [vmem:[#allocation19] sm:$0x1]
    %v4288 = vlaneseq
    %v4289 = vshrl.u32 %v4288, 7
    %v4290 = vsub.s32 0, %v4289
    %v4291 = vrot.slane %v4286, %v4290
    %v4309 = vunpack.c.l.b16 %v4270
    %v4310 = vunpack.c.l.b16 %v4271
    %v4311 = vunpack.c.l.b16 %v4272
    %v4312 = vunpack.c.l.b16 %v4273
    %v4313 = vunpack.c.l.b16 %v4274
    %v4314 = vunpack.c.l.b16 %v4275
    %v4315 = vunpack.c.l.b16 %v4276
    %v4316 = vunpack.c.l.b16 %v4277
    %v4317 = vunpack.c.l.b16 %v4278
    %v4318 = vunpack.c.l.b16 %v4279
    %v4319 = vunpack.c.l.b16 %v4280
    %v4320 = vunpack.c.l.b16 %v4281
    %v4321 = vunpack.c.l.b16 %v4282
    %v4322 = vunpack.c.l.b16 %v4283
    %v4323 = vunpack.c.l.b16 %v4284
    %v4324 = vunpack.c.l.b16 %v4285
    %v4325 = vpack.c.b16 %v4310, %v4309
    %v4326 = vpack.c.b16 %v4312, %v4311
    %v4327 = vpack.c.b16 %v4314, %v4313
    %v4328 = vpack.c.b16 %v4316, %v4315
    %v4329 = vpack.c.b16 %v4318, %v4317
    %v4330 = vpack.c.b16 %v4320, %v4319
    %v4331 = vpack.c.b16 %v4322, %v4321
    %v4332 = vpack.c.b16 %v4324, %v4323
    %4341 = vmatprep.subr.bf16.mxu0 0
    %4342 = vmatpush1.bf16.msra.mxu0 %v4325
    %4343 = vmatprep.subr.bf16.mxu0 0
    %4344 = vmatpush1.bf16.msra.mxu0 %v4326
    %4345 = vmatprep.subr.bf16.mxu0 0
    %4346 = vmatpush1.bf16.msra.mxu0 %v4327
    %4347 = vmatprep.subr.bf16.mxu0 0
    %4348 = vmatpush1.bf16.msra.mxu0 %v4328
    %4349 = vmatprep.subr.bf16.mxu0 0
    %4350 = vmatpush1.bf16.msra.mxu0 %v4329
    %4351 = vmatprep.subr.bf16.mxu0 0
    %4352 = vmatpush1.bf16.msra.mxu0 %v4330
    %4353 = vmatprep.subr.bf16.mxu0 0
    %4354 = vmatpush1.bf16.msra.mxu0 %v4331
    %4355 = vmatprep.subr.bf16.mxu0 0
    %4356 = vmatpush1.bf16.msra.mxu0 %v4332
    %4357 = vmatprep.subr.bf16.mxu0 0
    %4358 = vmatpush1.bf16.msra.mxu0 0
    %4359 = vmatprep.subr.bf16.mxu0 0
    %4360 = vmatpush1.bf16.msra.mxu0 0
    %4361 = vmatprep.subr.bf16.mxu0 0
    %4362 = vmatpush1.bf16.msra.mxu0 0
    %4363 = vmatprep.subr.bf16.mxu0 0
    %4364 = vmatpush1.bf16.msra.mxu0 0
    %4365 = vmatprep.subr.bf16.mxu0 0
    %4366 = vmatpush1.bf16.msra.mxu0 0
    %4367 = vmatprep.subr.bf16.mxu0 0
    %4368 = vmatpush1.bf16.msra.mxu0 0
    %4369 = vmatprep.subr.bf16.mxu0 0
    %4370 = vmatpush1.bf16.msra.mxu0 0
    %4371 = vmatprep.subr.bf16.mxu0 0
    %4372 = vmatpush1.bf16.msra.mxu0 0
    %4373 = vmatprep.mubr.bf16.mxu0 0
    %4374 = vmatmul.mubr.bf16.gmra.mrb[0].mxu0 %v4269
    %v4375 = vpop.f32.mrb[0].mxu0
    %v4376 = vadd.f32 %v4291, %v4375
    %v4377 = vpop.f32.mrb[0].mxu0
    %v4378 = vpop.f32.mrb[0].mxu0
    %v4379 = vadd.f32 %v4291, %v4378
    %v4380 = vpop.f32.mrb[0].mxu0
    %4381 = vdwg.mxu0
    %v4382 = vpack.c.bf16 %v4379, %v4376
    %v4384 = vunpack.c.l.b16 %v4382
    %v4385 = vunpack.c.h.b16 %v4382
    %v4386 = vpack.c.b16 %v4384, %v4384
    %v4387 = vpack.c.b16 %v4385, %v4385
    %4390 = vst [vmem:[#allocation20] sm:$0xf] %v4386
    %4391 = vst [vmem:[#allocation20 + $0x4] sm:$0xf] %v4387
    // Predicated region
    $region90: #{mlp_forward.1} parent=1 // pred_check
      _
    $region91: #{mlp_forward.1} parent=1 // pred_check_branch
      %4393 = sbr.rel (0) target = $region93
    $region92: #{mlp_forward.1} parent=1 // pred_region
      %s4395 = ssub.s32 128, 128
      %4396 = vsyncadd [#allocation4], %s4395
      %s4397 = sshll.u32 [#allocation20], 4
      %s4398 = int_to_ptr.vmem [resolvable:$true] %s4397
      %4403 = dma.vmem_to_hbm [thread:$0]  %s4398, 128, %s11, [#allocation4], 64, 64, 4
    $region93: #{mlp_forward.1} parent=1 // pred_fallthru
      _
    // Predicated region
    $region94: #{mlp_forward.1} parent=1 // pred_check
      _
    $region95: #{mlp_forward.1} parent=1 // pred_check_branch
      %4405 = sbr.rel (0) target = $region97
    $region96: #{mlp_forward.1} parent=1 // pred_region
      %4406 = dma.done [#allocation4], 128
    $region97: #{mlp_forward.1} parent=1 // pred_fallthru
      _
    %4407 = vsyncpa [#allocation3], 1
    %4408 = vsyncpa [#allocation6], 1
    %4409 = vsyncpa [#allocation9], 1
    %4410 = vsyncpa [#allocation12], 1
    %4411 = vsyncpa [#allocation15], 1
    %4412 = vsyncpa [#allocation18], 1
    %4413 = vsyncpa [#allocation4], 1

</llo_original>
